<compile_context>
chip_gen: v6e
topology: v6e:2x2x1
jax: 0.10.0
libtpu: 0.0.40
codegen_flags: <defaults>
</compile_context>

<pallas_src>
import functools
import math

import jax
import jax.numpy as jnp
from jax import lax
from jax.experimental import pallas as pl
from jax.experimental.pallas import tpu as pltpu


def _rup(x, m):
    return ((x + m - 1) // m) * m


# ---------------------------------------------------------------------------
# Fused kernel: one batch image per grid step.
#   x_ref    : (1, Cin, HW) f32   -- NCHW image, spatial flattened on lanes
#   gb_ref   : (Cin, 2)     f32   -- [:,0]=gamma, [:,1]=beta
#   adn_ref  : (G, Cin)     f32   -- one-hot group membership (channel -> group reduce)
#   aup_ref  : (Cin, G)     f32   -- transpose (group -> channel broadcast)
#   w_ref    : (9*Cp, Cin)  bf16  -- conv weights, tap-major, Cout padded to Cp
#   bias_ref : (Cp, 1)      f32
#   o_ref    : (1, Cp, HW)  f32   -- conv output, channels on sublanes (NCHW friendly)
#   hb_ref   : (Cin, 2L+HW) bf16  -- VMEM scratch: zero-padded flattened activation
# ---------------------------------------------------------------------------
def _fused_gn_silu_conv3x3_kernel(x_ref, gb_ref, adn_ref, aup_ref, w_ref, bias_ref,
                                  o_ref, hb_ref, *, eps, inv_n, W, HW, L, Cp):
    # ---------------- GroupNorm (f32 stats) + SiLU ----------------
    x = x_ref[0]                                                      # (Cin, HW) f32
    a_dn = adn_ref[...]
    a_up = aup_ref[...]

    gx = jnp.dot(a_dn, x, preferred_element_type=jnp.float32)        # (G, HW) group sums/pixel
    mean_g = jnp.sum(gx, axis=-1, keepdims=True) * inv_n              # (G, 1)
    mean_c = jnp.dot(a_up, jnp.broadcast_to(mean_g, gx.shape),
                     preferred_element_type=jnp.float32)              # (Cin, HW)
    xc = x - mean_c
    gv = jnp.dot(a_dn, xc * xc, preferred_element_type=jnp.float32)   # (G, HW)
    var_g = jnp.sum(gv, axis=-1, keepdims=True) * inv_n               # (G, 1) biased var
    rstd_g = lax.rsqrt(var_g + eps)
    rstd_c = jnp.dot(a_up, jnp.broadcast_to(rstd_g, gv.shape),
                     preferred_element_type=jnp.float32)              # (Cin, HW)

    y = xc * rstd_c * gb_ref[:, 0:1] + gb_ref[:, 1:2]
    h = y * (1.0 / (1.0 + jnp.exp(-y)))                               # SiLU in f32 (EUP/VPU)

    # ---------------- 3x3 conv, padding=1 ----------------
    # Interior pixels live at lanes [L, L+HW) of the scratch (L is a multiple of 128 so
    # the interior store is lane-aligned); the >= W+1 zero lanes on each side absorb the
    # out-of-range top/bottom-row taps.
    cin = hb_ref.shape[0]
    zpad = jnp.zeros((cin, L), jnp.bfloat16)
    hb_ref[:, 0:L] = zpad
    hb_ref[:, L + HW:2 * L + HW] = zpad
    hb_ref[:, L:L + HW] = h.astype(jnp.bfloat16)

    # Single MXU pass: all 9 taps stacked on the M dimension of the weights.
    mall = jnp.dot(w_ref[...], hb_ref[...],
                   preferred_element_type=jnp.float32)                # (9*Cp, 2L+HW)

    # Column masks fix the left/right wrap of the flattened spatial layout.
    col = lax.broadcasted_iota(jnp.int32, (1, HW), 1) % W
    not_left = (col != 0).astype(jnp.float32)                         # kills j-1 read at j==0
    not_right = (col != (W - 1)).astype(jnp.float32)                  # kills j+1 read at j==W-1

    acc = jnp.zeros((Cp, HW), jnp.float32)
    for u in range(3):
        for v in range(3):
            t = u * 3 + v
            off = L + (u - 1) * W + (v - 1)                           # static lane offset
            contrib = mall[t * Cp:(t + 1) * Cp, off:off + HW]         # (Cp, HW) shifted slice
            if v == 0:
                contrib = contrib * not_left
            elif v == 2:
                contrib = contrib * not_right
            acc = acc + contrib
    o_ref[0] = acc + bias_ref[...]                                    # fused bias epilogue


# ---------------------------------------------------------------------------
# Parameter construction (weights pre-packed ONCE: tap-major, Cout padded to 8, bf16;
# one-hot group matrices for the GN channel reduce/broadcast).
# ---------------------------------------------------------------------------
def init_unet_output_layer(key, in_channels, out_channels, groups=32):
    assert in_channels % groups == 0
    cg = in_channels // groups
    k_w, k_b, k_g, k_bt = jax.random.split(key, 4)

    fan_in = in_channels * 9
    bound = 1.0 / math.sqrt(fan_in)
    w = jax.random.uniform(k_w, (out_channels, in_channels, 3, 3), jnp.float32,
                           -bound, bound)
    b = jax.random.uniform(k_b, (out_channels,), jnp.float32, -bound, bound)
    gamma = 1.0 + 0.1 * jax.random.normal(k_g, (in_channels,), jnp.float32)
    beta = 0.1 * jax.random.normal(k_bt, (in_channels,), jnp.float32)

    # (Cout, Cin, 3, 3) -> tap-major (9*Cp, Cin) bf16, tap t = u*3+v at rows [t*Cp, t*Cp+Cout).
    cp = _rup(out_channels, 8)
    wt = jnp.transpose(w, (2, 3, 0, 1)).reshape(9, out_channels, in_channels)
    wt = jnp.pad(wt, ((0, 0), (0, cp - out_channels), (0, 0)))
    w_pack = wt.reshape(9 * cp, in_channels).astype(jnp.bfloat16)
    b_pack = jnp.pad(b, (0, cp - out_channels)).reshape(cp, 1).astype(jnp.float32)

    # One-hot group membership matrices (f32, tiny, resident in VMEM).
    gid = jnp.arange(in_channels, dtype=jnp.int32) // cg
    a_dn = (gid[None, :] == jnp.arange(groups, dtype=jnp.int32)[:, None]).astype(jnp.float32)
    a_up = jnp.transpose(a_dn)                                        # (Cin, G)

    gb = jnp.stack([gamma, beta], axis=1)                             # (Cin, 2)

    return {
        "w": w, "b": b, "gamma": gamma, "beta": beta,                 # reference (f32) params
        "w_pack": w_pack, "b_pack": b_pack,                           # pre-packed kernel params
        "a_dn": a_dn, "a_up": a_up, "gb": gb,
        "groups": groups, "out_channels": out_channels,
    }


# ---------------------------------------------------------------------------
# Full forward: one fused pallas_call under one jit.
# ---------------------------------------------------------------------------
@functools.partial(jax.jit, static_argnames=("groups", "out_channels"))
def unet_output_layer(x, gb, a_dn, a_up, w_pack, b_pack, *, groups, out_channels):
    B, C, H, W = x.shape
    HW = H * W
    G = groups
    Cp = b_pack.shape[0]
    L = _rup(W + 1, 128)                 # aligned interior start; >= W+1 zero lanes each side
    inv_n = 1.0 / ((C // G) * HW)

    kern = functools.partial(_fused_gn_silu_conv3x3_kernel, eps=1e-5, inv_n=inv_n,
                             W=W, HW=HW, L=L, Cp=Cp)

    # TODO(synk): for large latents (big H*W) add a spatial-tile grid axis with two-pass GN
    # stats, and a second parallel axis so a batch-1 call still fills both v7x TensorCores.
    out = pl.pallas_call(
        kern,
        out_shape=jax.ShapeDtypeStruct((B, Cp, HW), jnp.float32),
        grid_spec=pltpu.PrefetchScalarGridSpec(
            num_scalar_prefetch=0,
            grid=(B,),
            in_specs=[
                pl.BlockSpec((1, C, HW), lambda b: (b, 0, 0)),
                pl.BlockSpec((C, 2), lambda b: (0, 0)),
                pl.BlockSpec((G, C), lambda b: (0, 0)),
                pl.BlockSpec((C, G), lambda b: (0, 0)),
                pl.BlockSpec((9 * Cp, C), lambda b: (0, 0)),
                pl.BlockSpec((Cp, 1), lambda b: (0, 0)),
            ],
            out_specs=pl.BlockSpec((1, Cp, HW), lambda b: (b, 0, 0)),
            scratch_shapes=[pltpu.VMEM((C, 2 * L + HW), jnp.bfloat16)],
        ),
        compiler_params=pltpu.CompilerParams(
            dimension_semantics=("parallel",),
            vmem_limit_bytes=32 * 1024 * 1024,
        ),
    )(x.reshape(B, C, HW), gb, a_dn, a_up, w_pack, b_pack)

    # Tiny cleanup: drop the padded output channels (Cp -> Cout) and unflatten spatial.
    return out[:, :out_channels, :].reshape(B, out_channels, H, W)


# ---------------------------------------------------------------------------
# Pure-JAX f32 reference (matches the PyTorch module semantics).
# ---------------------------------------------------------------------------
def _reference(x, gamma, beta, w, b, groups, eps=1e-5):
    B, C, H, W = x.shape
    xg = x.reshape(B, groups, C // groups, H, W)
    mean = jnp.mean(xg, axis=(2, 3, 4), keepdims=True)
    var = jnp.var(xg, axis=(2, 3, 4), keepdims=True)
    xn = (xg - mean) / jnp.sqrt(var + eps)
    xn = xn.reshape(B, C, H, W) * gamma[None, :, None, None] + beta[None, :, None, None]
    h = xn * (1.0 / (1.0 + jnp.exp(-xn)))
    out = lax.conv_general_dilated(h, w, window_strides=(1, 1),
                                   padding=((1, 1), (1, 1)),
                                   dimension_numbers=("NCHW", "OIHW", "NCHW"))
    return out + b[None, :, None, None]


if __name__ == "__main__":
    key = jax.random.PRNGKey(0)
    B, Cin, Cout, H, W = 2, 320, 4, 16, 16               # SD UNET output layer: 320 -> 4

    params = init_unet_output_layer(jax.random.fold_in(key, 1), Cin, Cout)
    x = jax.random.normal(jax.random.fold_in(key, 2), (B, Cin, H, W), jnp.float32)

    out = unet_output_layer(x, params["gb"], params["a_dn"], params["a_up"],
                            params["w_pack"], params["b_pack"],
                            groups=params["groups"], out_channels=Cout)
    out = jax.block_until_ready(out)

    assert out.shape == (B, Cout, H, W), out.shape
    assert bool(jnp.isfinite(out).all())

    ref = _reference(x, params["gamma"], params["beta"], params["w"], params["b"],
                     params["groups"])
    err = float(jnp.max(jnp.abs(out - ref)))
    scale = float(jnp.max(jnp.abs(ref))) + 1e-6
    # generous tolerance: conv path is bf16-in / f32-accumulate
    assert err <= 0.05 * scale + 1e-3, (err, scale)

    print("KERNEL_OK")
</pallas_src>

<mosaic_0001>
module attributes {stable_mosaic.version = 11 : i64} {
  func.func @_fused_gn_silu_conv3x3_kernel(%arg0: i32, %arg1: memref<1x320x256xf32, #tpu.memory_space<vmem>>, %arg2: memref<320x2xf32, #tpu.memory_space<vmem>>, %arg3: memref<32x320xf32, #tpu.memory_space<vmem>>, %arg4: memref<320x32xf32, #tpu.memory_space<vmem>>, %arg5: memref<72x320xbf16, #tpu.memory_space<vmem>>, %arg6: memref<8x1xf32, #tpu.memory_space<vmem>>, %arg7: memref<1x8x256xf32, #tpu.memory_space<vmem>>, %arg8: memref<320x512xbf16, #tpu.memory_space<vmem>>) attributes {dimension_semantics = [#tpu.dimension_semantics<parallel>], iteration_bounds = array<i64: 2>, scalar_prefetch = 0 : i64, scratch_operands = 1 : i64, tpu.core_type = #tpu.core_type<tc>, window_params = [{transform_indices = @transform_0, window_bounds = array<i64: 1, 320, 256>}, {pipeline_mode = #tpu.pipeline_mode<synchronous>, transform_indices = @transform_1, window_bounds = array<i64: 320, 2>}, {pipeline_mode = #tpu.pipeline_mode<synchronous>, transform_indices = @transform_2, window_bounds = array<i64: 32, 320>}, {pipeline_mode = #tpu.pipeline_mode<synchronous>, transform_indices = @transform_3, window_bounds = array<i64: 320, 32>}, {pipeline_mode = #tpu.pipeline_mode<synchronous>, transform_indices = @transform_4, window_bounds = array<i64: 72, 320>}, {pipeline_mode = #tpu.pipeline_mode<synchronous>, transform_indices = @transform_5, window_bounds = array<i64: 8, 1>}, {transform_indices = @transform_6, window_bounds = array<i64: 1, 8, 256>}]} {
    %c0 = arith.constant 0 : index
    %c0_0 = arith.constant 0 : index
    %c0_1 = arith.constant 0 : index
    %0 = vector.load %arg1[%c0, %c0_0, %c0_1] : memref<1x320x256xf32, #tpu.memory_space<vmem>>, vector<1x320x256xf32>
    %1 = vector.shape_cast %0 : vector<1x320x256xf32> to vector<320x256xf32>
    %c0_2 = arith.constant 0 : index
    %c0_3 = arith.constant 0 : index
    %2 = vector.load %arg3[%c0_2, %c0_3] : memref<32x320xf32, #tpu.memory_space<vmem>>, vector<32x320xf32>
    %c0_4 = arith.constant 0 : index
    %c0_5 = arith.constant 0 : index
    %3 = vector.load %arg4[%c0_4, %c0_5] : memref<320x32xf32, #tpu.memory_space<vmem>>, vector<320x32xf32>
    %cst = arith.constant dense<0.000000e+00> : vector<32x256xf32>
    %4 = tpu.matmul %2, %1, %cst {dimension_numbers = #tpu.dot_dimension_numbers<[1], [0], [0], [1], [0, 0, 1, 1], [], []>} : vector<32x320xf32>, vector<320x256xf32>, vector<32x256xf32> -> vector<32x256xf32>
    %cst_6 = arith.constant dense<0.000000e+00> : vector<32xf32>
    %5 = vector.multi_reduction <add>, %4, %cst_6 [1] : vector<32x256xf32> to vector<32xf32>
    %6 = vector.shape_cast %5 : vector<32xf32> to vector<32x1xf32>
    %cst_7 = arith.constant 3.906250e-04 : f32
    %7 = vector.broadcast %cst_7 : f32 to vector<32x1xf32>
    %8 = arith.mulf %6, %7 : vector<32x1xf32>
    %9 = vector.shape_cast %8 : vector<32x1xf32> to vector<32x1xf32>
    %10 = vector.broadcast %9 : vector<32x1xf32> to vector<32x256xf32>
    %cst_8 = arith.constant dense<0.000000e+00> : vector<320x256xf32>
    %11 = tpu.matmul %3, %10, %cst_8 {dimension_numbers = #tpu.dot_dimension_numbers<[1], [0], [0], [1], [0, 0, 1, 1], [], []>} : vector<320x32xf32>, vector<32x256xf32>, vector<320x256xf32> -> vector<320x256xf32>
    %12 = arith.subf %1, %11 : vector<320x256xf32>
    %13 = arith.mulf %12, %12 : vector<320x256xf32>
    %cst_9 = arith.constant dense<0.000000e+00> : vector<32x256xf32>
    %14 = tpu.matmul %2, %13, %cst_9 {dimension_numbers = #tpu.dot_dimension_numbers<[1], [0], [0], [1], [0, 0, 1, 1], [], []>} : vector<32x320xf32>, vector<320x256xf32>, vector<32x256xf32> -> vector<32x256xf32>
    %cst_10 = arith.constant dense<0.000000e+00> : vector<32xf32>
    %15 = vector.multi_reduction <add>, %14, %cst_10 [1] : vector<32x256xf32> to vector<32xf32>
    %16 = vector.shape_cast %15 : vector<32xf32> to vector<32x1xf32>
    %cst_11 = arith.constant 3.906250e-04 : f32
    %17 = vector.broadcast %cst_11 : f32 to vector<32x1xf32>
    %18 = arith.mulf %16, %17 : vector<32x1xf32>
    %cst_12 = arith.constant 9.99999974E-6 : f32
    %19 = vector.broadcast %cst_12 : f32 to vector<32x1xf32>
    %20 = arith.addf %18, %19 : vector<32x1xf32>
    %21 = math.rsqrt %20 : vector<32x1xf32>
    %22 = vector.shape_cast %21 : vector<32x1xf32> to vector<32x1xf32>
    %23 = vector.broadcast %22 : vector<32x1xf32> to vector<32x256xf32>
    %cst_13 = arith.constant dense<0.000000e+00> : vector<320x256xf32>
    %24 = tpu.matmul %3, %23, %cst_13 {dimension_numbers = #tpu.dot_dimension_numbers<[1], [0], [0], [1], [0, 0, 1, 1], [], []>} : vector<320x32xf32>, vector<32x256xf32>, vector<320x256xf32> -> vector<320x256xf32>
    %25 = arith.mulf %12, %24 : vector<320x256xf32>
    %c0_14 = arith.constant 0 : index
    %c0_15 = arith.constant 0 : index
    %26 = vector.load %arg2[%c0_14, %c0_15] : memref<320x2xf32, #tpu.memory_space<vmem>>, vector<320x1xf32>
    %27 = vector.broadcast %26 : vector<320x1xf32> to vector<320x256xf32>
    %28 = arith.mulf %25, %27 : vector<320x256xf32>
    %c0_16 = arith.constant 0 : index
    %c1 = arith.constant 1 : index
    %29 = vector.load %arg2[%c0_16, %c1] : memref<320x2xf32, #tpu.memory_space<vmem>>, vector<320x1xf32>
    %30 = vector.broadcast %29 : vector<320x1xf32> to vector<320x256xf32>
    %31 = arith.addf %28, %30 : vector<320x256xf32>
    %cst_17 = arith.constant 0.000000e+00 : f32
    %32 = vector.broadcast %cst_17 : f32 to vector<320x256xf32>
    %33 = arith.subf %32, %31 : vector<320x256xf32>
    %34 = math.exp %33 : vector<320x256xf32>
    %cst_18 = arith.constant 1.000000e+00 : f32
    %35 = vector.broadcast %cst_18 : f32 to vector<320x256xf32>
    %36 = arith.addf %35, %34 : vector<320x256xf32>
    %cst_19 = arith.constant 1.000000e+00 : f32
    %37 = vector.broadcast %cst_19 : f32 to vector<320x256xf32>
    %38 = arith.divf %37, %36 : vector<320x256xf32>
    %39 = arith.mulf %31, %38 : vector<320x256xf32>
    %cst_20 = arith.constant 0.000000e+00 : bf16
    %40 = vector.broadcast %cst_20 : bf16 to vector<320x128xbf16>
    %c0_21 = arith.constant 0 : index
    %c0_22 = arith.constant 0 : index
    %41 = vector.load %arg8[%c0_21, %c0_22] : memref<320x512xbf16, #tpu.memory_space<vmem>>, vector<320x128xbf16>
    tpu.vector_store %arg8[%c0_21, %c0_22], %40 {strides = array<i32>} : memref<320x512xbf16, #tpu.memory_space<vmem>>, vector<320x128xbf16>,
    %c0_23 = arith.constant 0 : index
    %c384 = arith.constant 384 : index
    %42 = vector.load %arg8[%c0_23, %c384] : memref<320x512xbf16, #tpu.memory_space<vmem>>, vector<320x128xbf16>
    tpu.vector_store %arg8[%c0_23, %c384], %40 {strides = array<i32>} : memref<320x512xbf16, #tpu.memory_space<vmem>>, vector<320x128xbf16>,
    %43 = arith.truncf %39 : vector<320x256xf32> to vector<320x256xbf16>
    %c0_24 = arith.constant 0 : index
    %c128 = arith.constant 128 : index
    %44 = vector.load %arg8[%c0_24, %c128] : memref<320x512xbf16, #tpu.memory_space<vmem>>, vector<320x256xbf16>
    tpu.vector_store %arg8[%c0_24, %c128], %43 {strides = array<i32>} : memref<320x512xbf16, #tpu.memory_space<vmem>>, vector<320x256xbf16>,
    %c0_25 = arith.constant 0 : index
    %c0_26 = arith.constant 0 : index
    %45 = vector.load %arg5[%c0_25, %c0_26] : memref<72x320xbf16, #tpu.memory_space<vmem>>, vector<72x320xbf16>
    %c0_27 = arith.constant 0 : index
    %c0_28 = arith.constant 0 : index
    %46 = vector.load %arg8[%c0_27, %c0_28] : memref<320x512xbf16, #tpu.memory_space<vmem>>, vector<320x512xbf16>
    %cst_29 = arith.constant dense<0.000000e+00> : vector<72x512xf32>
    %47 = tpu.matmul %45, %46, %cst_29 {dimension_numbers = #tpu.dot_dimension_numbers<[1], [0], [0], [1], [0, 0, 1, 1], [], []>} : vector<72x320xbf16>, vector<320x512xbf16>, vector<72x512xf32> -> vector<72x512xf32>
    %48 = tpu.iota {dimensions = array<i32: 1>} : vector<1x256xi32>
    %c16_i32 = arith.constant 16 : i32
    %c0_i32 = arith.constant 0 : i32
    %49 = arith.cmpi eq, %c16_i32, %c0_i32 : i32
    %c1_i32 = arith.constant 1 : i32
    %50 = arith.select %49, %c1_i32, %c16_i32 : i32
    %51 = vector.broadcast %50 : i32 to vector<1x256xi32>
    %52 = arith.remsi %48, %51 : vector<1x256xi32>
    %c0_i32_30 = arith.constant 0 : i32
    %53 = vector.broadcast %c0_i32_30 : i32 to vector<1x256xi32>
    %54 = arith.cmpi ne, %52, %53 : vector<1x256xi32>
    %c0_i32_31 = arith.constant 0 : i32
    %55 = vector.broadcast %c0_i32_31 : i32 to vector<1x256xi32>
    %56 = arith.cmpi slt, %52, %55 : vector<1x256xi32>
    %c0_i32_32 = arith.constant 0 : i32
    %57 = arith.cmpi slt, %50, %c0_i32_32 : i32
    %58 = vector.broadcast %57 : i1 to vector<1x256xi1>
    %59 = vector.broadcast %58 : vector<1x256xi1> to vector<1x256xi1>
    %60 = arith.xori %56, %59 : vector<1x256xi1>
    %61 = arith.andi %60, %54 : vector<1x256xi1>
    %62 = vector.broadcast %50 : i32 to vector<1x256xi32>
    %63 = arith.addi %52, %62 : vector<1x256xi32>
    %64 = arith.select %61, %63, %52 : vector<1x256xi1>, vector<1x256xi32>
    %c0_i32_33 = arith.constant 0 : i32
    %65 = vector.broadcast %c0_i32_33 : i32 to vector<1x256xi32>
    %66 = arith.cmpi ne, %64, %65 : vector<1x256xi32>
    %67 = arith.extui %66 : vector<1x256xi1> to vector<1x256xi32>
    %68 = arith.sitofp %67 : vector<1x256xi32> to vector<1x256xf32>
    %c15_i32 = arith.constant 15 : i32
    %69 = vector.broadcast %c15_i32 : i32 to vector<1x256xi32>
    %70 = arith.cmpi ne, %64, %69 : vector<1x256xi32>
    %71 = arith.extui %70 : vector<1x256xi1> to vector<1x256xi32>
    %72 = arith.sitofp %71 : vector<1x256xi32> to vector<1x256xf32>
    %cst_34 = arith.constant 0.000000e+00 : f32
    %73 = vector.broadcast %cst_34 : f32 to vector<8x256xf32>
    %74 = vector.extract_strided_slice %47 {offsets = [0, 111], sizes = [8, 256], strides = [1, 1]} : vector<72x512xf32> to vector<8x256xf32>
    %75 = vector.broadcast %68 : vector<1x256xf32> to vector<8x256xf32>
    %76 = arith.mulf %74, %75 : vector<8x256xf32>
    %77 = arith.addf %73, %76 : vector<8x256xf32>
    %78 = vector.extract_strided_slice %47 {offsets = [8, 112], sizes = [8, 256], strides = [1, 1]} : vector<72x512xf32> to vector<8x256xf32>
    %79 = arith.addf %77, %78 : vector<8x256xf32>
    %80 = vector.extract_strided_slice %47 {offsets = [16, 113], sizes = [8, 256], strides = [1, 1]} : vector<72x512xf32> to vector<8x256xf32>
    %81 = vector.broadcast %72 : vector<1x256xf32> to vector<8x256xf32>
    %82 = arith.mulf %80, %81 : vector<8x256xf32>
    %83 = arith.addf %79, %82 : vector<8x256xf32>
    %84 = vector.extract_strided_slice %47 {offsets = [24, 127], sizes = [8, 256], strides = [1, 1]} : vector<72x512xf32> to vector<8x256xf32>
    %85 = vector.broadcast %68 : vector<1x256xf32> to vector<8x256xf32>
    %86 = arith.mulf %84, %85 : vector<8x256xf32>
    %87 = arith.addf %83, %86 : vector<8x256xf32>
    %88 = vector.extract_strided_slice %47 {offsets = [32, 128], sizes = [8, 256], strides = [1, 1]} : vector<72x512xf32> to vector<8x256xf32>
    %89 = arith.addf %87, %88 : vector<8x256xf32>
    %90 = vector.extract_strided_slice %47 {offsets = [40, 129], sizes = [8, 256], strides = [1, 1]} : vector<72x512xf32> to vector<8x256xf32>
    %91 = vector.broadcast %72 : vector<1x256xf32> to vector<8x256xf32>
    %92 = arith.mulf %90, %91 : vector<8x256xf32>
    %93 = arith.addf %89, %92 : vector<8x256xf32>
    %94 = vector.extract_strided_slice %47 {offsets = [48, 143], sizes = [8, 256], strides = [1, 1]} : vector<72x512xf32> to vector<8x256xf32>
    %95 = vector.broadcast %68 : vector<1x256xf32> to vector<8x256xf32>
    %96 = arith.mulf %94, %95 : vector<8x256xf32>
    %97 = arith.addf %93, %96 : vector<8x256xf32>
    %98 = vector.extract_strided_slice %47 {offsets = [56, 144], sizes = [8, 256], strides = [1, 1]} : vector<72x512xf32> to vector<8x256xf32>
    %99 = arith.addf %97, %98 : vector<8x256xf32>
    %100 = vector.extract_strided_slice %47 {offsets = [64, 145], sizes = [8, 256], strides = [1, 1]} : vector<72x512xf32> to vector<8x256xf32>
    %101 = vector.broadcast %72 : vector<1x256xf32> to vector<8x256xf32>
    %102 = arith.mulf %100, %101 : vector<8x256xf32>
    %103 = arith.addf %99, %102 : vector<8x256xf32>
    %c0_35 = arith.constant 0 : index
    %c0_36 = arith.constant 0 : index
    %104 = vector.load %arg6[%c0_35, %c0_36] : memref<8x1xf32, #tpu.memory_space<vmem>>, vector<8x1xf32>
    %105 = vector.broadcast %104 : vector<8x1xf32> to vector<8x256xf32>
    %106 = arith.addf %103, %105 : vector<8x256xf32>
    %c0_37 = arith.constant 0 : index
    %c0_38 = arith.constant 0 : index
    %c0_39 = arith.constant 0 : index
    %107 = vector.load %arg7[%c0_37, %c0_38, %c0_39] : memref<1x8x256xf32, #tpu.memory_space<vmem>>, vector<1x8x256xf32>
    %108 = vector.shape_cast %107 : vector<1x8x256xf32> to vector<8x256xf32>
    %109 = vector.shape_cast %106 : vector<8x256xf32> to vector<1x8x256xf32>
    tpu.vector_store %arg7[%c0_37, %c0_38, %c0_39], %109 {strides = array<i32>} : memref<1x8x256xf32, #tpu.memory_space<vmem>>, vector<1x8x256xf32>,
    return
  }
  func.func @transform_0(%arg0: i32) -> (i32, i32, i32) {
    %c0_i32 = arith.constant 0 : i32
    %c0_i32_0 = arith.constant 0 : i32
    %c0_i32_1 = arith.constant 0 : i32
    return %arg0, %c0_i32, %c0_i32_0 : i32, i32, i32
  }
  func.func @transform_1(%arg0: i32) -> (i32, i32) {
    %c0_i32 = arith.constant 0 : i32
    %c0_i32_0 = arith.constant 0 : i32
    %c0_i32_1 = arith.constant 0 : i32
    return %c0_i32, %c0_i32_0 : i32, i32
  }
  func.func @transform_2(%arg0: i32) -> (i32, i32) {
    %c0_i32 = arith.constant 0 : i32
    %c0_i32_0 = arith.constant 0 : i32
    %c0_i32_1 = arith.constant 0 : i32
    return %c0_i32, %c0_i32_0 : i32, i32
  }
  func.func @transform_3(%arg0: i32) -> (i32, i32) {
    %c0_i32 = arith.constant 0 : i32
    %c0_i32_0 = arith.constant 0 : i32
    %c0_i32_1 = arith.constant 0 : i32
    return %c0_i32, %c0_i32_0 : i32, i32
  }
  func.func @transform_4(%arg0: i32) -> (i32, i32) {
    %c0_i32 = arith.constant 0 : i32
    %c0_i32_0 = arith.constant 0 : i32
    %c0_i32_1 = arith.constant 0 : i32
    return %c0_i32, %c0_i32_0 : i32, i32
  }
  func.func @transform_5(%arg0: i32) -> (i32, i32) {
    %c0_i32 = arith.constant 0 : i32
    %c0_i32_0 = arith.constant 0 : i32
    %c0_i32_1 = arith.constant 0 : i32
    return %c0_i32, %c0_i32_0 : i32, i32
  }
  func.func @transform_6(%arg0: i32) -> (i32, i32, i32) {
    %c0_i32 = arith.constant 0 : i32
    %c0_i32_0 = arith.constant 0 : i32
    %c0_i32_1 = arith.constant 0 : i32
    return %arg0, %c0_i32, %c0_i32_0 : i32, i32, i32
  }
}

</mosaic_0001>

<llo_original>
// kernel: unet_output_layer.1
$region0: #{unet_output_layer.1}
  #allocation0 [shape = 'u32[]', space=smem, size = 0x4, offset = 0x4, fixed_abs, tag = 'smem constant byte address 0x4 - core index']
  #allocation1 [shape = 'u32[144,128]{1,0:T(1,128)}', space=vmem, size = 0x12000, scoped, tag = 'internal scratch']
  #allocation2 [shape = 'bf16[320,512]{1,0:T(8,128)(2,1)}', space=vmem, size = 0x50000, scoped, tag = 'scratch operand']
  %s0 = inlined_call_operand.vmem [shape: f32[2,320,256], index: 0, kind: input, shape index: {}]
  %s1 = inlined_call_operand.vmem [shape: f32[320,2], index: 1, kind: input, shape index: {}]
  %s2 = inlined_call_operand.vmem [shape: f32[32,320], index: 2, kind: input, shape index: {}]
  %s3 = inlined_call_operand.vmem [shape: f32[320,32], index: 3, kind: input, shape index: {}]
  %s4 = inlined_call_operand.vmem [shape: bf16[72,320], index: 4, kind: input, shape index: {}]
  %s5 = inlined_call_operand.vmem [shape: f32[8,1], index: 5, kind: input, shape index: {}]
  %s6 = inlined_call_operand.vmem [shape: f32[2,8,256], index: 6, kind: output, shape index: {}]
  %s7 = sld [smem:[#allocation0]]
  $region57: #{unet_output_layer.1} parent=0
    _
  %s9 = ssub.s32 1, %s7
  %s10 = scalar_select 0, %s9, %s7
  loop: start=0, step=1, limit=4
  $region2: #{unet_output_layer.1} parent=0 // loop_pre_header
    _
  $region3: #{unet_output_layer.1} parent=0 // loop_header
    %s12 = sphi 0, %s16
    %p13 = scmp.ge.s32.totalorder %s12, 4
    %s22 = sphi 0, %s24
    %s25 = sphi 0, %s22
    %s26 = sphi 0, %s25
    %s42 = sphi 0, %s26
    %s46 = sphi 0, %s46
    %s48 = sphi 0, %s46
    %s49 = sphi 0, %s48
    %s63 = sphi 0, %s49
    %s67 = sphi 0, %s67
    %s69 = sphi 0, %s67
    %s70 = sphi 0, %s69
    %s84 = sphi 0, %s70
    %s88 = sphi 0, %s88
    %s90 = sphi 0, %s88
    %s91 = sphi 0, %s90
    %s105 = sphi 0, %s91
    %s109 = sphi 0, %s109
    %s111 = sphi 0, %s109
    %s112 = sphi 0, %s111
    %s126 = sphi 0, %s112
    %s130 = sphi 0, %s130
    %s132 = sphi 0, %s130
    %s133 = sphi 0, %s132
    %s147 = sphi 0, %s133
    %s153 = sphi 0, %s155
    %s156 = sphi 0, %s153
    %s157 = sphi 0, %s156
    %s173 = sphi 0, %s157
  $region4: #{unet_output_layer.1} parent=0 // loop_header_branch
    %15 = sbr.rel (%p13) target = $region8
  $region5: #{unet_output_layer.1} parent=0 // loop_body
    %s17 = ssub.s32 %s12, 1
    %s18 = ssub.s32 %s12, 2
    %s19 = sadd.s32 %s12, 1
    %s20 = ssub.s32 %s12, %s19
    %p21 = scmp.eq.s32.totalorder %s20, 0
    %s23 = sadd.s32 %s22, 1
    %s24 = scalar_select %p21, %s22, %s23
    %p27 = pneg %p21
    %p28 = scmp.eq.s32.totalorder %s12, 1
    %p29 = por %p27, %p28
    %p30 = scmp.ne.s32.totalorder %s22, %s25
    %p31 = scmp.eq.s32.totalorder %s12, 0
    %p32 = por %p30, %p31
    %p33 = scmp.ne.s32.totalorder %s22, %s25
    %p34 = scmp.eq.s32.totalorder %s17, 1
    %p35 = por %p33, %p34
    %p36 = scmp.ne.s32.totalorder %s25, %s26
    %p37 = scmp.eq.s32.totalorder %s17, 0
    %p38 = por %p36, %p37
    %p39 = scmp.ne.s32.totalorder %s25, %s26
    %p40 = scmp.eq.s32.totalorder %s18, 1
    %p41 = por %p39, %p40
    %p43 = scmp.ne.s32.totalorder %s26, %s42
    %p44 = scmp.eq.s32.totalorder %s18, 0
    %p45 = por %p43, %p44
    %s47 = sadd.s32 %s46, 1
    %p50 = scmp.eq.s32.totalorder %s12, 1
    %p51 = scmp.ne.s32.totalorder %s46, %s48
    %p52 = scmp.eq.s32.totalorder %s12, 0
    %p53 = por %p51, %p52
    %p54 = scmp.ne.s32.totalorder %s46, %s48
    %p55 = scmp.eq.s32.totalorder %s17, 1
    %p56 = por %p54, %p55
    %p57 = scmp.ne.s32.totalorder %s48, %s49
    %p58 = scmp.eq.s32.totalorder %s17, 0
    %p59 = por %p57, %p58
    %p60 = scmp.ne.s32.totalorder %s48, %s49
    %p61 = scmp.eq.s32.totalorder %s18, 1
    %p62 = por %p60, %p61
    %p64 = scmp.ne.s32.totalorder %s49, %s63
    %p65 = scmp.eq.s32.totalorder %s18, 0
    %p66 = por %p64, %p65
    %s68 = sadd.s32 %s67, 1
    %p71 = scmp.eq.s32.totalorder %s12, 1
    %p72 = scmp.ne.s32.totalorder %s67, %s69
    %p73 = scmp.eq.s32.totalorder %s12, 0
    %p74 = por %p72, %p73
    %p75 = scmp.ne.s32.totalorder %s67, %s69
    %p76 = scmp.eq.s32.totalorder %s17, 1
    %p77 = por %p75, %p76
    %p78 = scmp.ne.s32.totalorder %s69, %s70
    %p79 = scmp.eq.s32.totalorder %s17, 0
    %p80 = por %p78, %p79
    %p81 = scmp.ne.s32.totalorder %s69, %s70
    %p82 = scmp.eq.s32.totalorder %s18, 1
    %p83 = por %p81, %p82
    %p85 = scmp.ne.s32.totalorder %s70, %s84
    %p86 = scmp.eq.s32.totalorder %s18, 0
    %p87 = por %p85, %p86
    %s89 = sadd.s32 %s88, 1
    %p92 = scmp.eq.s32.totalorder %s12, 1
    %p93 = scmp.ne.s32.totalorder %s88, %s90
    %p94 = scmp.eq.s32.totalorder %s12, 0
    %p95 = por %p93, %p94
    %p96 = scmp.ne.s32.totalorder %s88, %s90
    %p97 = scmp.eq.s32.totalorder %s17, 1
    %p98 = por %p96, %p97
    %p99 = scmp.ne.s32.totalorder %s90, %s91
    %p100 = scmp.eq.s32.totalorder %s17, 0
    %p101 = por %p99, %p100
    %p102 = scmp.ne.s32.totalorder %s90, %s91
    %p103 = scmp.eq.s32.totalorder %s18, 1
    %p104 = por %p102, %p103
    %p106 = scmp.ne.s32.totalorder %s91, %s105
    %p107 = scmp.eq.s32.totalorder %s18, 0
    %p108 = por %p106, %p107
    %s110 = sadd.s32 %s109, 1
    %p113 = scmp.eq.s32.totalorder %s12, 1
    %p114 = scmp.ne.s32.totalorder %s109, %s111
    %p115 = scmp.eq.s32.totalorder %s12, 0
    %p116 = por %p114, %p115
    %p117 = scmp.ne.s32.totalorder %s109, %s111
    %p118 = scmp.eq.s32.totalorder %s17, 1
    %p119 = por %p117, %p118
    %p120 = scmp.ne.s32.totalorder %s111, %s112
    %p121 = scmp.eq.s32.totalorder %s17, 0
    %p122 = por %p120, %p121
    %p123 = scmp.ne.s32.totalorder %s111, %s112
    %p124 = scmp.eq.s32.totalorder %s18, 1
    %p125 = por %p123, %p124
    %p127 = scmp.ne.s32.totalorder %s112, %s126
    %p128 = scmp.eq.s32.totalorder %s18, 0
    %p129 = por %p127, %p128
    %s131 = sadd.s32 %s130, 1
    %p134 = scmp.eq.s32.totalorder %s12, 1
    %p135 = scmp.ne.s32.totalorder %s130, %s132
    %p136 = scmp.eq.s32.totalorder %s12, 0
    %p137 = por %p135, %p136
    %p138 = scmp.ne.s32.totalorder %s130, %s132
    %p139 = scmp.eq.s32.totalorder %s17, 1
    %p140 = por %p138, %p139
    %p141 = scmp.ne.s32.totalorder %s132, %s133
    %p142 = scmp.eq.s32.totalorder %s17, 0
    %p143 = por %p141, %p142
    %p144 = scmp.ne.s32.totalorder %s132, %s133
    %p145 = scmp.eq.s32.totalorder %s18, 1
    %p146 = por %p144, %p145
    %p148 = scmp.ne.s32.totalorder %s133, %s147
    %p149 = scmp.eq.s32.totalorder %s18, 0
    %p150 = por %p148, %p149
    %s151 = ssub.s32 %s12, %s19
    %p152 = scmp.eq.s32.totalorder %s151, 0
    %s154 = sadd.s32 %s153, 1
    %s155 = scalar_select %p152, %s153, %s154
    %p158 = pneg %p152
    %p159 = scmp.eq.s32.totalorder %s12, 1
    %p160 = por %p158, %p159
    %p161 = scmp.ne.s32.totalorder %s153, %s156
    %p162 = scmp.eq.s32.totalorder %s12, 0
    %p163 = por %p161, %p162
    %p164 = scmp.ne.s32.totalorder %s153, %s156
    %p165 = scmp.eq.s32.totalorder %s17, 1
    %p166 = por %p164, %p165
    %p167 = scmp.ne.s32.totalorder %s156, %s157
    %p168 = scmp.eq.s32.totalorder %s17, 0
    %p169 = por %p167, %p168
    %p170 = scmp.ne.s32.totalorder %s156, %s157
    %p171 = scmp.eq.s32.totalorder %s18, 1
    %p172 = por %p170, %p171
    %p174 = scmp.ne.s32.totalorder %s157, %s173
    %p175 = scmp.eq.s32.totalorder %s18, 0
    %p176 = por %p174, %p175
    %p177 = scmp.le.s32.totalorder 1, %s12
    %p178 = scmp.lt.s32.totalorder %s12, 3
    %p179 = pnand %p177, %p178
    %p180 = pneg %p179
    // Predicated region
    $region9: #{unet_output_layer.1} parent=5 // pred_check
      _
    $region10: #{unet_output_layer.1} parent=5 // pred_check_branch
      %182 = sbr.rel (%p179) target = $region12
    $region11: #{unet_output_layer.1} parent=5 // pred_region
      %s183 = ssub.s32 %s12, 1
      // Predicated region
      $region13: #{unet_output_layer.1} parent=11 // pred_check
        %p184 = pneg %p59
      $region14: #{unet_output_layer.1} parent=11 // pred_check_branch
        %186 = sbr.rel (%p184) target = $region16
      $region15: #{unet_output_layer.1} parent=11 // pred_region
        _
      $region16: #{unet_output_layer.1} parent=11 // pred_fallthru
        _
      // Predicated region
      $region17: #{unet_output_layer.1} parent=11 // pred_check
        %p187 = pneg %p80
      $region18: #{unet_output_layer.1} parent=11 // pred_check_branch
        %189 = sbr.rel (%p187) target = $region20
      $region19: #{unet_output_layer.1} parent=11 // pred_region
        _
      $region20: #{unet_output_layer.1} parent=11 // pred_fallthru
        _
      // Predicated region
      $region21: #{unet_output_layer.1} parent=11 // pred_check
        %p190 = pneg %p101
      $region22: #{unet_output_layer.1} parent=11 // pred_check_branch
        %192 = sbr.rel (%p190) target = $region24
      $region23: #{unet_output_layer.1} parent=11 // pred_region
        _
      $region24: #{unet_output_layer.1} parent=11 // pred_fallthru
        _
      // Predicated region
      $region25: #{unet_output_layer.1} parent=11 // pred_check
        %p193 = pneg %p122
      $region26: #{unet_output_layer.1} parent=11 // pred_check_branch
        %195 = sbr.rel (%p193) target = $region28
      $region27: #{unet_output_layer.1} parent=11 // pred_region
        _
      $region28: #{unet_output_layer.1} parent=11 // pred_fallthru
        _
      // Predicated region
      $region29: #{unet_output_layer.1} parent=11 // pred_check
        %p196 = pneg %p143
      $region30: #{unet_output_layer.1} parent=11 // pred_check_branch
        %198 = sbr.rel (%p196) target = $region32
      $region31: #{unet_output_layer.1} parent=11 // pred_region
        _
      $region32: #{unet_output_layer.1} parent=11 // pred_fallthru
        _
    $region12: #{unet_output_layer.1} parent=5 // pred_fallthru
      _
    %p199 = scmp.lt.s32.totalorder %s12, 2
    // Predicated region
    $region33: #{unet_output_layer.1} parent=5 // pred_check
      %p200 = pneg %p199
    $region34: #{unet_output_layer.1} parent=5 // pred_check_branch
      %202 = sbr.rel (%p200) target = $region36
    $region35: #{unet_output_layer.1} parent=5 // pred_region
      // Predicated region
      $region37: #{unet_output_layer.1} parent=35 // pred_check
        %p203 = pneg %p32
      $region38: #{unet_output_layer.1} parent=35 // pred_check_branch
        %205 = sbr.rel (%p203) target = $region40
      $region39: #{unet_output_layer.1} parent=35 // pred_region
        %p206 = scmp.lt.s32.totalorder %s12, 1
        %s207 = scalar_select %p206, %s12, 1
        %s208 = smul.addr %s207, 80
        %s209 = smul.addr %s208, 8
        %s210 = scalar_lea.vmem %s0, %s209
      $region40: #{unet_output_layer.1} parent=35 // pred_fallthru
        _
    $region36: #{unet_output_layer.1} parent=5 // pred_fallthru
      _
    %p211 = scmp.le.s32.totalorder 1, %s12
    %p212 = scmp.lt.s32.totalorder %s12, 3
    %p213 = pnand %p211, %p212
    %p214 = pneg %p213
    // Predicated region
    $region41: #{unet_output_layer.1} parent=5 // pred_check
      _
    $region42: #{unet_output_layer.1} parent=5 // pred_check_branch
      %216 = sbr.rel (%p213) target = $region44
    $region43: #{unet_output_layer.1} parent=5 // pred_region
      %s217 = ssub.s32 %s12, 1
      %p218 = scmp.lt.s32.totalorder %s17, 1
      %s219 = scalar_select %p218, %s17, 1
      %s220 = smul.addr %s219, 80
      %s221 = smul.addr %s220, 8
      %s222 = scalar_lea.vmem %s0, %s221
      %p223 = pneg %p38
      %p224 = pneg %p35
      %p225 = pneg %p59
      %p226 = pneg %p56
      %p227 = pneg %p80
      %p228 = pneg %p77
      %p229 = pneg %p101
      %p230 = pneg %p98
      %p231 = pneg %p122
      %p232 = pneg %p119
      %p233 = pneg %p143
      %p234 = pneg %p140
      %p235 = pneg %p169
      %p236 = pneg %p166
      %p237 = scmp.lt.s32.totalorder %s17, 1
      %s238 = scalar_select %p237, %s17, 1
      %s239 = smul.addr %s238, 2
      %s240 = smul.addr %s239, 8
      %s241 = scalar_lea.vmem %s6, %s240
      %p242 = scmp.lt.s32.totalorder %s17, 1
      %s243 = scalar_select %p242, %s17, 1
      %s244 = smul.addr %s243, 80
      %s245 = smul.addr %s244, 8
      %s246 = scalar_lea.vmem %s0, %s245
      %p247 = scmp.lt.s32.totalorder %s17, 1
      %s248 = scalar_select %p247, %s17, 1
      %s249 = smul.addr %s248, 2
      %s250 = smul.addr %s249, 8
      %s251 = scalar_lea.vmem %s6, %s250
      %v253 = vld [vmem:[%s246] sm:$0xff]
      %v254 = vld [vmem:[%s246 + $0x8] sm:$0xff]
      %v255 = vld [vmem:[%s246 + $0x10] sm:$0xff]
      %v256 = vld [vmem:[%s246 + $0x18] sm:$0xff]
      %v257 = vld [vmem:[%s246 + $0x20] sm:$0xff]
      %v258 = vld [vmem:[%s246 + $0x28] sm:$0xff]
      %v259 = vld [vmem:[%s246 + $0x30] sm:$0xff]
      %v260 = vld [vmem:[%s246 + $0x38] sm:$0xff]
      %v261 = vld [vmem:[%s246 + $0x40] sm:$0xff]
      %v262 = vld [vmem:[%s246 + $0x48] sm:$0xff]
      %v263 = vld [vmem:[%s246 + $0x50] sm:$0xff]
      %v264 = vld [vmem:[%s246 + $0x58] sm:$0xff]
      %v265 = vld [vmem:[%s246 + $0x60] sm:$0xff]
      %v266 = vld [vmem:[%s246 + $0x68] sm:$0xff]
      %v267 = vld [vmem:[%s246 + $0x70] sm:$0xff]
      %v268 = vld [vmem:[%s246 + $0x78] sm:$0xff]
      %v269 = vld [vmem:[%s246 + $0x80] sm:$0xff]
      %v270 = vld [vmem:[%s246 + $0x88] sm:$0xff]
      %v271 = vld [vmem:[%s246 + $0x90] sm:$0xff]
      %v272 = vld [vmem:[%s246 + $0x98] sm:$0xff]
      %v273 = vld [vmem:[%s246 + $0xa0] sm:$0xff]
      %v274 = vld [vmem:[%s246 + $0xa8] sm:$0xff]
      %v275 = vld [vmem:[%s246 + $0xb0] sm:$0xff]
      %v276 = vld [vmem:[%s246 + $0xb8] sm:$0xff]
      %v277 = vld [vmem:[%s246 + $0xc0] sm:$0xff]
      %v278 = vld [vmem:[%s246 + $0xc8] sm:$0xff]
      %v279 = vld [vmem:[%s246 + $0xd0] sm:$0xff]
      %v280 = vld [vmem:[%s246 + $0xd8] sm:$0xff]
      %v281 = vld [vmem:[%s246 + $0xe0] sm:$0xff]
      %v282 = vld [vmem:[%s246 + $0xe8] sm:$0xff]
      %v283 = vld [vmem:[%s246 + $0xf0] sm:$0xff]
      %v284 = vld [vmem:[%s246 + $0xf8] sm:$0xff]
      %v285 = vld [vmem:[%s246 + $0x100] sm:$0xff]
      %v286 = vld [vmem:[%s246 + $0x108] sm:$0xff]
      %v287 = vld [vmem:[%s246 + $0x110] sm:$0xff]
      %v288 = vld [vmem:[%s246 + $0x118] sm:$0xff]
      %v289 = vld [vmem:[%s246 + $0x120] sm:$0xff]
      %v290 = vld [vmem:[%s246 + $0x128] sm:$0xff]
      %v291 = vld [vmem:[%s246 + $0x130] sm:$0xff]
      %v292 = vld [vmem:[%s246 + $0x138] sm:$0xff]
      %v293 = vld [vmem:[%s246 + $0x140] sm:$0xff]
      %v294 = vld [vmem:[%s246 + $0x148] sm:$0xff]
      %v295 = vld [vmem:[%s246 + $0x150] sm:$0xff]
      %v296 = vld [vmem:[%s246 + $0x158] sm:$0xff]
      %v297 = vld [vmem:[%s246 + $0x160] sm:$0xff]
      %v298 = vld [vmem:[%s246 + $0x168] sm:$0xff]
      %v299 = vld [vmem:[%s246 + $0x170] sm:$0xff]
      %v300 = vld [vmem:[%s246 + $0x178] sm:$0xff]
      %v301 = vld [vmem:[%s246 + $0x180] sm:$0xff]
      %v302 = vld [vmem:[%s246 + $0x188] sm:$0xff]
      %v303 = vld [vmem:[%s246 + $0x190] sm:$0xff]
      %v304 = vld [vmem:[%s246 + $0x198] sm:$0xff]
      %v305 = vld [vmem:[%s246 + $0x1a0] sm:$0xff]
      %v306 = vld [vmem:[%s246 + $0x1a8] sm:$0xff]
      %v307 = vld [vmem:[%s246 + $0x1b0] sm:$0xff]
      %v308 = vld [vmem:[%s246 + $0x1b8] sm:$0xff]
      %v309 = vld [vmem:[%s246 + $0x1c0] sm:$0xff]
      %v310 = vld [vmem:[%s246 + $0x1c8] sm:$0xff]
      %v311 = vld [vmem:[%s246 + $0x1d0] sm:$0xff]
      %v312 = vld [vmem:[%s246 + $0x1d8] sm:$0xff]
      %v313 = vld [vmem:[%s246 + $0x1e0] sm:$0xff]
      %v314 = vld [vmem:[%s246 + $0x1e8] sm:$0xff]
      %v315 = vld [vmem:[%s246 + $0x1f0] sm:$0xff]
      %v316 = vld [vmem:[%s246 + $0x1f8] sm:$0xff]
      %v317 = vld [vmem:[%s246 + $0x200] sm:$0xff]
      %v318 = vld [vmem:[%s246 + $0x208] sm:$0xff]
      %v319 = vld [vmem:[%s246 + $0x210] sm:$0xff]
      %v320 = vld [vmem:[%s246 + $0x218] sm:$0xff]
      %v321 = vld [vmem:[%s246 + $0x220] sm:$0xff]
      %v322 = vld [vmem:[%s246 + $0x228] sm:$0xff]
      %v323 = vld [vmem:[%s246 + $0x230] sm:$0xff]
      %v324 = vld [vmem:[%s246 + $0x238] sm:$0xff]
      %v325 = vld [vmem:[%s246 + $0x240] sm:$0xff]
      %v326 = vld [vmem:[%s246 + $0x248] sm:$0xff]
      %v327 = vld [vmem:[%s246 + $0x250] sm:$0xff]
      %v328 = vld [vmem:[%s246 + $0x258] sm:$0xff]
      %v329 = vld [vmem:[%s246 + $0x260] sm:$0xff]
      %v330 = vld [vmem:[%s246 + $0x268] sm:$0xff]
      %v331 = vld [vmem:[%s246 + $0x270] sm:$0xff]
      %v332 = vld [vmem:[%s246 + $0x278] sm:$0xff]
      %v333 = vld [vmem:[%s2] sm:$0xff]
      %v334 = vld [vmem:[%s2 + $0x8] sm:$0xff]
      %v335 = vld [vmem:[%s2 + $0x10] sm:$0xff]
      %v336 = vld [vmem:[%s2 + $0x18] sm:$0xff]
      %v337 = vld [vmem:[%s2 + $0x20] sm:$0xff]
      %v338 = vld [vmem:[%s2 + $0x28] sm:$0xff]
      %v339 = vld [vmem:[%s2 + $0x30] sm:$0xff]
      %v340 = vld [vmem:[%s2 + $0x38] sm:$0xff]
      %v341 = vld [vmem:[%s2 + $0x40] sm:$0xff]
      %v342 = vld [vmem:[%s2 + $0x48] sm:$0xff]
      %v343 = vld [vmem:[%s2 + $0x50] sm:$0xff]
      %v344 = vld [vmem:[%s2 + $0x58] sm:$0xff]
      %v345 = vld [vmem:[%s3] sm:$0xff]
      %v346 = vld [vmem:[%s3 + $0x8] sm:$0xff]
      %v347 = vld [vmem:[%s3 + $0x10] sm:$0xff]
      %v348 = vld [vmem:[%s3 + $0x18] sm:$0xff]
      %v349 = vld [vmem:[%s3 + $0x20] sm:$0xff]
      %v350 = vld [vmem:[%s3 + $0x28] sm:$0xff]
      %v351 = vld [vmem:[%s3 + $0x30] sm:$0xff]
      %v352 = vld [vmem:[%s3 + $0x38] sm:$0xff]
      %v353 = vld [vmem:[%s3 + $0x40] sm:$0xff]
      %v354 = vld [vmem:[%s3 + $0x48] sm:$0xff]
      %v355 = vld [vmem:[%s3 + $0x50] sm:$0xff]
      %v356 = vld [vmem:[%s3 + $0x58] sm:$0xff]
      %v357 = vld [vmem:[%s3 + $0x60] sm:$0xff]
      %v358 = vld [vmem:[%s3 + $0x68] sm:$0xff]
      %v359 = vld [vmem:[%s3 + $0x70] sm:$0xff]
      %v360 = vld [vmem:[%s3 + $0x78] sm:$0xff]
      %v361 = vld [vmem:[%s3 + $0x80] sm:$0xff]
      %v362 = vld [vmem:[%s3 + $0x88] sm:$0xff]
      %v363 = vld [vmem:[%s3 + $0x90] sm:$0xff]
      %v364 = vld [vmem:[%s3 + $0x98] sm:$0xff]
      %v365 = vld [vmem:[%s3 + $0xa0] sm:$0xff]
      %v366 = vld [vmem:[%s3 + $0xa8] sm:$0xff]
      %v367 = vld [vmem:[%s3 + $0xb0] sm:$0xff]
      %v368 = vld [vmem:[%s3 + $0xb8] sm:$0xff]
      %v369 = vld [vmem:[%s3 + $0xc0] sm:$0xff]
      %v370 = vld [vmem:[%s3 + $0xc8] sm:$0xff]
      %v371 = vld [vmem:[%s3 + $0xd0] sm:$0xff]
      %v372 = vld [vmem:[%s3 + $0xd8] sm:$0xff]
      %v373 = vld [vmem:[%s3 + $0xe0] sm:$0xff]
      %v374 = vld [vmem:[%s3 + $0xe8] sm:$0xff]
      %v375 = vld [vmem:[%s3 + $0xf0] sm:$0xff]
      %v376 = vld [vmem:[%s3 + $0xf8] sm:$0xff]
      %v377 = vld [vmem:[%s3 + $0x100] sm:$0xff]
      %v378 = vld [vmem:[%s3 + $0x108] sm:$0xff]
      %v379 = vld [vmem:[%s3 + $0x110] sm:$0xff]
      %v380 = vld [vmem:[%s3 + $0x118] sm:$0xff]
      %v381 = vld [vmem:[%s3 + $0x120] sm:$0xff]
      %v382 = vld [vmem:[%s3 + $0x128] sm:$0xff]
      %v383 = vld [vmem:[%s3 + $0x130] sm:$0xff]
      %v384 = vld [vmem:[%s3 + $0x138] sm:$0xff]
      %vm385 = vcmask 523264
      %v387 = vsel %vm385, %v335, 0
      %v390 = vsel %vm385, %v338, 0
      %v393 = vsel %vm385, %v341, 0
      %v396 = vsel %vm385, %v344, 0
      %398 = vmatprep.subr.mxu0 %v284
      %399 = vmatpush1.msra.mxu0 %v283
      %400 = vmatprep.subr.mxu0 %v282
      %401 = vmatpush1.msra.mxu0 %v281
      %402 = vmatprep.subr.mxu0 %v280
      %403 = vmatpush1.msra.mxu0 %v279
      %404 = vmatprep.subr.mxu0 %v278
      %405 = vmatpush1.msra.mxu0 %v277
      %406 = vmatprep.subr.mxu0 %v276
      %407 = vmatpush1.msra.mxu0 %v275
      %408 = vmatprep.subr.mxu0 %v274
      %409 = vmatpush1.msra.mxu0 %v273
      %410 = vmatprep.subr.mxu0 %v272
      %411 = vmatpush1.msra.mxu0 %v271
      %412 = vmatprep.subr.mxu0 %v270
      %413 = vmatpush1.msra.mxu0 %v269
      %414 = vmatprep.subr.mxu0 %v268
      %415 = vmatpush1.msra.mxu0 %v267
      %416 = vmatprep.subr.mxu0 %v266
      %417 = vmatpush1.msra.mxu0 %v265
      %418 = vmatprep.subr.mxu0 %v264
      %419 = vmatpush1.msra.mxu0 %v263
      %420 = vmatprep.subr.mxu0 %v262
      %421 = vmatpush1.msra.mxu0 %v261
      %422 = vmatprep.subr.mxu0 %v260
      %423 = vmatpush1.msra.mxu0 %v259
      %424 = vmatprep.subr.mxu0 %v258
      %425 = vmatpush1.msra.mxu0 %v257
      %426 = vmatprep.subr.mxu0 %v256
      %427 = vmatpush1.msra.mxu0 %v255
      %428 = vmatprep.subr.mxu0 %v254
      %429 = vmatpush1.msra.mxu0 %v253
      %430 = vmatprep.subr.mxu0 %v316
      %431 = vmatpush2.msra.mxu0 %v315
      %432 = vmatprep.subr.mxu0 %v314
      %433 = vmatpush2.msra.mxu0 %v313
      %434 = vmatprep.subr.mxu0 %v312
      %435 = vmatpush2.msra.mxu0 %v311
      %436 = vmatprep.subr.mxu0 %v310
      %437 = vmatpush2.msra.mxu0 %v309
      %438 = vmatprep.subr.mxu0 %v308
      %439 = vmatpush2.msra.mxu0 %v307
      %440 = vmatprep.subr.mxu0 %v306
      %441 = vmatpush2.msra.mxu0 %v305
      %442 = vmatprep.subr.mxu0 %v304
      %443 = vmatpush2.msra.mxu0 %v303
      %444 = vmatprep.subr.mxu0 %v302
      %445 = vmatpush2.msra.mxu0 %v301
      %446 = vmatprep.subr.mxu0 %v300
      %447 = vmatpush2.msra.mxu0 %v299
      %448 = vmatprep.subr.mxu0 %v298
      %449 = vmatpush2.msra.mxu0 %v297
      %450 = vmatprep.subr.mxu0 %v296
      %451 = vmatpush2.msra.mxu0 %v295
      %452 = vmatprep.subr.mxu0 %v294
      %453 = vmatpush2.msra.mxu0 %v293
      %454 = vmatprep.subr.mxu0 %v292
      %455 = vmatpush2.msra.mxu0 %v291
      %456 = vmatprep.subr.mxu0 %v290
      %457 = vmatpush2.msra.mxu0 %v289
      %458 = vmatprep.subr.mxu0 %v288
      %459 = vmatpush2.msra.mxu0 %v287
      %460 = vmatprep.subr.mxu0 %v286
      %461 = vmatpush2.msra.mxu0 %v285
      %462 = vmatprep.mubr.f32.mxu0 %v334
      %463 = vmatmul.mubr.f32.gmra.mxu0 %v333
      %v464 = vpop.f32.mrf.mxu0
      %v465 = vadd.f32 0.0, %v464
      %v466 = vpop.f32.mrf.mxu0
      %v467 = vadd.f32 0.0, %v466
      %468 = vmatprep.mubr.f32.mxu0 %v337
      %469 = vmatmul.mubr.f32.gmra.mxu0 %v336
      %v470 = vpop.f32.mrf.mxu0
      %v471 = vadd.f32 0.0, %v470
      %v472 = vpop.f32.mrf.mxu0
      %v473 = vadd.f32 0.0, %v472
      %474 = vmatprep.mubr.f32.mxu0 %v340
      %475 = vmatmul.mubr.f32.gmra.mxu0 %v339
      %v476 = vpop.f32.mrf.mxu0
      %v477 = vadd.f32 0.0, %v476
      %v478 = vpop.f32.mrf.mxu0
      %v479 = vadd.f32 0.0, %v478
      %480 = vmatprep.mubr.f32.mxu0 %v343
      %481 = vmatmul.mubr.f32.gmra.mxu0 %v342
      %v482 = vpop.f32.mrf.mxu0
      %v483 = vadd.f32 0.0, %v482
      %v484 = vpop.f32.mrf.mxu0
      %v485 = vadd.f32 0.0, %v484
      %486 = vdwg.mxu0
      %487 = vmatprep.subr.mxu0 0.0
      %488 = vmatpush1.msra.mxu0 0.0
      %489 = vmatprep.subr.mxu0 0.0
      %490 = vmatpush1.msra.mxu0 0.0
      %491 = vmatprep.subr.mxu0 0.0
      %492 = vmatpush1.msra.mxu0 0.0
      %493 = vmatprep.subr.mxu0 0.0
      %494 = vmatpush1.msra.mxu0 0.0
      %495 = vmatprep.subr.mxu0 0.0
      %496 = vmatpush1.msra.mxu0 0.0
      %497 = vmatprep.subr.mxu0 0.0
      %498 = vmatpush1.msra.mxu0 0.0
      %499 = vmatprep.subr.mxu0 0.0
      %500 = vmatpush1.msra.mxu0 0.0
      %501 = vmatprep.subr.mxu0 0.0
      %502 = vmatpush1.msra.mxu0 0.0
      %503 = vmatprep.subr.mxu0 %v332
      %504 = vmatpush1.msra.mxu0 %v331
      %505 = vmatprep.subr.mxu0 %v330
      %506 = vmatpush1.msra.mxu0 %v329
      %507 = vmatprep.subr.mxu0 %v328
      %508 = vmatpush1.msra.mxu0 %v327
      %509 = vmatprep.subr.mxu0 %v326
      %510 = vmatpush1.msra.mxu0 %v325
      %511 = vmatprep.subr.mxu0 %v324
      %512 = vmatpush1.msra.mxu0 %v323
      %513 = vmatprep.subr.mxu0 %v322
      %514 = vmatpush1.msra.mxu0 %v321
      %515 = vmatprep.subr.mxu0 %v320
      %516 = vmatpush1.msra.mxu0 %v319
      %517 = vmatprep.subr.mxu0 %v318
      %518 = vmatpush1.msra.mxu0 %v317
      %519 = vmatprep.subr.mxu0 0.0
      %520 = vmatpush2.msra.mxu0 0.0
      %521 = vmatprep.subr.mxu0 0.0
      %522 = vmatpush2.msra.mxu0 0.0
      %523 = vmatprep.subr.mxu0 0.0
      %524 = vmatpush2.msra.mxu0 0.0
      %525 = vmatprep.subr.mxu0 0.0
      %526 = vmatpush2.msra.mxu0 0.0
      %527 = vmatprep.subr.mxu0 0.0
      %528 = vmatpush2.msra.mxu0 0.0
      %529 = vmatprep.subr.mxu0 0.0
      %530 = vmatpush2.msra.mxu0 0.0
      %531 = vmatprep.subr.mxu0 0.0
      %532 = vmatpush2.msra.mxu0 0.0
      %533 = vmatprep.subr.mxu0 0.0
      %534 = vmatpush2.msra.mxu0 0.0
      %535 = vmatprep.subr.mxu0 0.0
      %536 = vmatpush2.msra.mxu0 0.0
      %537 = vmatprep.subr.mxu0 0.0
      %538 = vmatpush2.msra.mxu0 0.0
      %539 = vmatprep.subr.mxu0 0.0
      %540 = vmatpush2.msra.mxu0 0.0
      %541 = vmatprep.subr.mxu0 0.0
      %542 = vmatpush2.msra.mxu0 0.0
      %543 = vmatprep.subr.mxu0 0.0
      %544 = vmatpush2.msra.mxu0 0.0
      %545 = vmatprep.subr.mxu0 0.0
      %546 = vmatpush2.msra.mxu0 0.0
      %547 = vmatprep.subr.mxu0 0.0
      %548 = vmatpush2.msra.mxu0 0.0
      %549 = vmatprep.subr.mxu0 0.0
      %550 = vmatpush2.msra.mxu0 0.0
      %551 = vmatprep.mubr.f32.mxu0 0.0
      %552 = vmatmul.mubr.f32.gmra.mxu0 %v387
      %v553 = vpop.f32.mrf.mxu0
      %v554 = vadd.f32 %v465, %v553
      %v555 = vpop.f32.mrf.mxu0
      %v556 = vadd.f32 %v467, %v555
      %557 = vmatprep.mubr.f32.mxu0 0.0
      %558 = vmatmul.mubr.f32.gmra.mxu0 %v390
      %v559 = vpop.f32.mrf.mxu0
      %v560 = vadd.f32 %v471, %v559
      %v561 = vpop.f32.mrf.mxu0
      %v562 = vadd.f32 %v473, %v561
      %563 = vmatprep.mubr.f32.mxu0 0.0
      %564 = vmatmul.mubr.f32.gmra.mxu0 %v393
      %v565 = vpop.f32.mrf.mxu0
      %v566 = vadd.f32 %v477, %v565
      %v567 = vpop.f32.mrf.mxu0
      %v568 = vadd.f32 %v479, %v567
      %569 = vmatprep.mubr.f32.mxu0 0.0
      %570 = vmatmul.mubr.f32.gmra.mxu0 %v396
      %v571 = vpop.f32.mrf.mxu0
      %v572 = vadd.f32 %v483, %v571
      %v573 = vpop.f32.mrf.mxu0
      %v574 = vadd.f32 %v485, %v573
      %575 = vdwg.mxu0
      %v576 = vadd.f32 %v554, %v556
      %577 = vadd.xlane.f32.xlu0 %v576
      %v578 = vpop.xlane.xlu0 %577
      %v579 = vadd.f32 %v560, %v562
      %580 = vadd.xlane.f32.xlu0 %v579
      %v581 = vpop.xlane.xlu0 %580
      %v582 = vadd.f32 %v566, %v568
      %583 = vadd.xlane.f32.xlu0 %v582
      %v584 = vpop.xlane.xlu0 %583
      %v585 = vadd.f32 %v572, %v574
      %586 = vadd.xlane.f32.xlu0 %v585
      %v587 = vpop.xlane.xlu0 %586
      %v588 = vmul.f32 %v578, 0.000390625
      %v589 = vmul.f32 %v581, 0.000390625
      %v590 = vmul.f32 %v584, 0.000390625
      %v591 = vmul.f32 %v587, 0.000390625
      %vm592 = vcmask 261120
      %v594 = vsel %vm592, %v345, 0
      %v597 = vsel %vm592, %v346, 0
      %v600 = vsel %vm592, %v347, 0
      %v603 = vsel %vm592, %v348, 0
      %v606 = vsel %vm592, %v349, 0
      %v609 = vsel %vm592, %v350, 0
      %v612 = vsel %vm592, %v351, 0
      %v615 = vsel %vm592, %v352, 0
      %v618 = vsel %vm592, %v353, 0
      %v621 = vsel %vm592, %v354, 0
      %v624 = vsel %vm592, %v355, 0
      %v627 = vsel %vm592, %v356, 0
      %v630 = vsel %vm592, %v357, 0
      %v633 = vsel %vm592, %v358, 0
      %v636 = vsel %vm592, %v359, 0
      %v639 = vsel %vm592, %v360, 0
      %v642 = vsel %vm592, %v361, 0
      %v645 = vsel %vm592, %v362, 0
      %v648 = vsel %vm592, %v363, 0
      %v651 = vsel %vm592, %v364, 0
      %v654 = vsel %vm592, %v365, 0
      %v657 = vsel %vm592, %v366, 0
      %v660 = vsel %vm592, %v367, 0
      %v663 = vsel %vm592, %v368, 0
      %v666 = vsel %vm592, %v369, 0
      %v669 = vsel %vm592, %v370, 0
      %v672 = vsel %vm592, %v371, 0
      %v675 = vsel %vm592, %v372, 0
      %v678 = vsel %vm592, %v373, 0
      %v681 = vsel %vm592, %v374, 0
      %v684 = vsel %vm592, %v375, 0
      %v687 = vsel %vm592, %v376, 0
      %v690 = vsel %vm592, %v377, 0
      %v693 = vsel %vm592, %v378, 0
      %v696 = vsel %vm592, %v379, 0
      %v699 = vsel %vm592, %v380, 0
      %v702 = vsel %vm592, %v381, 0
      %v705 = vsel %vm592, %v382, 0
      %v708 = vsel %vm592, %v383, 0
      %v711 = vsel %vm592, %v384, 0
      %713 = vmatprep.subr.mxu0 0.0
      %714 = vmatpush1.msra.mxu0 0.0
      %715 = vmatprep.subr.mxu0 0.0
      %716 = vmatpush1.msra.mxu0 0.0
      %717 = vmatprep.subr.mxu0 0.0
      %718 = vmatpush1.msra.mxu0 0.0
      %719 = vmatprep.subr.mxu0 0.0
      %720 = vmatpush1.msra.mxu0 0.0
      %721 = vmatprep.subr.mxu0 0.0
      %722 = vmatpush1.msra.mxu0 0.0
      %723 = vmatprep.subr.mxu0 0.0
      %724 = vmatpush1.msra.mxu0 0.0
      %725 = vmatprep.subr.mxu0 0.0
      %726 = vmatpush1.msra.mxu0 0.0
      %727 = vmatprep.subr.mxu0 0.0
      %728 = vmatpush1.msra.mxu0 0.0
      %729 = vmatprep.subr.mxu0 0.0
      %730 = vmatpush1.msra.mxu0 0.0
      %731 = vmatprep.subr.mxu0 0.0
      %732 = vmatpush1.msra.mxu0 0.0
      %733 = vmatprep.subr.mxu0 0.0
      %734 = vmatpush1.msra.mxu0 0.0
      %735 = vmatprep.subr.mxu0 0.0
      %736 = vmatpush1.msra.mxu0 0.0
      %737 = vmatprep.subr.mxu0 %v591
      %738 = vmatpush1.msra.mxu0 %v591
      %739 = vmatprep.subr.mxu0 %v590
      %740 = vmatpush1.msra.mxu0 %v590
      %741 = vmatprep.subr.mxu0 %v589
      %742 = vmatpush1.msra.mxu0 %v589
      %743 = vmatprep.subr.mxu0 %v588
      %744 = vmatpush1.msra.mxu0 %v588
      %745 = vmatprep.subr.mxu0 0.0
      %746 = vmatpush2.msra.mxu0 0.0
      %747 = vmatprep.subr.mxu0 0.0
      %748 = vmatpush2.msra.mxu0 0.0
      %749 = vmatprep.subr.mxu0 0.0
      %750 = vmatpush2.msra.mxu0 0.0
      %751 = vmatprep.subr.mxu0 0.0
      %752 = vmatpush2.msra.mxu0 0.0
      %753 = vmatprep.subr.mxu0 0.0
      %754 = vmatpush2.msra.mxu0 0.0
      %755 = vmatprep.subr.mxu0 0.0
      %756 = vmatpush2.msra.mxu0 0.0
      %757 = vmatprep.subr.mxu0 0.0
      %758 = vmatpush2.msra.mxu0 0.0
      %759 = vmatprep.subr.mxu0 0.0
      %760 = vmatpush2.msra.mxu0 0.0
      %761 = vmatprep.subr.mxu0 0.0
      %762 = vmatpush2.msra.mxu0 0.0
      %763 = vmatprep.subr.mxu0 0.0
      %764 = vmatpush2.msra.mxu0 0.0
      %765 = vmatprep.subr.mxu0 0.0
      %766 = vmatpush2.msra.mxu0 0.0
      %767 = vmatprep.subr.mxu0 0.0
      %768 = vmatpush2.msra.mxu0 0.0
      %769 = vmatprep.subr.mxu0 0.0
      %770 = vmatpush2.msra.mxu0 0.0
      %771 = vmatprep.subr.mxu0 0.0
      %772 = vmatpush2.msra.mxu0 0.0
      %773 = vmatprep.subr.mxu0 0.0
      %774 = vmatpush2.msra.mxu0 0.0
      %775 = vmatprep.subr.mxu0 0.0
      %776 = vmatpush2.msra.mxu0 0.0
      %777 = vmatprep.mubr.f32.mxu0 0.0
      %778 = vmatmul.mubr.f32.gmra.mxu0 %v594
      %v779 = vpop.f32.mrf.mxu0
      %v780 = vadd.f32 0.0, %v779
      %v781 = vpop.f32.mrf.mxu0
      %v782 = vadd.f32 0.0, %v781
      %783 = vmatprep.mubr.f32.mxu0 0.0
      %784 = vmatmul.mubr.f32.gmra.mxu0 %v597
      %v785 = vpop.f32.mrf.mxu0
      %v786 = vadd.f32 0.0, %v785
      %v787 = vpop.f32.mrf.mxu0
      %v788 = vadd.f32 0.0, %v787
      %789 = vmatprep.mubr.f32.mxu0 0.0
      %790 = vmatmul.mubr.f32.gmra.mxu0 %v600
      %v791 = vpop.f32.mrf.mxu0
      %v792 = vadd.f32 0.0, %v791
      %v793 = vpop.f32.mrf.mxu0
      %v794 = vadd.f32 0.0, %v793
      %795 = vmatprep.mubr.f32.mxu0 0.0
      %796 = vmatmul.mubr.f32.gmra.mxu0 %v603
      %v797 = vpop.f32.mrf.mxu0
      %v798 = vadd.f32 0.0, %v797
      %v799 = vpop.f32.mrf.mxu0
      %v800 = vadd.f32 0.0, %v799
      %801 = vmatprep.mubr.f32.mxu0 0.0
      %802 = vmatmul.mubr.f32.gmra.mxu0 %v606
      %v803 = vpop.f32.mrf.mxu0
      %v804 = vadd.f32 0.0, %v803
      %v805 = vpop.f32.mrf.mxu0
      %v806 = vadd.f32 0.0, %v805
      %807 = vmatprep.mubr.f32.mxu0 0.0
      %808 = vmatmul.mubr.f32.gmra.mxu0 %v609
      %v809 = vpop.f32.mrf.mxu0
      %v810 = vadd.f32 0.0, %v809
      %v811 = vpop.f32.mrf.mxu0
      %v812 = vadd.f32 0.0, %v811
      %813 = vmatprep.mubr.f32.mxu0 0.0
      %814 = vmatmul.mubr.f32.gmra.mxu0 %v612
      %v815 = vpop.f32.mrf.mxu0
      %v816 = vadd.f32 0.0, %v815
      %v817 = vpop.f32.mrf.mxu0
      %v818 = vadd.f32 0.0, %v817
      %819 = vmatprep.mubr.f32.mxu0 0.0
      %820 = vmatmul.mubr.f32.gmra.mxu0 %v615
      %v821 = vpop.f32.mrf.mxu0
      %v822 = vadd.f32 0.0, %v821
      %v823 = vpop.f32.mrf.mxu0
      %v824 = vadd.f32 0.0, %v823
      %825 = vmatprep.mubr.f32.mxu0 0.0
      %826 = vmatmul.mubr.f32.gmra.mxu0 %v618
      %v827 = vpop.f32.mrf.mxu0
      %v828 = vadd.f32 0.0, %v827
      %v829 = vpop.f32.mrf.mxu0
      %v830 = vadd.f32 0.0, %v829
      %831 = vmatprep.mubr.f32.mxu0 0.0
      %832 = vmatmul.mubr.f32.gmra.mxu0 %v621
      %v833 = vpop.f32.mrf.mxu0
      %v834 = vadd.f32 0.0, %v833
      %v835 = vpop.f32.mrf.mxu0
      %v836 = vadd.f32 0.0, %v835
      %837 = vmatprep.mubr.f32.mxu0 0.0
      %838 = vmatmul.mubr.f32.gmra.mxu0 %v624
      %v839 = vpop.f32.mrf.mxu0
      %v840 = vadd.f32 0.0, %v839
      %v841 = vpop.f32.mrf.mxu0
      %v842 = vadd.f32 0.0, %v841
      %843 = vmatprep.mubr.f32.mxu0 0.0
      %844 = vmatmul.mubr.f32.gmra.mxu0 %v627
      %v845 = vpop.f32.mrf.mxu0
      %v846 = vadd.f32 0.0, %v845
      %v847 = vpop.f32.mrf.mxu0
      %v848 = vadd.f32 0.0, %v847
      %849 = vmatprep.mubr.f32.mxu0 0.0
      %850 = vmatmul.mubr.f32.gmra.mxu0 %v630
      %v851 = vpop.f32.mrf.mxu0
      %v852 = vadd.f32 0.0, %v851
      %v853 = vpop.f32.mrf.mxu0
      %v854 = vadd.f32 0.0, %v853
      %855 = vmatprep.mubr.f32.mxu0 0.0
      %856 = vmatmul.mubr.f32.gmra.mxu0 %v633
      %v857 = vpop.f32.mrf.mxu0
      %v858 = vadd.f32 0.0, %v857
      %v859 = vpop.f32.mrf.mxu0
      %v860 = vadd.f32 0.0, %v859
      %861 = vmatprep.mubr.f32.mxu0 0.0
      %862 = vmatmul.mubr.f32.gmra.mxu0 %v636
      %v863 = vpop.f32.mrf.mxu0
      %v864 = vadd.f32 0.0, %v863
      %v865 = vpop.f32.mrf.mxu0
      %v866 = vadd.f32 0.0, %v865
      %867 = vmatprep.mubr.f32.mxu0 0.0
      %868 = vmatmul.mubr.f32.gmra.mxu0 %v639
      %v869 = vpop.f32.mrf.mxu0
      %v870 = vadd.f32 0.0, %v869
      %v871 = vpop.f32.mrf.mxu0
      %v872 = vadd.f32 0.0, %v871
      %873 = vmatprep.mubr.f32.mxu0 0.0
      %874 = vmatmul.mubr.f32.gmra.mxu0 %v642
      %v875 = vpop.f32.mrf.mxu0
      %v876 = vadd.f32 0.0, %v875
      %v877 = vpop.f32.mrf.mxu0
      %v878 = vadd.f32 0.0, %v877
      %879 = vmatprep.mubr.f32.mxu0 0.0
      %880 = vmatmul.mubr.f32.gmra.mxu0 %v645
      %v881 = vpop.f32.mrf.mxu0
      %v882 = vadd.f32 0.0, %v881
      %v883 = vpop.f32.mrf.mxu0
      %v884 = vadd.f32 0.0, %v883
      %885 = vmatprep.mubr.f32.mxu0 0.0
      %886 = vmatmul.mubr.f32.gmra.mxu0 %v648
      %v887 = vpop.f32.mrf.mxu0
      %v888 = vadd.f32 0.0, %v887
      %v889 = vpop.f32.mrf.mxu0
      %v890 = vadd.f32 0.0, %v889
      %891 = vmatprep.mubr.f32.mxu0 0.0
      %892 = vmatmul.mubr.f32.gmra.mxu0 %v651
      %v893 = vpop.f32.mrf.mxu0
      %v894 = vadd.f32 0.0, %v893
      %v895 = vpop.f32.mrf.mxu0
      %v896 = vadd.f32 0.0, %v895
      %897 = vmatprep.mubr.f32.mxu0 0.0
      %898 = vmatmul.mubr.f32.gmra.mxu0 %v654
      %v899 = vpop.f32.mrf.mxu0
      %v900 = vadd.f32 0.0, %v899
      %v901 = vpop.f32.mrf.mxu0
      %v902 = vadd.f32 0.0, %v901
      %903 = vmatprep.mubr.f32.mxu0 0.0
      %904 = vmatmul.mubr.f32.gmra.mxu0 %v657
      %v905 = vpop.f32.mrf.mxu0
      %v906 = vadd.f32 0.0, %v905
      %v907 = vpop.f32.mrf.mxu0
      %v908 = vadd.f32 0.0, %v907
      %909 = vmatprep.mubr.f32.mxu0 0.0
      %910 = vmatmul.mubr.f32.gmra.mxu0 %v660
      %v911 = vpop.f32.mrf.mxu0
      %v912 = vadd.f32 0.0, %v911
      %v913 = vpop.f32.mrf.mxu0
      %v914 = vadd.f32 0.0, %v913
      %915 = vmatprep.mubr.f32.mxu0 0.0
      %916 = vmatmul.mubr.f32.gmra.mxu0 %v663
      %v917 = vpop.f32.mrf.mxu0
      %v918 = vadd.f32 0.0, %v917
      %v919 = vpop.f32.mrf.mxu0
      %v920 = vadd.f32 0.0, %v919
      %921 = vmatprep.mubr.f32.mxu0 0.0
      %922 = vmatmul.mubr.f32.gmra.mxu0 %v666
      %v923 = vpop.f32.mrf.mxu0
      %v924 = vadd.f32 0.0, %v923
      %v925 = vpop.f32.mrf.mxu0
      %v926 = vadd.f32 0.0, %v925
      %927 = vmatprep.mubr.f32.mxu0 0.0
      %928 = vmatmul.mubr.f32.gmra.mxu0 %v669
      %v929 = vpop.f32.mrf.mxu0
      %v930 = vadd.f32 0.0, %v929
      %v931 = vpop.f32.mrf.mxu0
      %v932 = vadd.f32 0.0, %v931
      %933 = vmatprep.mubr.f32.mxu0 0.0
      %934 = vmatmul.mubr.f32.gmra.mxu0 %v672
      %v935 = vpop.f32.mrf.mxu0
      %v936 = vadd.f32 0.0, %v935
      %v937 = vpop.f32.mrf.mxu0
      %v938 = vadd.f32 0.0, %v937
      %939 = vmatprep.mubr.f32.mxu0 0.0
      %940 = vmatmul.mubr.f32.gmra.mxu0 %v675
      %v941 = vpop.f32.mrf.mxu0
      %v942 = vadd.f32 0.0, %v941
      %v943 = vpop.f32.mrf.mxu0
      %v944 = vadd.f32 0.0, %v943
      %945 = vmatprep.mubr.f32.mxu0 0.0
      %946 = vmatmul.mubr.f32.gmra.mxu0 %v678
      %v947 = vpop.f32.mrf.mxu0
      %v948 = vadd.f32 0.0, %v947
      %v949 = vpop.f32.mrf.mxu0
      %v950 = vadd.f32 0.0, %v949
      %951 = vmatprep.mubr.f32.mxu0 0.0
      %952 = vmatmul.mubr.f32.gmra.mxu0 %v681
      %v953 = vpop.f32.mrf.mxu0
      %v954 = vadd.f32 0.0, %v953
      %v955 = vpop.f32.mrf.mxu0
      %v956 = vadd.f32 0.0, %v955
      %957 = vmatprep.mubr.f32.mxu0 0.0
      %958 = vmatmul.mubr.f32.gmra.mxu0 %v684
      %v959 = vpop.f32.mrf.mxu0
      %v960 = vadd.f32 0.0, %v959
      %v961 = vpop.f32.mrf.mxu0
      %v962 = vadd.f32 0.0, %v961
      %963 = vmatprep.mubr.f32.mxu0 0.0
      %964 = vmatmul.mubr.f32.gmra.mxu0 %v687
      %v965 = vpop.f32.mrf.mxu0
      %v966 = vadd.f32 0.0, %v965
      %v967 = vpop.f32.mrf.mxu0
      %v968 = vadd.f32 0.0, %v967
      %969 = vmatprep.mubr.f32.mxu0 0.0
      %970 = vmatmul.mubr.f32.gmra.mxu0 %v690
      %v971 = vpop.f32.mrf.mxu0
      %v972 = vadd.f32 0.0, %v971
      %v973 = vpop.f32.mrf.mxu0
      %v974 = vadd.f32 0.0, %v973
      %975 = vmatprep.mubr.f32.mxu0 0.0
      %976 = vmatmul.mubr.f32.gmra.mxu0 %v693
      %v977 = vpop.f32.mrf.mxu0
      %v978 = vadd.f32 0.0, %v977
      %v979 = vpop.f32.mrf.mxu0
      %v980 = vadd.f32 0.0, %v979
      %981 = vmatprep.mubr.f32.mxu0 0.0
      %982 = vmatmul.mubr.f32.gmra.mxu0 %v696
      %v983 = vpop.f32.mrf.mxu0
      %v984 = vadd.f32 0.0, %v983
      %v985 = vpop.f32.mrf.mxu0
      %v986 = vadd.f32 0.0, %v985
      %987 = vmatprep.mubr.f32.mxu0 0.0
      %988 = vmatmul.mubr.f32.gmra.mxu0 %v699
      %v989 = vpop.f32.mrf.mxu0
      %v990 = vadd.f32 0.0, %v989
      %v991 = vpop.f32.mrf.mxu0
      %v992 = vadd.f32 0.0, %v991
      %993 = vmatprep.mubr.f32.mxu0 0.0
      %994 = vmatmul.mubr.f32.gmra.mxu0 %v702
      %v995 = vpop.f32.mrf.mxu0
      %v996 = vadd.f32 0.0, %v995
      %v997 = vpop.f32.mrf.mxu0
      %v998 = vadd.f32 0.0, %v997
      %999 = vmatprep.mubr.f32.mxu0 0.0
      %1000 = vmatmul.mubr.f32.gmra.mxu0 %v705
      %v1001 = vpop.f32.mrf.mxu0
      %v1002 = vadd.f32 0.0, %v1001
      %v1003 = vpop.f32.mrf.mxu0
      %v1004 = vadd.f32 0.0, %v1003
      %1005 = vmatprep.mubr.f32.mxu0 0.0
      %1006 = vmatmul.mubr.f32.gmra.mxu0 %v708
      %v1007 = vpop.f32.mrf.mxu0
      %v1008 = vadd.f32 0.0, %v1007
      %v1009 = vpop.f32.mrf.mxu0
      %v1010 = vadd.f32 0.0, %v1009
      %1011 = vmatprep.mubr.f32.mxu0 0.0
      %1012 = vmatmul.mubr.f32.gmra.mxu0 %v711
      %v1013 = vpop.f32.mrf.mxu0
      %v1014 = vadd.f32 0.0, %v1013
      %v1015 = vpop.f32.mrf.mxu0
      %v1016 = vadd.f32 0.0, %v1015
      %1017 = vdwg.mxu0
      %v1018 = vsub.f32 %v253, %v780
      %v1019 = vsub.f32 %v254, %v782
      %v1020 = vsub.f32 %v255, %v786
      %v1021 = vsub.f32 %v256, %v788
      %v1022 = vsub.f32 %v257, %v792
      %v1023 = vsub.f32 %v258, %v794
      %v1024 = vsub.f32 %v259, %v798
      %v1025 = vsub.f32 %v260, %v800
      %v1026 = vsub.f32 %v261, %v804
      %v1027 = vsub.f32 %v262, %v806
      %v1028 = vsub.f32 %v263, %v810
      %v1029 = vsub.f32 %v264, %v812
      %v1030 = vsub.f32 %v265, %v816
      %v1031 = vsub.f32 %v266, %v818
      %v1032 = vsub.f32 %v267, %v822
      %v1033 = vsub.f32 %v268, %v824
      %v1034 = vsub.f32 %v269, %v828
      %v1035 = vsub.f32 %v270, %v830
      %v1036 = vsub.f32 %v271, %v834
      %v1037 = vsub.f32 %v272, %v836
      %v1038 = vsub.f32 %v273, %v840
      %v1039 = vsub.f32 %v274, %v842
      %v1040 = vsub.f32 %v275, %v846
      %v1041 = vsub.f32 %v276, %v848
      %v1042 = vsub.f32 %v277, %v852
      %v1043 = vsub.f32 %v278, %v854
      %v1044 = vsub.f32 %v279, %v858
      %v1045 = vsub.f32 %v280, %v860
      %v1046 = vsub.f32 %v281, %v864
      %v1047 = vsub.f32 %v282, %v866
      %v1048 = vsub.f32 %v283, %v870
      %v1049 = vsub.f32 %v284, %v872
      %v1050 = vsub.f32 %v285, %v876
      %v1051 = vsub.f32 %v286, %v878
      %v1052 = vsub.f32 %v287, %v882
      %v1053 = vsub.f32 %v288, %v884
      %v1054 = vsub.f32 %v289, %v888
      %v1055 = vsub.f32 %v290, %v890
      %v1056 = vsub.f32 %v291, %v894
      %v1057 = vsub.f32 %v292, %v896
      %v1058 = vsub.f32 %v293, %v900
      %v1059 = vsub.f32 %v294, %v902
      %v1060 = vsub.f32 %v295, %v906
      %v1061 = vsub.f32 %v296, %v908
      %v1062 = vsub.f32 %v297, %v912
      %v1063 = vsub.f32 %v298, %v914
      %v1064 = vsub.f32 %v299, %v918
      %v1065 = vsub.f32 %v300, %v920
      %v1066 = vsub.f32 %v301, %v924
      %v1067 = vsub.f32 %v302, %v926
      %v1068 = vsub.f32 %v303, %v930
      %v1069 = vsub.f32 %v304, %v932
      %v1070 = vsub.f32 %v305, %v936
      %v1071 = vsub.f32 %v306, %v938
      %v1072 = vsub.f32 %v307, %v942
      %v1073 = vsub.f32 %v308, %v944
      %v1074 = vsub.f32 %v309, %v948
      %v1075 = vsub.f32 %v310, %v950
      %v1076 = vsub.f32 %v311, %v954
      %v1077 = vsub.f32 %v312, %v956
      %v1078 = vsub.f32 %v313, %v960
      %v1079 = vsub.f32 %v314, %v962
      %v1080 = vsub.f32 %v315, %v966
      %v1081 = vsub.f32 %v316, %v968
      %v1082 = vsub.f32 %v317, %v972
      %v1083 = vsub.f32 %v318, %v974
      %v1084 = vsub.f32 %v319, %v978
      %v1085 = vsub.f32 %v320, %v980
      %v1086 = vsub.f32 %v321, %v984
      %v1087 = vsub.f32 %v322, %v986
      %v1088 = vsub.f32 %v323, %v990
      %v1089 = vsub.f32 %v324, %v992
      %v1090 = vsub.f32 %v325, %v996
      %v1091 = vsub.f32 %v326, %v998
      %v1092 = vsub.f32 %v327, %v1002
      %v1093 = vsub.f32 %v328, %v1004
      %v1094 = vsub.f32 %v329, %v1008
      %v1095 = vsub.f32 %v330, %v1010
      %v1096 = vsub.f32 %v331, %v1014
      %v1097 = vsub.f32 %v332, %v1016
      %v1098 = vmul.f32 %v1018, %v1018
      %v1099 = vmul.f32 %v1019, %v1019
      %v1100 = vmul.f32 %v1020, %v1020
      %v1101 = vmul.f32 %v1021, %v1021
      %v1102 = vmul.f32 %v1022, %v1022
      %v1103 = vmul.f32 %v1023, %v1023
      %v1104 = vmul.f32 %v1024, %v1024
      %v1105 = vmul.f32 %v1025, %v1025
      %v1106 = vmul.f32 %v1026, %v1026
      %v1107 = vmul.f32 %v1027, %v1027
      %v1108 = vmul.f32 %v1028, %v1028
      %v1109 = vmul.f32 %v1029, %v1029
      %v1110 = vmul.f32 %v1030, %v1030
      %v1111 = vmul.f32 %v1031, %v1031
      %v1112 = vmul.f32 %v1032, %v1032
      %v1113 = vmul.f32 %v1033, %v1033
      %v1114 = vmul.f32 %v1034, %v1034
      %v1115 = vmul.f32 %v1035, %v1035
      %v1116 = vmul.f32 %v1036, %v1036
      %v1117 = vmul.f32 %v1037, %v1037
      %v1118 = vmul.f32 %v1038, %v1038
      %v1119 = vmul.f32 %v1039, %v1039
      %v1120 = vmul.f32 %v1040, %v1040
      %v1121 = vmul.f32 %v1041, %v1041
      %v1122 = vmul.f32 %v1042, %v1042
      %v1123 = vmul.f32 %v1043, %v1043
      %v1124 = vmul.f32 %v1044, %v1044
      %v1125 = vmul.f32 %v1045, %v1045
      %v1126 = vmul.f32 %v1046, %v1046
      %v1127 = vmul.f32 %v1047, %v1047
      %v1128 = vmul.f32 %v1048, %v1048
      %v1129 = vmul.f32 %v1049, %v1049
      %v1130 = vmul.f32 %v1050, %v1050
      %v1131 = vmul.f32 %v1051, %v1051
      %v1132 = vmul.f32 %v1052, %v1052
      %v1133 = vmul.f32 %v1053, %v1053
      %v1134 = vmul.f32 %v1054, %v1054
      %v1135 = vmul.f32 %v1055, %v1055
      %v1136 = vmul.f32 %v1056, %v1056
      %v1137 = vmul.f32 %v1057, %v1057
      %v1138 = vmul.f32 %v1058, %v1058
      %v1139 = vmul.f32 %v1059, %v1059
      %v1140 = vmul.f32 %v1060, %v1060
      %v1141 = vmul.f32 %v1061, %v1061
      %v1142 = vmul.f32 %v1062, %v1062
      %v1143 = vmul.f32 %v1063, %v1063
      %v1144 = vmul.f32 %v1064, %v1064
      %v1145 = vmul.f32 %v1065, %v1065
      %v1146 = vmul.f32 %v1066, %v1066
      %v1147 = vmul.f32 %v1067, %v1067
      %v1148 = vmul.f32 %v1068, %v1068
      %v1149 = vmul.f32 %v1069, %v1069
      %v1150 = vmul.f32 %v1070, %v1070
      %v1151 = vmul.f32 %v1071, %v1071
      %v1152 = vmul.f32 %v1072, %v1072
      %v1153 = vmul.f32 %v1073, %v1073
      %v1154 = vmul.f32 %v1074, %v1074
      %v1155 = vmul.f32 %v1075, %v1075
      %v1156 = vmul.f32 %v1076, %v1076
      %v1157 = vmul.f32 %v1077, %v1077
      %v1158 = vmul.f32 %v1078, %v1078
      %v1159 = vmul.f32 %v1079, %v1079
      %v1160 = vmul.f32 %v1080, %v1080
      %v1161 = vmul.f32 %v1081, %v1081
      %v1162 = vmul.f32 %v1082, %v1082
      %v1163 = vmul.f32 %v1083, %v1083
      %v1164 = vmul.f32 %v1084, %v1084
      %v1165 = vmul.f32 %v1085, %v1085
      %v1166 = vmul.f32 %v1086, %v1086
      %v1167 = vmul.f32 %v1087, %v1087
      %v1168 = vmul.f32 %v1088, %v1088
      %v1169 = vmul.f32 %v1089, %v1089
      %v1170 = vmul.f32 %v1090, %v1090
      %v1171 = vmul.f32 %v1091, %v1091
      %v1172 = vmul.f32 %v1092, %v1092
      %v1173 = vmul.f32 %v1093, %v1093
      %v1174 = vmul.f32 %v1094, %v1094
      %v1175 = vmul.f32 %v1095, %v1095
      %v1176 = vmul.f32 %v1096, %v1096
      %v1177 = vmul.f32 %v1097, %v1097
      %1178 = vmatprep.subr.mxu0 %v1129
      %1179 = vmatpush1.msra.mxu0 %v1128
      %1180 = vmatprep.subr.mxu0 %v1127
      %1181 = vmatpush1.msra.mxu0 %v1126
      %1182 = vmatprep.subr.mxu0 %v1125
      %1183 = vmatpush1.msra.mxu0 %v1124
      %1184 = vmatprep.subr.mxu0 %v1123
      %1185 = vmatpush1.msra.mxu0 %v1122
      %1186 = vmatprep.subr.mxu0 %v1121
      %1187 = vmatpush1.msra.mxu0 %v1120
      %1188 = vmatprep.subr.mxu0 %v1119
      %1189 = vmatpush1.msra.mxu0 %v1118
      %1190 = vmatprep.subr.mxu0 %v1117
      %1191 = vmatpush1.msra.mxu0 %v1116
      %1192 = vmatprep.subr.mxu0 %v1115
      %1193 = vmatpush1.msra.mxu0 %v1114
      %1194 = vmatprep.subr.mxu0 %v1113
      %1195 = vmatpush1.msra.mxu0 %v1112
      %1196 = vmatprep.subr.mxu0 %v1111
      %1197 = vmatpush1.msra.mxu0 %v1110
      %1198 = vmatprep.subr.mxu0 %v1109
      %1199 = vmatpush1.msra.mxu0 %v1108
      %1200 = vmatprep.subr.mxu0 %v1107
      %1201 = vmatpush1.msra.mxu0 %v1106
      %1202 = vmatprep.subr.mxu0 %v1105
      %1203 = vmatpush1.msra.mxu0 %v1104
      %1204 = vmatprep.subr.mxu0 %v1103
      %1205 = vmatpush1.msra.mxu0 %v1102
      %1206 = vmatprep.subr.mxu0 %v1101
      %1207 = vmatpush1.msra.mxu0 %v1100
      %1208 = vmatprep.subr.mxu0 %v1099
      %1209 = vmatpush1.msra.mxu0 %v1098
      %1210 = vmatprep.subr.mxu0 %v1161
      %1211 = vmatpush2.msra.mxu0 %v1160
      %1212 = vmatprep.subr.mxu0 %v1159
      %1213 = vmatpush2.msra.mxu0 %v1158
      %1214 = vmatprep.subr.mxu0 %v1157
      %1215 = vmatpush2.msra.mxu0 %v1156
      %1216 = vmatprep.subr.mxu0 %v1155
      %1217 = vmatpush2.msra.mxu0 %v1154
      %1218 = vmatprep.subr.mxu0 %v1153
      %1219 = vmatpush2.msra.mxu0 %v1152
      %1220 = vmatprep.subr.mxu0 %v1151
      %1221 = vmatpush2.msra.mxu0 %v1150
      %1222 = vmatprep.subr.mxu0 %v1149
      %1223 = vmatpush2.msra.mxu0 %v1148
      %1224 = vmatprep.subr.mxu0 %v1147
      %1225 = vmatpush2.msra.mxu0 %v1146
      %1226 = vmatprep.subr.mxu0 %v1145
      %1227 = vmatpush2.msra.mxu0 %v1144
      %1228 = vmatprep.subr.mxu0 %v1143
      %1229 = vmatpush2.msra.mxu0 %v1142
      %1230 = vmatprep.subr.mxu0 %v1141
      %1231 = vmatpush2.msra.mxu0 %v1140
      %1232 = vmatprep.subr.mxu0 %v1139
      %1233 = vmatpush2.msra.mxu0 %v1138
      %1234 = vmatprep.subr.mxu0 %v1137
      %1235 = vmatpush2.msra.mxu0 %v1136
      %1236 = vmatprep.subr.mxu0 %v1135
      %1237 = vmatpush2.msra.mxu0 %v1134
      %1238 = vmatprep.subr.mxu0 %v1133
      %1239 = vmatpush2.msra.mxu0 %v1132
      %1240 = vmatprep.subr.mxu0 %v1131
      %1241 = vmatpush2.msra.mxu0 %v1130
      %1242 = vmatprep.mubr.f32.mxu0 %v334
      %1243 = vmatmul.mubr.f32.gmra.mxu0 %v333
      %v1244 = vpop.f32.mrf.mxu0
      %v1245 = vadd.f32 0.0, %v1244
      %v1246 = vpop.f32.mrf.mxu0
      %v1247 = vadd.f32 0.0, %v1246
      %1248 = vmatprep.mubr.f32.mxu0 %v337
      %1249 = vmatmul.mubr.f32.gmra.mxu0 %v336
      %v1250 = vpop.f32.mrf.mxu0
      %v1251 = vadd.f32 0.0, %v1250
      %v1252 = vpop.f32.mrf.mxu0
      %v1253 = vadd.f32 0.0, %v1252
      %1254 = vmatprep.mubr.f32.mxu0 %v340
      %1255 = vmatmul.mubr.f32.gmra.mxu0 %v339
      %v1256 = vpop.f32.mrf.mxu0
      %v1257 = vadd.f32 0.0, %v1256
      %v1258 = vpop.f32.mrf.mxu0
      %v1259 = vadd.f32 0.0, %v1258
      %1260 = vmatprep.mubr.f32.mxu0 %v343
      %1261 = vmatmul.mubr.f32.gmra.mxu0 %v342
      %v1262 = vpop.f32.mrf.mxu0
      %v1263 = vadd.f32 0.0, %v1262
      %v1264 = vpop.f32.mrf.mxu0
      %v1265 = vadd.f32 0.0, %v1264
      %1266 = vdwg.mxu0
      %1267 = vmatprep.subr.mxu0 0.0
      %1268 = vmatpush1.msra.mxu0 0.0
      %1269 = vmatprep.subr.mxu0 0.0
      %1270 = vmatpush1.msra.mxu0 0.0
      %1271 = vmatprep.subr.mxu0 0.0
      %1272 = vmatpush1.msra.mxu0 0.0
      %1273 = vmatprep.subr.mxu0 0.0
      %1274 = vmatpush1.msra.mxu0 0.0
      %1275 = vmatprep.subr.mxu0 0.0
      %1276 = vmatpush1.msra.mxu0 0.0
      %1277 = vmatprep.subr.mxu0 0.0
      %1278 = vmatpush1.msra.mxu0 0.0
      %1279 = vmatprep.subr.mxu0 0.0
      %1280 = vmatpush1.msra.mxu0 0.0
      %1281 = vmatprep.subr.mxu0 0.0
      %1282 = vmatpush1.msra.mxu0 0.0
      %1283 = vmatprep.subr.mxu0 %v1177
      %1284 = vmatpush1.msra.mxu0 %v1176
      %1285 = vmatprep.subr.mxu0 %v1175
      %1286 = vmatpush1.msra.mxu0 %v1174
      %1287 = vmatprep.subr.mxu0 %v1173
      %1288 = vmatpush1.msra.mxu0 %v1172
      %1289 = vmatprep.subr.mxu0 %v1171
      %1290 = vmatpush1.msra.mxu0 %v1170
      %1291 = vmatprep.subr.mxu0 %v1169
      %1292 = vmatpush1.msra.mxu0 %v1168
      %1293 = vmatprep.subr.mxu0 %v1167
      %1294 = vmatpush1.msra.mxu0 %v1166
      %1295 = vmatprep.subr.mxu0 %v1165
      %1296 = vmatpush1.msra.mxu0 %v1164
      %1297 = vmatprep.subr.mxu0 %v1163
      %1298 = vmatpush1.msra.mxu0 %v1162
      %1299 = vmatprep.subr.mxu0 0.0
      %1300 = vmatpush2.msra.mxu0 0.0
      %1301 = vmatprep.subr.mxu0 0.0
      %1302 = vmatpush2.msra.mxu0 0.0
      %1303 = vmatprep.subr.mxu0 0.0
      %1304 = vmatpush2.msra.mxu0 0.0
      %1305 = vmatprep.subr.mxu0 0.0
      %1306 = vmatpush2.msra.mxu0 0.0
      %1307 = vmatprep.subr.mxu0 0.0
      %1308 = vmatpush2.msra.mxu0 0.0
      %1309 = vmatprep.subr.mxu0 0.0
      %1310 = vmatpush2.msra.mxu0 0.0
      %1311 = vmatprep.subr.mxu0 0.0
      %1312 = vmatpush2.msra.mxu0 0.0
      %1313 = vmatprep.subr.mxu0 0.0
      %1314 = vmatpush2.msra.mxu0 0.0
      %1315 = vmatprep.subr.mxu0 0.0
      %1316 = vmatpush2.msra.mxu0 0.0
      %1317 = vmatprep.subr.mxu0 0.0
      %1318 = vmatpush2.msra.mxu0 0.0
      %1319 = vmatprep.subr.mxu0 0.0
      %1320 = vmatpush2.msra.mxu0 0.0
      %1321 = vmatprep.subr.mxu0 0.0
      %1322 = vmatpush2.msra.mxu0 0.0
      %1323 = vmatprep.subr.mxu0 0.0
      %1324 = vmatpush2.msra.mxu0 0.0
      %1325 = vmatprep.subr.mxu0 0.0
      %1326 = vmatpush2.msra.mxu0 0.0
      %1327 = vmatprep.subr.mxu0 0.0
      %1328 = vmatpush2.msra.mxu0 0.0
      %1329 = vmatprep.subr.mxu0 0.0
      %1330 = vmatpush2.msra.mxu0 0.0
      %1331 = vmatprep.mubr.f32.mxu0 0.0
      %1332 = vmatmul.mubr.f32.gmra.mxu0 %v387
      %v1333 = vpop.f32.mrf.mxu0
      %v1334 = vadd.f32 %v1245, %v1333
      %v1335 = vpop.f32.mrf.mxu0
      %v1336 = vadd.f32 %v1247, %v1335
      %1337 = vmatprep.mubr.f32.mxu0 0.0
      %1338 = vmatmul.mubr.f32.gmra.mxu0 %v390
      %v1339 = vpop.f32.mrf.mxu0
      %v1340 = vadd.f32 %v1251, %v1339
      %v1341 = vpop.f32.mrf.mxu0
      %v1342 = vadd.f32 %v1253, %v1341
      %1343 = vmatprep.mubr.f32.mxu0 0.0
      %1344 = vmatmul.mubr.f32.gmra.mxu0 %v393
      %v1345 = vpop.f32.mrf.mxu0
      %v1346 = vadd.f32 %v1257, %v1345
      %v1347 = vpop.f32.mrf.mxu0
      %v1348 = vadd.f32 %v1259, %v1347
      %1349 = vmatprep.mubr.f32.mxu0 0.0
      %1350 = vmatmul.mubr.f32.gmra.mxu0 %v396
      %v1351 = vpop.f32.mrf.mxu0
      %v1352 = vadd.f32 %v1263, %v1351
      %v1353 = vpop.f32.mrf.mxu0
      %v1354 = vadd.f32 %v1265, %v1353
      %1355 = vdwg.mxu0
      %v1356 = vadd.f32 %v1334, %v1336
      %1357 = vadd.xlane.f32.xlu0 %v1356
      %v1358 = vpop.xlane.xlu0 %1357
      %v1359 = vadd.f32 %v1340, %v1342
      %1360 = vadd.xlane.f32.xlu0 %v1359
      %v1361 = vpop.xlane.xlu0 %1360
      %v1362 = vadd.f32 %v1346, %v1348
      %1363 = vadd.xlane.f32.xlu0 %v1362
      %v1364 = vpop.xlane.xlu0 %1363
      %v1365 = vadd.f32 %v1352, %v1354
      %1366 = vadd.xlane.f32.xlu0 %v1365
      %v1367 = vpop.xlane.xlu0 %1366
      %v1368 = vmul.f32 %v1358, 0.000390625
      %v1369 = vmul.f32 %v1361, 0.000390625
      %v1370 = vmul.f32 %v1364, 0.000390625
      %v1371 = vmul.f32 %v1367, 0.000390625
      %v1372 = vadd.f32 %v1368, 1e-05
      %v1373 = vadd.f32 %v1369, 1e-05
      %v1374 = vadd.f32 %v1370, 1e-05
      %v1375 = vadd.f32 %v1371, 1e-05
      %v1376 = vrsqrt.pop %v1372
      %v1377 = vrsqrt.pop %v1373
      %v1378 = vrsqrt.pop %v1374
      %v1379 = vrsqrt.pop %v1375
      %1380 = vmatprep.subr.mxu0 0.0
      %1381 = vmatpush1.msra.mxu0 0.0
      %1382 = vmatprep.subr.mxu0 0.0
      %1383 = vmatpush1.msra.mxu0 0.0
      %1384 = vmatprep.subr.mxu0 0.0
      %1385 = vmatpush1.msra.mxu0 0.0
      %1386 = vmatprep.subr.mxu0 0.0
      %1387 = vmatpush1.msra.mxu0 0.0
      %1388 = vmatprep.subr.mxu0 0.0
      %1389 = vmatpush1.msra.mxu0 0.0
      %1390 = vmatprep.subr.mxu0 0.0
      %1391 = vmatpush1.msra.mxu0 0.0
      %1392 = vmatprep.subr.mxu0 0.0
      %1393 = vmatpush1.msra.mxu0 0.0
      %1394 = vmatprep.subr.mxu0 0.0
      %1395 = vmatpush1.msra.mxu0 0.0
      %1396 = vmatprep.subr.mxu0 0.0
      %1397 = vmatpush1.msra.mxu0 0.0
      %1398 = vmatprep.subr.mxu0 0.0
      %1399 = vmatpush1.msra.mxu0 0.0
      %1400 = vmatprep.subr.mxu0 0.0
      %1401 = vmatpush1.msra.mxu0 0.0
      %1402 = vmatprep.subr.mxu0 0.0
      %1403 = vmatpush1.msra.mxu0 0.0
      %1404 = vmatprep.subr.mxu0 %v1379
      %1405 = vmatpush1.msra.mxu0 %v1379
      %1406 = vmatprep.subr.mxu0 %v1378
      %1407 = vmatpush1.msra.mxu0 %v1378
      %1408 = vmatprep.subr.mxu0 %v1377
      %1409 = vmatpush1.msra.mxu0 %v1377
      %1410 = vmatprep.subr.mxu0 %v1376
      %1411 = vmatpush1.msra.mxu0 %v1376
      %1412 = vmatprep.subr.mxu0 0.0
      %1413 = vmatpush2.msra.mxu0 0.0
      %1414 = vmatprep.subr.mxu0 0.0
      %1415 = vmatpush2.msra.mxu0 0.0
      %1416 = vmatprep.subr.mxu0 0.0
      %1417 = vmatpush2.msra.mxu0 0.0
      %1418 = vmatprep.subr.mxu0 0.0
      %1419 = vmatpush2.msra.mxu0 0.0
      %1420 = vmatprep.subr.mxu0 0.0
      %1421 = vmatpush2.msra.mxu0 0.0
      %1422 = vmatprep.subr.mxu0 0.0
      %1423 = vmatpush2.msra.mxu0 0.0
      %1424 = vmatprep.subr.mxu0 0.0
      %1425 = vmatpush2.msra.mxu0 0.0
      %1426 = vmatprep.subr.mxu0 0.0
      %1427 = vmatpush2.msra.mxu0 0.0
      %1428 = vmatprep.subr.mxu0 0.0
      %1429 = vmatpush2.msra.mxu0 0.0
      %1430 = vmatprep.subr.mxu0 0.0
      %1431 = vmatpush2.msra.mxu0 0.0
      %1432 = vmatprep.subr.mxu0 0.0
      %1433 = vmatpush2.msra.mxu0 0.0
      %1434 = vmatprep.subr.mxu0 0.0
      %1435 = vmatpush2.msra.mxu0 0.0
      %1436 = vmatprep.subr.mxu0 0.0
      %1437 = vmatpush2.msra.mxu0 0.0
      %1438 = vmatprep.subr.mxu0 0.0
      %1439 = vmatpush2.msra.mxu0 0.0
      %1440 = vmatprep.subr.mxu0 0.0
      %1441 = vmatpush2.msra.mxu0 0.0
      %1442 = vmatprep.subr.mxu0 0.0
      %1443 = vmatpush2.msra.mxu0 0.0
      %1444 = vmatprep.mubr.f32.mxu0 0.0
      %1445 = vmatmul.mubr.f32.gmra.mxu0 %v594
      %v1446 = vpop.f32.mrf.mxu0
      %v1447 = vadd.f32 0.0, %v1446
      %v1448 = vpop.f32.mrf.mxu0
      %v1449 = vadd.f32 0.0, %v1448
      %1450 = vmatprep.mubr.f32.mxu0 0.0
      %1451 = vmatmul.mubr.f32.gmra.mxu0 %v597
      %v1452 = vpop.f32.mrf.mxu0
      %v1453 = vadd.f32 0.0, %v1452
      %v1454 = vpop.f32.mrf.mxu0
      %v1455 = vadd.f32 0.0, %v1454
      %1456 = vmatprep.mubr.f32.mxu0 0.0
      %1457 = vmatmul.mubr.f32.gmra.mxu0 %v600
      %v1458 = vpop.f32.mrf.mxu0
      %v1459 = vadd.f32 0.0, %v1458
      %v1460 = vpop.f32.mrf.mxu0
      %v1461 = vadd.f32 0.0, %v1460
      %1462 = vmatprep.mubr.f32.mxu0 0.0
      %1463 = vmatmul.mubr.f32.gmra.mxu0 %v603
      %v1464 = vpop.f32.mrf.mxu0
      %v1465 = vadd.f32 0.0, %v1464
      %v1466 = vpop.f32.mrf.mxu0
      %v1467 = vadd.f32 0.0, %v1466
      %1468 = vmatprep.mubr.f32.mxu0 0.0
      %1469 = vmatmul.mubr.f32.gmra.mxu0 %v606
      %v1470 = vpop.f32.mrf.mxu0
      %v1471 = vadd.f32 0.0, %v1470
      %v1472 = vpop.f32.mrf.mxu0
      %v1473 = vadd.f32 0.0, %v1472
      %1474 = vmatprep.mubr.f32.mxu0 0.0
      %1475 = vmatmul.mubr.f32.gmra.mxu0 %v609
      %v1476 = vpop.f32.mrf.mxu0
      %v1477 = vadd.f32 0.0, %v1476
      %v1478 = vpop.f32.mrf.mxu0
      %v1479 = vadd.f32 0.0, %v1478
      %1480 = vmatprep.mubr.f32.mxu0 0.0
      %1481 = vmatmul.mubr.f32.gmra.mxu0 %v612
      %v1482 = vpop.f32.mrf.mxu0
      %v1483 = vadd.f32 0.0, %v1482
      %v1484 = vpop.f32.mrf.mxu0
      %v1485 = vadd.f32 0.0, %v1484
      %1486 = vmatprep.mubr.f32.mxu0 0.0
      %1487 = vmatmul.mubr.f32.gmra.mxu0 %v615
      %v1488 = vpop.f32.mrf.mxu0
      %v1489 = vadd.f32 0.0, %v1488
      %v1490 = vpop.f32.mrf.mxu0
      %v1491 = vadd.f32 0.0, %v1490
      %1492 = vmatprep.mubr.f32.mxu0 0.0
      %1493 = vmatmul.mubr.f32.gmra.mxu0 %v618
      %v1494 = vpop.f32.mrf.mxu0
      %v1495 = vadd.f32 0.0, %v1494
      %v1496 = vpop.f32.mrf.mxu0
      %v1497 = vadd.f32 0.0, %v1496
      %1498 = vmatprep.mubr.f32.mxu0 0.0
      %1499 = vmatmul.mubr.f32.gmra.mxu0 %v621
      %v1500 = vpop.f32.mrf.mxu0
      %v1501 = vadd.f32 0.0, %v1500
      %v1502 = vpop.f32.mrf.mxu0
      %v1503 = vadd.f32 0.0, %v1502
      %1504 = vmatprep.mubr.f32.mxu0 0.0
      %1505 = vmatmul.mubr.f32.gmra.mxu0 %v624
      %v1506 = vpop.f32.mrf.mxu0
      %v1507 = vadd.f32 0.0, %v1506
      %v1508 = vpop.f32.mrf.mxu0
      %v1509 = vadd.f32 0.0, %v1508
      %1510 = vmatprep.mubr.f32.mxu0 0.0
      %1511 = vmatmul.mubr.f32.gmra.mxu0 %v627
      %v1512 = vpop.f32.mrf.mxu0
      %v1513 = vadd.f32 0.0, %v1512
      %v1514 = vpop.f32.mrf.mxu0
      %v1515 = vadd.f32 0.0, %v1514
      %1516 = vmatprep.mubr.f32.mxu0 0.0
      %1517 = vmatmul.mubr.f32.gmra.mxu0 %v630
      %v1518 = vpop.f32.mrf.mxu0
      %v1519 = vadd.f32 0.0, %v1518
      %v1520 = vpop.f32.mrf.mxu0
      %v1521 = vadd.f32 0.0, %v1520
      %1522 = vmatprep.mubr.f32.mxu0 0.0
      %1523 = vmatmul.mubr.f32.gmra.mxu0 %v633
      %v1524 = vpop.f32.mrf.mxu0
      %v1525 = vadd.f32 0.0, %v1524
      %v1526 = vpop.f32.mrf.mxu0
      %v1527 = vadd.f32 0.0, %v1526
      %1528 = vmatprep.mubr.f32.mxu0 0.0
      %1529 = vmatmul.mubr.f32.gmra.mxu0 %v636
      %v1530 = vpop.f32.mrf.mxu0
      %v1531 = vadd.f32 0.0, %v1530
      %v1532 = vpop.f32.mrf.mxu0
      %v1533 = vadd.f32 0.0, %v1532
      %1534 = vmatprep.mubr.f32.mxu0 0.0
      %1535 = vmatmul.mubr.f32.gmra.mxu0 %v639
      %v1536 = vpop.f32.mrf.mxu0
      %v1537 = vadd.f32 0.0, %v1536
      %v1538 = vpop.f32.mrf.mxu0
      %v1539 = vadd.f32 0.0, %v1538
      %1540 = vmatprep.mubr.f32.mxu0 0.0
      %1541 = vmatmul.mubr.f32.gmra.mxu0 %v642
      %v1542 = vpop.f32.mrf.mxu0
      %v1543 = vadd.f32 0.0, %v1542
      %v1544 = vpop.f32.mrf.mxu0
      %v1545 = vadd.f32 0.0, %v1544
      %1546 = vmatprep.mubr.f32.mxu0 0.0
      %1547 = vmatmul.mubr.f32.gmra.mxu0 %v645
      %v1548 = vpop.f32.mrf.mxu0
      %v1549 = vadd.f32 0.0, %v1548
      %v1550 = vpop.f32.mrf.mxu0
      %v1551 = vadd.f32 0.0, %v1550
      %1552 = vmatprep.mubr.f32.mxu0 0.0
      %1553 = vmatmul.mubr.f32.gmra.mxu0 %v648
      %v1554 = vpop.f32.mrf.mxu0
      %v1555 = vadd.f32 0.0, %v1554
      %v1556 = vpop.f32.mrf.mxu0
      %v1557 = vadd.f32 0.0, %v1556
      %1558 = vmatprep.mubr.f32.mxu0 0.0
      %1559 = vmatmul.mubr.f32.gmra.mxu0 %v651
      %v1560 = vpop.f32.mrf.mxu0
      %v1561 = vadd.f32 0.0, %v1560
      %v1562 = vpop.f32.mrf.mxu0
      %v1563 = vadd.f32 0.0, %v1562
      %1564 = vmatprep.mubr.f32.mxu0 0.0
      %1565 = vmatmul.mubr.f32.gmra.mxu0 %v654
      %v1566 = vpop.f32.mrf.mxu0
      %v1567 = vadd.f32 0.0, %v1566
      %v1568 = vpop.f32.mrf.mxu0
      %v1569 = vadd.f32 0.0, %v1568
      %1570 = vmatprep.mubr.f32.mxu0 0.0
      %1571 = vmatmul.mubr.f32.gmra.mxu0 %v657
      %v1572 = vpop.f32.mrf.mxu0
      %v1573 = vadd.f32 0.0, %v1572
      %v1574 = vpop.f32.mrf.mxu0
      %v1575 = vadd.f32 0.0, %v1574
      %1576 = vmatprep.mubr.f32.mxu0 0.0
      %1577 = vmatmul.mubr.f32.gmra.mxu0 %v660
      %v1578 = vpop.f32.mrf.mxu0
      %v1579 = vadd.f32 0.0, %v1578
      %v1580 = vpop.f32.mrf.mxu0
      %v1581 = vadd.f32 0.0, %v1580
      %1582 = vmatprep.mubr.f32.mxu0 0.0
      %1583 = vmatmul.mubr.f32.gmra.mxu0 %v663
      %v1584 = vpop.f32.mrf.mxu0
      %v1585 = vadd.f32 0.0, %v1584
      %v1586 = vpop.f32.mrf.mxu0
      %v1587 = vadd.f32 0.0, %v1586
      %1588 = vmatprep.mubr.f32.mxu0 0.0
      %1589 = vmatmul.mubr.f32.gmra.mxu0 %v666
      %v1590 = vpop.f32.mrf.mxu0
      %v1591 = vadd.f32 0.0, %v1590
      %v1592 = vpop.f32.mrf.mxu0
      %v1593 = vadd.f32 0.0, %v1592
      %1594 = vmatprep.mubr.f32.mxu0 0.0
      %1595 = vmatmul.mubr.f32.gmra.mxu0 %v669
      %v1596 = vpop.f32.mrf.mxu0
      %v1597 = vadd.f32 0.0, %v1596
      %v1598 = vpop.f32.mrf.mxu0
      %v1599 = vadd.f32 0.0, %v1598
      %1600 = vmatprep.mubr.f32.mxu0 0.0
      %1601 = vmatmul.mubr.f32.gmra.mxu0 %v672
      %v1602 = vpop.f32.mrf.mxu0
      %v1603 = vadd.f32 0.0, %v1602
      %v1604 = vpop.f32.mrf.mxu0
      %v1605 = vadd.f32 0.0, %v1604
      %1606 = vmatprep.mubr.f32.mxu0 0.0
      %1607 = vmatmul.mubr.f32.gmra.mxu0 %v675
      %v1608 = vpop.f32.mrf.mxu0
      %v1609 = vadd.f32 0.0, %v1608
      %v1610 = vpop.f32.mrf.mxu0
      %v1611 = vadd.f32 0.0, %v1610
      %1612 = vmatprep.mubr.f32.mxu0 0.0
      %1613 = vmatmul.mubr.f32.gmra.mxu0 %v678
      %v1614 = vpop.f32.mrf.mxu0
      %v1615 = vadd.f32 0.0, %v1614
      %v1616 = vpop.f32.mrf.mxu0
      %v1617 = vadd.f32 0.0, %v1616
      %1618 = vmatprep.mubr.f32.mxu0 0.0
      %1619 = vmatmul.mubr.f32.gmra.mxu0 %v681
      %v1620 = vpop.f32.mrf.mxu0
      %v1621 = vadd.f32 0.0, %v1620
      %v1622 = vpop.f32.mrf.mxu0
      %v1623 = vadd.f32 0.0, %v1622
      %1624 = vmatprep.mubr.f32.mxu0 0.0
      %1625 = vmatmul.mubr.f32.gmra.mxu0 %v684
      %v1626 = vpop.f32.mrf.mxu0
      %v1627 = vadd.f32 0.0, %v1626
      %v1628 = vpop.f32.mrf.mxu0
      %v1629 = vadd.f32 0.0, %v1628
      %1630 = vmatprep.mubr.f32.mxu0 0.0
      %1631 = vmatmul.mubr.f32.gmra.mxu0 %v687
      %v1632 = vpop.f32.mrf.mxu0
      %v1633 = vadd.f32 0.0, %v1632
      %v1634 = vpop.f32.mrf.mxu0
      %v1635 = vadd.f32 0.0, %v1634
      %1636 = vmatprep.mubr.f32.mxu0 0.0
      %1637 = vmatmul.mubr.f32.gmra.mxu0 %v690
      %v1638 = vpop.f32.mrf.mxu0
      %v1639 = vadd.f32 0.0, %v1638
      %v1640 = vpop.f32.mrf.mxu0
      %v1641 = vadd.f32 0.0, %v1640
      %1642 = vmatprep.mubr.f32.mxu0 0.0
      %1643 = vmatmul.mubr.f32.gmra.mxu0 %v693
      %v1644 = vpop.f32.mrf.mxu0
      %v1645 = vadd.f32 0.0, %v1644
      %v1646 = vpop.f32.mrf.mxu0
      %v1647 = vadd.f32 0.0, %v1646
      %1648 = vmatprep.mubr.f32.mxu0 0.0
      %1649 = vmatmul.mubr.f32.gmra.mxu0 %v696
      %v1650 = vpop.f32.mrf.mxu0
      %v1651 = vadd.f32 0.0, %v1650
      %v1652 = vpop.f32.mrf.mxu0
      %v1653 = vadd.f32 0.0, %v1652
      %1654 = vmatprep.mubr.f32.mxu0 0.0
      %1655 = vmatmul.mubr.f32.gmra.mxu0 %v699
      %v1656 = vpop.f32.mrf.mxu0
      %v1657 = vadd.f32 0.0, %v1656
      %v1658 = vpop.f32.mrf.mxu0
      %v1659 = vadd.f32 0.0, %v1658
      %1660 = vmatprep.mubr.f32.mxu0 0.0
      %1661 = vmatmul.mubr.f32.gmra.mxu0 %v702
      %v1662 = vpop.f32.mrf.mxu0
      %v1663 = vadd.f32 0.0, %v1662
      %v1664 = vpop.f32.mrf.mxu0
      %v1665 = vadd.f32 0.0, %v1664
      %1666 = vmatprep.mubr.f32.mxu0 0.0
      %1667 = vmatmul.mubr.f32.gmra.mxu0 %v705
      %v1668 = vpop.f32.mrf.mxu0
      %v1669 = vadd.f32 0.0, %v1668
      %v1670 = vpop.f32.mrf.mxu0
      %v1671 = vadd.f32 0.0, %v1670
      %1672 = vmatprep.mubr.f32.mxu0 0.0
      %1673 = vmatmul.mubr.f32.gmra.mxu0 %v708
      %v1674 = vpop.f32.mrf.mxu0
      %v1675 = vadd.f32 0.0, %v1674
      %v1676 = vpop.f32.mrf.mxu0
      %v1677 = vadd.f32 0.0, %v1676
      %1678 = vmatprep.mubr.f32.mxu0 0.0
      %1679 = vmatmul.mubr.f32.gmra.mxu0 %v711
      %v1680 = vpop.f32.mrf.mxu0
      %v1681 = vadd.f32 0.0, %v1680
      %v1682 = vpop.f32.mrf.mxu0
      %v1683 = vadd.f32 0.0, %v1682
      %1684 = vdwg.mxu0
      %v1685 = vmul.f32 %v1018, %v1447
      %v1686 = vmul.f32 %v1019, %v1449
      %v1687 = vmul.f32 %v1020, %v1453
      %v1688 = vmul.f32 %v1021, %v1455
      %v1689 = vmul.f32 %v1022, %v1459
      %v1690 = vmul.f32 %v1023, %v1461
      %v1691 = vmul.f32 %v1024, %v1465
      %v1692 = vmul.f32 %v1025, %v1467
      %v1693 = vmul.f32 %v1026, %v1471
      %v1694 = vmul.f32 %v1027, %v1473
      %v1695 = vmul.f32 %v1028, %v1477
      %v1696 = vmul.f32 %v1029, %v1479
      %v1697 = vmul.f32 %v1030, %v1483
      %v1698 = vmul.f32 %v1031, %v1485
      %v1699 = vmul.f32 %v1032, %v1489
      %v1700 = vmul.f32 %v1033, %v1491
      %v1701 = vmul.f32 %v1034, %v1495
      %v1702 = vmul.f32 %v1035, %v1497
      %v1703 = vmul.f32 %v1036, %v1501
      %v1704 = vmul.f32 %v1037, %v1503
      %v1705 = vmul.f32 %v1038, %v1507
      %v1706 = vmul.f32 %v1039, %v1509
      %v1707 = vmul.f32 %v1040, %v1513
      %v1708 = vmul.f32 %v1041, %v1515
      %v1709 = vmul.f32 %v1042, %v1519
      %v1710 = vmul.f32 %v1043, %v1521
      %v1711 = vmul.f32 %v1044, %v1525
      %v1712 = vmul.f32 %v1045, %v1527
      %v1713 = vmul.f32 %v1046, %v1531
      %v1714 = vmul.f32 %v1047, %v1533
      %v1715 = vmul.f32 %v1048, %v1537
      %v1716 = vmul.f32 %v1049, %v1539
      %v1717 = vmul.f32 %v1050, %v1543
      %v1718 = vmul.f32 %v1051, %v1545
      %v1719 = vmul.f32 %v1052, %v1549
      %v1720 = vmul.f32 %v1053, %v1551
      %v1721 = vmul.f32 %v1054, %v1555
      %v1722 = vmul.f32 %v1055, %v1557
      %v1723 = vmul.f32 %v1056, %v1561
      %v1724 = vmul.f32 %v1057, %v1563
      %v1725 = vmul.f32 %v1058, %v1567
      %v1726 = vmul.f32 %v1059, %v1569
      %v1727 = vmul.f32 %v1060, %v1573
      %v1728 = vmul.f32 %v1061, %v1575
      %v1729 = vmul.f32 %v1062, %v1579
      %v1730 = vmul.f32 %v1063, %v1581
      %v1731 = vmul.f32 %v1064, %v1585
      %v1732 = vmul.f32 %v1065, %v1587
      %v1733 = vmul.f32 %v1066, %v1591
      %v1734 = vmul.f32 %v1067, %v1593
      %v1735 = vmul.f32 %v1068, %v1597
      %v1736 = vmul.f32 %v1069, %v1599
      %v1737 = vmul.f32 %v1070, %v1603
      %v1738 = vmul.f32 %v1071, %v1605
      %v1739 = vmul.f32 %v1072, %v1609
      %v1740 = vmul.f32 %v1073, %v1611
      %v1741 = vmul.f32 %v1074, %v1615
      %v1742 = vmul.f32 %v1075, %v1617
      %v1743 = vmul.f32 %v1076, %v1621
      %v1744 = vmul.f32 %v1077, %v1623
      %v1745 = vmul.f32 %v1078, %v1627
      %v1746 = vmul.f32 %v1079, %v1629
      %v1747 = vmul.f32 %v1080, %v1633
      %v1748 = vmul.f32 %v1081, %v1635
      %v1749 = vmul.f32 %v1082, %v1639
      %v1750 = vmul.f32 %v1083, %v1641
      %v1751 = vmul.f32 %v1084, %v1645
      %v1752 = vmul.f32 %v1085, %v1647
      %v1753 = vmul.f32 %v1086, %v1651
      %v1754 = vmul.f32 %v1087, %v1653
      %v1755 = vmul.f32 %v1088, %v1657
      %v1756 = vmul.f32 %v1089, %v1659
      %v1757 = vmul.f32 %v1090, %v1663
      %v1758 = vmul.f32 %v1091, %v1665
      %v1759 = vmul.f32 %v1092, %v1669
      %v1760 = vmul.f32 %v1093, %v1671
      %v1761 = vmul.f32 %v1094, %v1675
      %v1762 = vmul.f32 %v1095, %v1677
      %v1763 = vmul.f32 %v1096, %v1681
      %v1764 = vmul.f32 %v1097, %v1683
      %v1765 = vld [vmem:[%s1] sm:$0xff]
      %v1766 = vld [vmem:[%s1 + $0x8] sm:$0xff]
      %v1767 = vld [vmem:[%s1 + $0x10] sm:$0xff]
      %v1768 = vld [vmem:[%s1 + $0x18] sm:$0xff]
      %v1769 = vld [vmem:[%s1 + $0x20] sm:$0xff]
      %v1770 = vld [vmem:[%s1 + $0x28] sm:$0xff]
      %v1771 = vld [vmem:[%s1 + $0x30] sm:$0xff]
      %v1772 = vld [vmem:[%s1 + $0x38] sm:$0xff]
      %v1773 = vld [vmem:[%s1 + $0x40] sm:$0xff]
      %v1774 = vld [vmem:[%s1 + $0x48] sm:$0xff]
      %v1775 = vld [vmem:[%s1 + $0x50] sm:$0xff]
      %v1776 = vld [vmem:[%s1 + $0x58] sm:$0xff]
      %v1777 = vld [vmem:[%s1 + $0x60] sm:$0xff]
      %v1778 = vld [vmem:[%s1 + $0x68] sm:$0xff]
      %v1779 = vld [vmem:[%s1 + $0x70] sm:$0xff]
      %v1780 = vld [vmem:[%s1 + $0x78] sm:$0xff]
      %v1781 = vld [vmem:[%s1 + $0x80] sm:$0xff]
      %v1782 = vld [vmem:[%s1 + $0x88] sm:$0xff]
      %v1783 = vld [vmem:[%s1 + $0x90] sm:$0xff]
      %v1784 = vld [vmem:[%s1 + $0x98] sm:$0xff]
      %v1785 = vld [vmem:[%s1 + $0xa0] sm:$0xff]
      %v1786 = vld [vmem:[%s1 + $0xa8] sm:$0xff]
      %v1787 = vld [vmem:[%s1 + $0xb0] sm:$0xff]
      %v1788 = vld [vmem:[%s1 + $0xb8] sm:$0xff]
      %v1789 = vld [vmem:[%s1 + $0xc0] sm:$0xff]
      %v1790 = vld [vmem:[%s1 + $0xc8] sm:$0xff]
      %v1791 = vld [vmem:[%s1 + $0xd0] sm:$0xff]
      %v1792 = vld [vmem:[%s1 + $0xd8] sm:$0xff]
      %v1793 = vld [vmem:[%s1 + $0xe0] sm:$0xff]
      %v1794 = vld [vmem:[%s1 + $0xe8] sm:$0xff]
      %v1795 = vld [vmem:[%s1 + $0xf0] sm:$0xff]
      %v1796 = vld [vmem:[%s1 + $0xf8] sm:$0xff]
      %v1797 = vld [vmem:[%s1 + $0x100] sm:$0xff]
      %v1798 = vld [vmem:[%s1 + $0x108] sm:$0xff]
      %v1799 = vld [vmem:[%s1 + $0x110] sm:$0xff]
      %v1800 = vld [vmem:[%s1 + $0x118] sm:$0xff]
      %v1801 = vld [vmem:[%s1 + $0x120] sm:$0xff]
      %v1802 = vld [vmem:[%s1 + $0x128] sm:$0xff]
      %v1803 = vld [vmem:[%s1 + $0x130] sm:$0xff]
      %v1804 = vld [vmem:[%s1 + $0x138] sm:$0xff]
      %1806 = vset.pattern.permute.xlu0 0
      %1807 = vperm.xlu0 %1806, %v1765
      %v1808 = vpop.permute.xlu0 %1807
      %1811 = vset.pattern.permute.xlu0 0
      %1812 = vperm.xlu0 %1811, %v1766
      %v1813 = vpop.permute.xlu0 %1812
      %1816 = vset.pattern.permute.xlu0 0
      %1817 = vperm.xlu0 %1816, %v1767
      %v1818 = vpop.permute.xlu0 %1817
      %1821 = vset.pattern.permute.xlu0 0
      %1822 = vperm.xlu0 %1821, %v1768
      %v1823 = vpop.permute.xlu0 %1822
      %1826 = vset.pattern.permute.xlu0 0
      %1827 = vperm.xlu0 %1826, %v1769
      %v1828 = vpop.permute.xlu0 %1827
      %1831 = vset.pattern.permute.xlu0 0
      %1832 = vperm.xlu0 %1831, %v1770
      %v1833 = vpop.permute.xlu0 %1832
      %1836 = vset.pattern.permute.xlu0 0
      %1837 = vperm.xlu0 %1836, %v1771
      %v1838 = vpop.permute.xlu0 %1837
      %1841 = vset.pattern.permute.xlu0 0
      %1842 = vperm.xlu0 %1841, %v1772
      %v1843 = vpop.permute.xlu0 %1842
      %1846 = vset.pattern.permute.xlu0 0
      %1847 = vperm.xlu0 %1846, %v1773
      %v1848 = vpop.permute.xlu0 %1847
      %1851 = vset.pattern.permute.xlu0 0
      %1852 = vperm.xlu0 %1851, %v1774
      %v1853 = vpop.permute.xlu0 %1852
      %1856 = vset.pattern.permute.xlu0 0
      %1857 = vperm.xlu0 %1856, %v1775
      %v1858 = vpop.permute.xlu0 %1857
      %1861 = vset.pattern.permute.xlu0 0
      %1862 = vperm.xlu0 %1861, %v1776
      %v1863 = vpop.permute.xlu0 %1862
      %1866 = vset.pattern.permute.xlu0 0
      %1867 = vperm.xlu0 %1866, %v1777
      %v1868 = vpop.permute.xlu0 %1867
      %1871 = vset.pattern.permute.xlu0 0
      %1872 = vperm.xlu0 %1871, %v1778
      %v1873 = vpop.permute.xlu0 %1872
      %1876 = vset.pattern.permute.xlu0 0
      %1877 = vperm.xlu0 %1876, %v1779
      %v1878 = vpop.permute.xlu0 %1877
      %1881 = vset.pattern.permute.xlu0 0
      %1882 = vperm.xlu0 %1881, %v1780
      %v1883 = vpop.permute.xlu0 %1882
      %1886 = vset.pattern.permute.xlu0 0
      %1887 = vperm.xlu0 %1886, %v1781
      %v1888 = vpop.permute.xlu0 %1887
      %1891 = vset.pattern.permute.xlu0 0
      %1892 = vperm.xlu0 %1891, %v1782
      %v1893 = vpop.permute.xlu0 %1892
      %1896 = vset.pattern.permute.xlu0 0
      %1897 = vperm.xlu0 %1896, %v1783
      %v1898 = vpop.permute.xlu0 %1897
      %1901 = vset.pattern.permute.xlu0 0
      %1902 = vperm.xlu0 %1901, %v1784
      %v1903 = vpop.permute.xlu0 %1902
      %1906 = vset.pattern.permute.xlu0 0
      %1907 = vperm.xlu0 %1906, %v1785
      %v1908 = vpop.permute.xlu0 %1907
      %1911 = vset.pattern.permute.xlu0 0
      %1912 = vperm.xlu0 %1911, %v1786
      %v1913 = vpop.permute.xlu0 %1912
      %1916 = vset.pattern.permute.xlu0 0
      %1917 = vperm.xlu0 %1916, %v1787
      %v1918 = vpop.permute.xlu0 %1917
      %1921 = vset.pattern.permute.xlu0 0
      %1922 = vperm.xlu0 %1921, %v1788
      %v1923 = vpop.permute.xlu0 %1922
      %1926 = vset.pattern.permute.xlu0 0
      %1927 = vperm.xlu0 %1926, %v1789
      %v1928 = vpop.permute.xlu0 %1927
      %1931 = vset.pattern.permute.xlu0 0
      %1932 = vperm.xlu0 %1931, %v1790
      %v1933 = vpop.permute.xlu0 %1932
      %1936 = vset.pattern.permute.xlu0 0
      %1937 = vperm.xlu0 %1936, %v1791
      %v1938 = vpop.permute.xlu0 %1937
      %1941 = vset.pattern.permute.xlu0 0
      %1942 = vperm.xlu0 %1941, %v1792
      %v1943 = vpop.permute.xlu0 %1942
      %1946 = vset.pattern.permute.xlu0 0
      %1947 = vperm.xlu0 %1946, %v1793
      %v1948 = vpop.permute.xlu0 %1947
      %1951 = vset.pattern.permute.xlu0 0
      %1952 = vperm.xlu0 %1951, %v1794
      %v1953 = vpop.permute.xlu0 %1952
      %1956 = vset.pattern.permute.xlu0 0
      %1957 = vperm.xlu0 %1956, %v1795
      %v1958 = vpop.permute.xlu0 %1957
      %1961 = vset.pattern.permute.xlu0 0
      %1962 = vperm.xlu0 %1961, %v1796
      %v1963 = vpop.permute.xlu0 %1962
      %1966 = vset.pattern.permute.xlu0 0
      %1967 = vperm.xlu0 %1966, %v1797
      %v1968 = vpop.permute.xlu0 %1967
      %1971 = vset.pattern.permute.xlu0 0
      %1972 = vperm.xlu0 %1971, %v1798
      %v1973 = vpop.permute.xlu0 %1972
      %1976 = vset.pattern.permute.xlu0 0
      %1977 = vperm.xlu0 %1976, %v1799
      %v1978 = vpop.permute.xlu0 %1977
      %1981 = vset.pattern.permute.xlu0 0
      %1982 = vperm.xlu0 %1981, %v1800
      %v1983 = vpop.permute.xlu0 %1982
      %1986 = vset.pattern.permute.xlu0 0
      %1987 = vperm.xlu0 %1986, %v1801
      %v1988 = vpop.permute.xlu0 %1987
      %1991 = vset.pattern.permute.xlu0 0
      %1992 = vperm.xlu0 %1991, %v1802
      %v1993 = vpop.permute.xlu0 %1992
      %1996 = vset.pattern.permute.xlu0 0
      %1997 = vperm.xlu0 %1996, %v1803
      %v1998 = vpop.permute.xlu0 %1997
      %2001 = vset.pattern.permute.xlu0 0
      %2002 = vperm.xlu0 %2001, %v1804
      %v2003 = vpop.permute.xlu0 %2002
      %v2005 = vmul.f32 %v1685, %v1808
      %v2006 = vmul.f32 %v1686, %v1808
      %v2007 = vmul.f32 %v1687, %v1813
      %v2008 = vmul.f32 %v1688, %v1813
      %v2009 = vmul.f32 %v1689, %v1818
      %v2010 = vmul.f32 %v1690, %v1818
      %v2011 = vmul.f32 %v1691, %v1823
      %v2012 = vmul.f32 %v1692, %v1823
      %v2013 = vmul.f32 %v1693, %v1828
      %v2014 = vmul.f32 %v1694, %v1828
      %v2015 = vmul.f32 %v1695, %v1833
      %v2016 = vmul.f32 %v1696, %v1833
      %v2017 = vmul.f32 %v1697, %v1838
      %v2018 = vmul.f32 %v1698, %v1838
      %v2019 = vmul.f32 %v1699, %v1843
      %v2020 = vmul.f32 %v1700, %v1843
      %v2021 = vmul.f32 %v1701, %v1848
      %v2022 = vmul.f32 %v1702, %v1848
      %v2023 = vmul.f32 %v1703, %v1853
      %v2024 = vmul.f32 %v1704, %v1853
      %v2025 = vmul.f32 %v1705, %v1858
      %v2026 = vmul.f32 %v1706, %v1858
      %v2027 = vmul.f32 %v1707, %v1863
      %v2028 = vmul.f32 %v1708, %v1863
      %v2029 = vmul.f32 %v1709, %v1868
      %v2030 = vmul.f32 %v1710, %v1868
      %v2031 = vmul.f32 %v1711, %v1873
      %v2032 = vmul.f32 %v1712, %v1873
      %v2033 = vmul.f32 %v1713, %v1878
      %v2034 = vmul.f32 %v1714, %v1878
      %v2035 = vmul.f32 %v1715, %v1883
      %v2036 = vmul.f32 %v1716, %v1883
      %v2037 = vmul.f32 %v1717, %v1888
      %v2038 = vmul.f32 %v1718, %v1888
      %v2039 = vmul.f32 %v1719, %v1893
      %v2040 = vmul.f32 %v1720, %v1893
      %v2041 = vmul.f32 %v1721, %v1898
      %v2042 = vmul.f32 %v1722, %v1898
      %v2043 = vmul.f32 %v1723, %v1903
      %v2044 = vmul.f32 %v1724, %v1903
      %v2045 = vmul.f32 %v1725, %v1908
      %v2046 = vmul.f32 %v1726, %v1908
      %v2047 = vmul.f32 %v1727, %v1913
      %v2048 = vmul.f32 %v1728, %v1913
      %v2049 = vmul.f32 %v1729, %v1918
      %v2050 = vmul.f32 %v1730, %v1918
      %v2051 = vmul.f32 %v1731, %v1923
      %v2052 = vmul.f32 %v1732, %v1923
      %v2053 = vmul.f32 %v1733, %v1928
      %v2054 = vmul.f32 %v1734, %v1928
      %v2055 = vmul.f32 %v1735, %v1933
      %v2056 = vmul.f32 %v1736, %v1933
      %v2057 = vmul.f32 %v1737, %v1938
      %v2058 = vmul.f32 %v1738, %v1938
      %v2059 = vmul.f32 %v1739, %v1943
      %v2060 = vmul.f32 %v1740, %v1943
      %v2061 = vmul.f32 %v1741, %v1948
      %v2062 = vmul.f32 %v1742, %v1948
      %v2063 = vmul.f32 %v1743, %v1953
      %v2064 = vmul.f32 %v1744, %v1953
      %v2065 = vmul.f32 %v1745, %v1958
      %v2066 = vmul.f32 %v1746, %v1958
      %v2067 = vmul.f32 %v1747, %v1963
      %v2068 = vmul.f32 %v1748, %v1963
      %v2069 = vmul.f32 %v1749, %v1968
      %v2070 = vmul.f32 %v1750, %v1968
      %v2071 = vmul.f32 %v1751, %v1973
      %v2072 = vmul.f32 %v1752, %v1973
      %v2073 = vmul.f32 %v1753, %v1978
      %v2074 = vmul.f32 %v1754, %v1978
      %v2075 = vmul.f32 %v1755, %v1983
      %v2076 = vmul.f32 %v1756, %v1983
      %v2077 = vmul.f32 %v1757, %v1988
      %v2078 = vmul.f32 %v1758, %v1988
      %v2079 = vmul.f32 %v1759, %v1993
      %v2080 = vmul.f32 %v1760, %v1993
      %v2081 = vmul.f32 %v1761, %v1998
      %v2082 = vmul.f32 %v1762, %v1998
      %v2083 = vmul.f32 %v1763, %v2003
      %v2084 = vmul.f32 %v1764, %v2003
      %2085 = vset.pattern.permute.xlu0 1
      %2086 = vperm.xlu0 %2085, %v1765
      %v2087 = vpop.permute.xlu0 %2086
      %2089 = vset.pattern.permute.xlu0 1
      %2090 = vperm.xlu0 %2089, %v1766
      %v2091 = vpop.permute.xlu0 %2090
      %2093 = vset.pattern.permute.xlu0 1
      %2094 = vperm.xlu0 %2093, %v1767
      %v2095 = vpop.permute.xlu0 %2094
      %2097 = vset.pattern.permute.xlu0 1
      %2098 = vperm.xlu0 %2097, %v1768
      %v2099 = vpop.permute.xlu0 %2098
      %2101 = vset.pattern.permute.xlu0 1
      %2102 = vperm.xlu0 %2101, %v1769
      %v2103 = vpop.permute.xlu0 %2102
      %2105 = vset.pattern.permute.xlu0 1
      %2106 = vperm.xlu0 %2105, %v1770
      %v2107 = vpop.permute.xlu0 %2106
      %2109 = vset.pattern.permute.xlu0 1
      %2110 = vperm.xlu0 %2109, %v1771
      %v2111 = vpop.permute.xlu0 %2110
      %2113 = vset.pattern.permute.xlu0 1
      %2114 = vperm.xlu0 %2113, %v1772
      %v2115 = vpop.permute.xlu0 %2114
      %2117 = vset.pattern.permute.xlu0 1
      %2118 = vperm.xlu0 %2117, %v1773
      %v2119 = vpop.permute.xlu0 %2118
      %2121 = vset.pattern.permute.xlu0 1
      %2122 = vperm.xlu0 %2121, %v1774
      %v2123 = vpop.permute.xlu0 %2122
      %2125 = vset.pattern.permute.xlu0 1
      %2126 = vperm.xlu0 %2125, %v1775
      %v2127 = vpop.permute.xlu0 %2126
      %2129 = vset.pattern.permute.xlu0 1
      %2130 = vperm.xlu0 %2129, %v1776
      %v2131 = vpop.permute.xlu0 %2130
      %2133 = vset.pattern.permute.xlu0 1
      %2134 = vperm.xlu0 %2133, %v1777
      %v2135 = vpop.permute.xlu0 %2134
      %2137 = vset.pattern.permute.xlu0 1
      %2138 = vperm.xlu0 %2137, %v1778
      %v2139 = vpop.permute.xlu0 %2138
      %2141 = vset.pattern.permute.xlu0 1
      %2142 = vperm.xlu0 %2141, %v1779
      %v2143 = vpop.permute.xlu0 %2142
      %2145 = vset.pattern.permute.xlu0 1
      %2146 = vperm.xlu0 %2145, %v1780
      %v2147 = vpop.permute.xlu0 %2146
      %2149 = vset.pattern.permute.xlu0 1
      %2150 = vperm.xlu0 %2149, %v1781
      %v2151 = vpop.permute.xlu0 %2150
      %2153 = vset.pattern.permute.xlu0 1
      %2154 = vperm.xlu0 %2153, %v1782
      %v2155 = vpop.permute.xlu0 %2154
      %2157 = vset.pattern.permute.xlu0 1
      %2158 = vperm.xlu0 %2157, %v1783
      %v2159 = vpop.permute.xlu0 %2158
      %2161 = vset.pattern.permute.xlu0 1
      %2162 = vperm.xlu0 %2161, %v1784
      %v2163 = vpop.permute.xlu0 %2162
      %2165 = vset.pattern.permute.xlu0 1
      %2166 = vperm.xlu0 %2165, %v1785
      %v2167 = vpop.permute.xlu0 %2166
      %2169 = vset.pattern.permute.xlu0 1
      %2170 = vperm.xlu0 %2169, %v1786
      %v2171 = vpop.permute.xlu0 %2170
      %2173 = vset.pattern.permute.xlu0 1
      %2174 = vperm.xlu0 %2173, %v1787
      %v2175 = vpop.permute.xlu0 %2174
      %2177 = vset.pattern.permute.xlu0 1
      %2178 = vperm.xlu0 %2177, %v1788
      %v2179 = vpop.permute.xlu0 %2178
      %2181 = vset.pattern.permute.xlu0 1
      %2182 = vperm.xlu0 %2181, %v1789
      %v2183 = vpop.permute.xlu0 %2182
      %2185 = vset.pattern.permute.xlu0 1
      %2186 = vperm.xlu0 %2185, %v1790
      %v2187 = vpop.permute.xlu0 %2186
      %2189 = vset.pattern.permute.xlu0 1
      %2190 = vperm.xlu0 %2189, %v1791
      %v2191 = vpop.permute.xlu0 %2190
      %2193 = vset.pattern.permute.xlu0 1
      %2194 = vperm.xlu0 %2193, %v1792
      %v2195 = vpop.permute.xlu0 %2194
      %2197 = vset.pattern.permute.xlu0 1
      %2198 = vperm.xlu0 %2197, %v1793
      %v2199 = vpop.permute.xlu0 %2198
      %2201 = vset.pattern.permute.xlu0 1
      %2202 = vperm.xlu0 %2201, %v1794
      %v2203 = vpop.permute.xlu0 %2202
      %2205 = vset.pattern.permute.xlu0 1
      %2206 = vperm.xlu0 %2205, %v1795
      %v2207 = vpop.permute.xlu0 %2206
      %2209 = vset.pattern.permute.xlu0 1
      %2210 = vperm.xlu0 %2209, %v1796
      %v2211 = vpop.permute.xlu0 %2210
      %2213 = vset.pattern.permute.xlu0 1
      %2214 = vperm.xlu0 %2213, %v1797
      %v2215 = vpop.permute.xlu0 %2214
      %2217 = vset.pattern.permute.xlu0 1
      %2218 = vperm.xlu0 %2217, %v1798
      %v2219 = vpop.permute.xlu0 %2218
      %2221 = vset.pattern.permute.xlu0 1
      %2222 = vperm.xlu0 %2221, %v1799
      %v2223 = vpop.permute.xlu0 %2222
      %2225 = vset.pattern.permute.xlu0 1
      %2226 = vperm.xlu0 %2225, %v1800
      %v2227 = vpop.permute.xlu0 %2226
      %2229 = vset.pattern.permute.xlu0 1
      %2230 = vperm.xlu0 %2229, %v1801
      %v2231 = vpop.permute.xlu0 %2230
      %2233 = vset.pattern.permute.xlu0 1
      %2234 = vperm.xlu0 %2233, %v1802
      %v2235 = vpop.permute.xlu0 %2234
      %2237 = vset.pattern.permute.xlu0 1
      %2238 = vperm.xlu0 %2237, %v1803
      %v2239 = vpop.permute.xlu0 %2238
      %2241 = vset.pattern.permute.xlu0 1
      %2242 = vperm.xlu0 %2241, %v1804
      %v2243 = vpop.permute.xlu0 %2242
      %v2245 = vadd.f32 %v2005, %v2087
      %v2246 = vadd.f32 %v2006, %v2087
      %v2247 = vadd.f32 %v2007, %v2091
      %v2248 = vadd.f32 %v2008, %v2091
      %v2249 = vadd.f32 %v2009, %v2095
      %v2250 = vadd.f32 %v2010, %v2095
      %v2251 = vadd.f32 %v2011, %v2099
      %v2252 = vadd.f32 %v2012, %v2099
      %v2253 = vadd.f32 %v2013, %v2103
      %v2254 = vadd.f32 %v2014, %v2103
      %v2255 = vadd.f32 %v2015, %v2107
      %v2256 = vadd.f32 %v2016, %v2107
      %v2257 = vadd.f32 %v2017, %v2111
      %v2258 = vadd.f32 %v2018, %v2111
      %v2259 = vadd.f32 %v2019, %v2115
      %v2260 = vadd.f32 %v2020, %v2115
      %v2261 = vadd.f32 %v2021, %v2119
      %v2262 = vadd.f32 %v2022, %v2119
      %v2263 = vadd.f32 %v2023, %v2123
      %v2264 = vadd.f32 %v2024, %v2123
      %v2265 = vadd.f32 %v2025, %v2127
      %v2266 = vadd.f32 %v2026, %v2127
      %v2267 = vadd.f32 %v2027, %v2131
      %v2268 = vadd.f32 %v2028, %v2131
      %v2269 = vadd.f32 %v2029, %v2135
      %v2270 = vadd.f32 %v2030, %v2135
      %v2271 = vadd.f32 %v2031, %v2139
      %v2272 = vadd.f32 %v2032, %v2139
      %v2273 = vadd.f32 %v2033, %v2143
      %v2274 = vadd.f32 %v2034, %v2143
      %v2275 = vadd.f32 %v2035, %v2147
      %v2276 = vadd.f32 %v2036, %v2147
      %v2277 = vadd.f32 %v2037, %v2151
      %v2278 = vadd.f32 %v2038, %v2151
      %v2279 = vadd.f32 %v2039, %v2155
      %v2280 = vadd.f32 %v2040, %v2155
      %v2281 = vadd.f32 %v2041, %v2159
      %v2282 = vadd.f32 %v2042, %v2159
      %v2283 = vadd.f32 %v2043, %v2163
      %v2284 = vadd.f32 %v2044, %v2163
      %v2285 = vadd.f32 %v2045, %v2167
      %v2286 = vadd.f32 %v2046, %v2167
      %v2287 = vadd.f32 %v2047, %v2171
      %v2288 = vadd.f32 %v2048, %v2171
      %v2289 = vadd.f32 %v2049, %v2175
      %v2290 = vadd.f32 %v2050, %v2175
      %v2291 = vadd.f32 %v2051, %v2179
      %v2292 = vadd.f32 %v2052, %v2179
      %v2293 = vadd.f32 %v2053, %v2183
      %v2294 = vadd.f32 %v2054, %v2183
      %v2295 = vadd.f32 %v2055, %v2187
      %v2296 = vadd.f32 %v2056, %v2187
      %v2297 = vadd.f32 %v2057, %v2191
      %v2298 = vadd.f32 %v2058, %v2191
      %v2299 = vadd.f32 %v2059, %v2195
      %v2300 = vadd.f32 %v2060, %v2195
      %v2301 = vadd.f32 %v2061, %v2199
      %v2302 = vadd.f32 %v2062, %v2199
      %v2303 = vadd.f32 %v2063, %v2203
      %v2304 = vadd.f32 %v2064, %v2203
      %v2305 = vadd.f32 %v2065, %v2207
      %v2306 = vadd.f32 %v2066, %v2207
      %v2307 = vadd.f32 %v2067, %v2211
      %v2308 = vadd.f32 %v2068, %v2211
      %v2309 = vadd.f32 %v2069, %v2215
      %v2310 = vadd.f32 %v2070, %v2215
      %v2311 = vadd.f32 %v2071, %v2219
      %v2312 = vadd.f32 %v2072, %v2219
      %v2313 = vadd.f32 %v2073, %v2223
      %v2314 = vadd.f32 %v2074, %v2223
      %v2315 = vadd.f32 %v2075, %v2227
      %v2316 = vadd.f32 %v2076, %v2227
      %v2317 = vadd.f32 %v2077, %v2231
      %v2318 = vadd.f32 %v2078, %v2231
      %v2319 = vadd.f32 %v2079, %v2235
      %v2320 = vadd.f32 %v2080, %v2235
      %v2321 = vadd.f32 %v2081, %v2239
      %v2322 = vadd.f32 %v2082, %v2239
      %v2323 = vadd.f32 %v2083, %v2243
      %v2324 = vadd.f32 %v2084, %v2243
      %v2325 = vsub.f32 0.0, %v2245
      %v2326 = vsub.f32 0.0, %v2246
      %v2327 = vsub.f32 0.0, %v2247
      %v2328 = vsub.f32 0.0, %v2248
      %v2329 = vsub.f32 0.0, %v2249
      %v2330 = vsub.f32 0.0, %v2250
      %v2331 = vsub.f32 0.0, %v2251
      %v2332 = vsub.f32 0.0, %v2252
      %v2333 = vsub.f32 0.0, %v2253
      %v2334 = vsub.f32 0.0, %v2254
      %v2335 = vsub.f32 0.0, %v2255
      %v2336 = vsub.f32 0.0, %v2256
      %v2337 = vsub.f32 0.0, %v2257
      %v2338 = vsub.f32 0.0, %v2258
      %v2339 = vsub.f32 0.0, %v2259
      %v2340 = vsub.f32 0.0, %v2260
      %v2341 = vsub.f32 0.0, %v2261
      %v2342 = vsub.f32 0.0, %v2262
      %v2343 = vsub.f32 0.0, %v2263
      %v2344 = vsub.f32 0.0, %v2264
      %v2345 = vsub.f32 0.0, %v2265
      %v2346 = vsub.f32 0.0, %v2266
      %v2347 = vsub.f32 0.0, %v2267
      %v2348 = vsub.f32 0.0, %v2268
      %v2349 = vsub.f32 0.0, %v2269
      %v2350 = vsub.f32 0.0, %v2270
      %v2351 = vsub.f32 0.0, %v2271
      %v2352 = vsub.f32 0.0, %v2272
      %v2353 = vsub.f32 0.0, %v2273
      %v2354 = vsub.f32 0.0, %v2274
      %v2355 = vsub.f32 0.0, %v2275
      %v2356 = vsub.f32 0.0, %v2276
      %v2357 = vsub.f32 0.0, %v2277
      %v2358 = vsub.f32 0.0, %v2278
      %v2359 = vsub.f32 0.0, %v2279
      %v2360 = vsub.f32 0.0, %v2280
      %v2361 = vsub.f32 0.0, %v2281
      %v2362 = vsub.f32 0.0, %v2282
      %v2363 = vsub.f32 0.0, %v2283
      %v2364 = vsub.f32 0.0, %v2284
      %v2365 = vsub.f32 0.0, %v2285
      %v2366 = vsub.f32 0.0, %v2286
      %v2367 = vsub.f32 0.0, %v2287
      %v2368 = vsub.f32 0.0, %v2288
      %v2369 = vsub.f32 0.0, %v2289
      %v2370 = vsub.f32 0.0, %v2290
      %v2371 = vsub.f32 0.0, %v2291
      %v2372 = vsub.f32 0.0, %v2292
      %v2373 = vsub.f32 0.0, %v2293
      %v2374 = vsub.f32 0.0, %v2294
      %v2375 = vsub.f32 0.0, %v2295
      %v2376 = vsub.f32 0.0, %v2296
      %v2377 = vsub.f32 0.0, %v2297
      %v2378 = vsub.f32 0.0, %v2298
      %v2379 = vsub.f32 0.0, %v2299
      %v2380 = vsub.f32 0.0, %v2300
      %v2381 = vsub.f32 0.0, %v2301
      %v2382 = vsub.f32 0.0, %v2302
      %v2383 = vsub.f32 0.0, %v2303
      %v2384 = vsub.f32 0.0, %v2304
      %v2385 = vsub.f32 0.0, %v2305
      %v2386 = vsub.f32 0.0, %v2306
      %v2387 = vsub.f32 0.0, %v2307
      %v2388 = vsub.f32 0.0, %v2308
      %v2389 = vsub.f32 0.0, %v2309
      %v2390 = vsub.f32 0.0, %v2310
      %v2391 = vsub.f32 0.0, %v2311
      %v2392 = vsub.f32 0.0, %v2312
      %v2393 = vsub.f32 0.0, %v2313
      %v2394 = vsub.f32 0.0, %v2314
      %v2395 = vsub.f32 0.0, %v2315
      %v2396 = vsub.f32 0.0, %v2316
      %v2397 = vsub.f32 0.0, %v2317
      %v2398 = vsub.f32 0.0, %v2318
      %v2399 = vsub.f32 0.0, %v2319
      %v2400 = vsub.f32 0.0, %v2320
      %v2401 = vsub.f32 0.0, %v2321
      %v2402 = vsub.f32 0.0, %v2322
      %v2403 = vsub.f32 0.0, %v2323
      %v2404 = vsub.f32 0.0, %v2324
      %v2405 = vmul.f32 %v2325, 1.442695
      %v2406 = vpow.pop %v2405
      %v2407 = vmul.f32 %v2326, 1.442695
      %v2408 = vpow.pop %v2407
      %v2409 = vmul.f32 %v2327, 1.442695
      %v2410 = vpow.pop %v2409
      %v2411 = vmul.f32 %v2328, 1.442695
      %v2412 = vpow.pop %v2411
      %v2413 = vmul.f32 %v2329, 1.442695
      %v2414 = vpow.pop %v2413
      %v2415 = vmul.f32 %v2330, 1.442695
      %v2416 = vpow.pop %v2415
      %v2417 = vmul.f32 %v2331, 1.442695
      %v2418 = vpow.pop %v2417
      %v2419 = vmul.f32 %v2332, 1.442695
      %v2420 = vpow.pop %v2419
      %v2421 = vmul.f32 %v2333, 1.442695
      %v2422 = vpow.pop %v2421
      %v2423 = vmul.f32 %v2334, 1.442695
      %v2424 = vpow.pop %v2423
      %v2425 = vmul.f32 %v2335, 1.442695
      %v2426 = vpow.pop %v2425
      %v2427 = vmul.f32 %v2336, 1.442695
      %v2428 = vpow.pop %v2427
      %v2429 = vmul.f32 %v2337, 1.442695
      %v2430 = vpow.pop %v2429
      %v2431 = vmul.f32 %v2338, 1.442695
      %v2432 = vpow.pop %v2431
      %v2433 = vmul.f32 %v2339, 1.442695
      %v2434 = vpow.pop %v2433
      %v2435 = vmul.f32 %v2340, 1.442695
      %v2436 = vpow.pop %v2435
      %v2437 = vmul.f32 %v2341, 1.442695
      %v2438 = vpow.pop %v2437
      %v2439 = vmul.f32 %v2342, 1.442695
      %v2440 = vpow.pop %v2439
      %v2441 = vmul.f32 %v2343, 1.442695
      %v2442 = vpow.pop %v2441
      %v2443 = vmul.f32 %v2344, 1.442695
      %v2444 = vpow.pop %v2443
      %v2445 = vmul.f32 %v2345, 1.442695
      %v2446 = vpow.pop %v2445
      %v2447 = vmul.f32 %v2346, 1.442695
      %v2448 = vpow.pop %v2447
      %v2449 = vmul.f32 %v2347, 1.442695
      %v2450 = vpow.pop %v2449
      %v2451 = vmul.f32 %v2348, 1.442695
      %v2452 = vpow.pop %v2451
      %v2453 = vmul.f32 %v2349, 1.442695
      %v2454 = vpow.pop %v2453
      %v2455 = vmul.f32 %v2350, 1.442695
      %v2456 = vpow.pop %v2455
      %v2457 = vmul.f32 %v2351, 1.442695
      %v2458 = vpow.pop %v2457
      %v2459 = vmul.f32 %v2352, 1.442695
      %v2460 = vpow.pop %v2459
      %v2461 = vmul.f32 %v2353, 1.442695
      %v2462 = vpow.pop %v2461
      %v2463 = vmul.f32 %v2354, 1.442695
      %v2464 = vpow.pop %v2463
      %v2465 = vmul.f32 %v2355, 1.442695
      %v2466 = vpow.pop %v2465
      %v2467 = vmul.f32 %v2356, 1.442695
      %v2468 = vpow.pop %v2467
      %v2469 = vmul.f32 %v2357, 1.442695
      %v2470 = vpow.pop %v2469
      %v2471 = vmul.f32 %v2358, 1.442695
      %v2472 = vpow.pop %v2471
      %v2473 = vmul.f32 %v2359, 1.442695
      %v2474 = vpow.pop %v2473
      %v2475 = vmul.f32 %v2360, 1.442695
      %v2476 = vpow.pop %v2475
      %v2477 = vmul.f32 %v2361, 1.442695
      %v2478 = vpow.pop %v2477
      %v2479 = vmul.f32 %v2362, 1.442695
      %v2480 = vpow.pop %v2479
      %v2481 = vmul.f32 %v2363, 1.442695
      %v2482 = vpow.pop %v2481
      %v2483 = vmul.f32 %v2364, 1.442695
      %v2484 = vpow.pop %v2483
      %v2485 = vmul.f32 %v2365, 1.442695
      %v2486 = vpow.pop %v2485
      %v2487 = vmul.f32 %v2366, 1.442695
      %v2488 = vpow.pop %v2487
      %v2489 = vmul.f32 %v2367, 1.442695
      %v2490 = vpow.pop %v2489
      %v2491 = vmul.f32 %v2368, 1.442695
      %v2492 = vpow.pop %v2491
      %v2493 = vmul.f32 %v2369, 1.442695
      %v2494 = vpow.pop %v2493
      %v2495 = vmul.f32 %v2370, 1.442695
      %v2496 = vpow.pop %v2495
      %v2497 = vmul.f32 %v2371, 1.442695
      %v2498 = vpow.pop %v2497
      %v2499 = vmul.f32 %v2372, 1.442695
      %v2500 = vpow.pop %v2499
      %v2501 = vmul.f32 %v2373, 1.442695
      %v2502 = vpow.pop %v2501
      %v2503 = vmul.f32 %v2374, 1.442695
      %v2504 = vpow.pop %v2503
      %v2505 = vmul.f32 %v2375, 1.442695
      %v2506 = vpow.pop %v2505
      %v2507 = vmul.f32 %v2376, 1.442695
      %v2508 = vpow.pop %v2507
      %v2509 = vmul.f32 %v2377, 1.442695
      %v2510 = vpow.pop %v2509
      %v2511 = vmul.f32 %v2378, 1.442695
      %v2512 = vpow.pop %v2511
      %v2513 = vmul.f32 %v2379, 1.442695
      %v2514 = vpow.pop %v2513
      %v2515 = vmul.f32 %v2380, 1.442695
      %v2516 = vpow.pop %v2515
      %v2517 = vmul.f32 %v2381, 1.442695
      %v2518 = vpow.pop %v2517
      %v2519 = vmul.f32 %v2382, 1.442695
      %v2520 = vpow.pop %v2519
      %v2521 = vmul.f32 %v2383, 1.442695
      %v2522 = vpow.pop %v2521
      %v2523 = vmul.f32 %v2384, 1.442695
      %v2524 = vpow.pop %v2523
      %v2525 = vmul.f32 %v2385, 1.442695
      %v2526 = vpow.pop %v2525
      %v2527 = vmul.f32 %v2386, 1.442695
      %v2528 = vpow.pop %v2527
      %v2529 = vmul.f32 %v2387, 1.442695
      %v2530 = vpow.pop %v2529
      %v2531 = vmul.f32 %v2388, 1.442695
      %v2532 = vpow.pop %v2531
      %v2533 = vmul.f32 %v2389, 1.442695
      %v2534 = vpow.pop %v2533
      %v2535 = vmul.f32 %v2390, 1.442695
      %v2536 = vpow.pop %v2535
      %v2537 = vmul.f32 %v2391, 1.442695
      %v2538 = vpow.pop %v2537
      %v2539 = vmul.f32 %v2392, 1.442695
      %v2540 = vpow.pop %v2539
      %v2541 = vmul.f32 %v2393, 1.442695
      %v2542 = vpow.pop %v2541
      %v2543 = vmul.f32 %v2394, 1.442695
      %v2544 = vpow.pop %v2543
      %v2545 = vmul.f32 %v2395, 1.442695
      %v2546 = vpow.pop %v2545
      %v2547 = vmul.f32 %v2396, 1.442695
      %v2548 = vpow.pop %v2547
      %v2549 = vmul.f32 %v2397, 1.442695
      %v2550 = vpow.pop %v2549
      %v2551 = vmul.f32 %v2398, 1.442695
      %v2552 = vpow.pop %v2551
      %v2553 = vmul.f32 %v2399, 1.442695
      %v2554 = vpow.pop %v2553
      %v2555 = vmul.f32 %v2400, 1.442695
      %v2556 = vpow.pop %v2555
      %v2557 = vmul.f32 %v2401, 1.442695
      %v2558 = vpow.pop %v2557
      %v2559 = vmul.f32 %v2402, 1.442695
      %v2560 = vpow.pop %v2559
      %v2561 = vmul.f32 %v2403, 1.442695
      %v2562 = vpow.pop %v2561
      %v2563 = vmul.f32 %v2404, 1.442695
      %v2564 = vpow.pop %v2563
      %v2565 = vadd.f32 %v2406, 1.0
      %v2566 = vadd.f32 %v2408, 1.0
      %v2567 = vadd.f32 %v2410, 1.0
      %v2568 = vadd.f32 %v2412, 1.0
      %v2569 = vadd.f32 %v2414, 1.0
      %v2570 = vadd.f32 %v2416, 1.0
      %v2571 = vadd.f32 %v2418, 1.0
      %v2572 = vadd.f32 %v2420, 1.0
      %v2573 = vadd.f32 %v2422, 1.0
      %v2574 = vadd.f32 %v2424, 1.0
      %v2575 = vadd.f32 %v2426, 1.0
      %v2576 = vadd.f32 %v2428, 1.0
      %v2577 = vadd.f32 %v2430, 1.0
      %v2578 = vadd.f32 %v2432, 1.0
      %v2579 = vadd.f32 %v2434, 1.0
      %v2580 = vadd.f32 %v2436, 1.0
      %v2581 = vadd.f32 %v2438, 1.0
      %v2582 = vadd.f32 %v2440, 1.0
      %v2583 = vadd.f32 %v2442, 1.0
      %v2584 = vadd.f32 %v2444, 1.0
      %v2585 = vadd.f32 %v2446, 1.0
      %v2586 = vadd.f32 %v2448, 1.0
      %v2587 = vadd.f32 %v2450, 1.0
      %v2588 = vadd.f32 %v2452, 1.0
      %v2589 = vadd.f32 %v2454, 1.0
      %v2590 = vadd.f32 %v2456, 1.0
      %v2591 = vadd.f32 %v2458, 1.0
      %v2592 = vadd.f32 %v2460, 1.0
      %v2593 = vadd.f32 %v2462, 1.0
      %v2594 = vadd.f32 %v2464, 1.0
      %v2595 = vadd.f32 %v2466, 1.0
      %v2596 = vadd.f32 %v2468, 1.0
      %v2597 = vadd.f32 %v2470, 1.0
      %v2598 = vadd.f32 %v2472, 1.0
      %v2599 = vadd.f32 %v2474, 1.0
      %v2600 = vadd.f32 %v2476, 1.0
      %v2601 = vadd.f32 %v2478, 1.0
      %v2602 = vadd.f32 %v2480, 1.0
      %v2603 = vadd.f32 %v2482, 1.0
      %v2604 = vadd.f32 %v2484, 1.0
      %v2605 = vadd.f32 %v2486, 1.0
      %v2606 = vadd.f32 %v2488, 1.0
      %v2607 = vadd.f32 %v2490, 1.0
      %v2608 = vadd.f32 %v2492, 1.0
      %v2609 = vadd.f32 %v2494, 1.0
      %v2610 = vadd.f32 %v2496, 1.0
      %v2611 = vadd.f32 %v2498, 1.0
      %v2612 = vadd.f32 %v2500, 1.0
      %v2613 = vadd.f32 %v2502, 1.0
      %v2614 = vadd.f32 %v2504, 1.0
      %v2615 = vadd.f32 %v2506, 1.0
      %v2616 = vadd.f32 %v2508, 1.0
      %v2617 = vadd.f32 %v2510, 1.0
      %v2618 = vadd.f32 %v2512, 1.0
      %v2619 = vadd.f32 %v2514, 1.0
      %v2620 = vadd.f32 %v2516, 1.0
      %v2621 = vadd.f32 %v2518, 1.0
      %v2622 = vadd.f32 %v2520, 1.0
      %v2623 = vadd.f32 %v2522, 1.0
      %v2624 = vadd.f32 %v2524, 1.0
      %v2625 = vadd.f32 %v2526, 1.0
      %v2626 = vadd.f32 %v2528, 1.0
      %v2627 = vadd.f32 %v2530, 1.0
      %v2628 = vadd.f32 %v2532, 1.0
      %v2629 = vadd.f32 %v2534, 1.0
      %v2630 = vadd.f32 %v2536, 1.0
      %v2631 = vadd.f32 %v2538, 1.0
      %v2632 = vadd.f32 %v2540, 1.0
      %v2633 = vadd.f32 %v2542, 1.0
      %v2634 = vadd.f32 %v2544, 1.0
      %v2635 = vadd.f32 %v2546, 1.0
      %v2636 = vadd.f32 %v2548, 1.0
      %v2637 = vadd.f32 %v2550, 1.0
      %v2638 = vadd.f32 %v2552, 1.0
      %v2639 = vadd.f32 %v2554, 1.0
      %v2640 = vadd.f32 %v2556, 1.0
      %v2641 = vadd.f32 %v2558, 1.0
      %v2642 = vadd.f32 %v2560, 1.0
      %v2643 = vadd.f32 %v2562, 1.0
      %v2644 = vadd.f32 %v2564, 1.0
      %v2645 = vrcp.pop %v2565
      %v2646 = vmul.f32 1.0, %v2645
      %v2647 = vrcp.pop %v2566
      %v2648 = vmul.f32 1.0, %v2647
      %v2649 = vrcp.pop %v2567
      %v2650 = vmul.f32 1.0, %v2649
      %v2651 = vrcp.pop %v2568
      %v2652 = vmul.f32 1.0, %v2651
      %v2653 = vrcp.pop %v2569
      %v2654 = vmul.f32 1.0, %v2653
      %v2655 = vrcp.pop %v2570
      %v2656 = vmul.f32 1.0, %v2655
      %v2657 = vrcp.pop %v2571
      %v2658 = vmul.f32 1.0, %v2657
      %v2659 = vrcp.pop %v2572
      %v2660 = vmul.f32 1.0, %v2659
      %v2661 = vrcp.pop %v2573
      %v2662 = vmul.f32 1.0, %v2661
      %v2663 = vrcp.pop %v2574
      %v2664 = vmul.f32 1.0, %v2663
      %v2665 = vrcp.pop %v2575
      %v2666 = vmul.f32 1.0, %v2665
      %v2667 = vrcp.pop %v2576
      %v2668 = vmul.f32 1.0, %v2667
      %v2669 = vrcp.pop %v2577
      %v2670 = vmul.f32 1.0, %v2669
      %v2671 = vrcp.pop %v2578
      %v2672 = vmul.f32 1.0, %v2671
      %v2673 = vrcp.pop %v2579
      %v2674 = vmul.f32 1.0, %v2673
      %v2675 = vrcp.pop %v2580
      %v2676 = vmul.f32 1.0, %v2675
      %v2677 = vrcp.pop %v2581
      %v2678 = vmul.f32 1.0, %v2677
      %v2679 = vrcp.pop %v2582
      %v2680 = vmul.f32 1.0, %v2679
      %v2681 = vrcp.pop %v2583
      %v2682 = vmul.f32 1.0, %v2681
      %v2683 = vrcp.pop %v2584
      %v2684 = vmul.f32 1.0, %v2683
      %v2685 = vrcp.pop %v2585
      %v2686 = vmul.f32 1.0, %v2685
      %v2687 = vrcp.pop %v2586
      %v2688 = vmul.f32 1.0, %v2687
      %v2689 = vrcp.pop %v2587
      %v2690 = vmul.f32 1.0, %v2689
      %v2691 = vrcp.pop %v2588
      %v2692 = vmul.f32 1.0, %v2691
      %v2693 = vrcp.pop %v2589
      %v2694 = vmul.f32 1.0, %v2693
      %v2695 = vrcp.pop %v2590
      %v2696 = vmul.f32 1.0, %v2695
      %v2697 = vrcp.pop %v2591
      %v2698 = vmul.f32 1.0, %v2697
      %v2699 = vrcp.pop %v2592
      %v2700 = vmul.f32 1.0, %v2699
      %v2701 = vrcp.pop %v2593
      %v2702 = vmul.f32 1.0, %v2701
      %v2703 = vrcp.pop %v2594
      %v2704 = vmul.f32 1.0, %v2703
      %v2705 = vrcp.pop %v2595
      %v2706 = vmul.f32 1.0, %v2705
      %v2707 = vrcp.pop %v2596
      %v2708 = vmul.f32 1.0, %v2707
      %v2709 = vrcp.pop %v2597
      %v2710 = vmul.f32 1.0, %v2709
      %v2711 = vrcp.pop %v2598
      %v2712 = vmul.f32 1.0, %v2711
      %v2713 = vrcp.pop %v2599
      %v2714 = vmul.f32 1.0, %v2713
      %v2715 = vrcp.pop %v2600
      %v2716 = vmul.f32 1.0, %v2715
      %v2717 = vrcp.pop %v2601
      %v2718 = vmul.f32 1.0, %v2717
      %v2719 = vrcp.pop %v2602
      %v2720 = vmul.f32 1.0, %v2719
      %v2721 = vrcp.pop %v2603
      %v2722 = vmul.f32 1.0, %v2721
      %v2723 = vrcp.pop %v2604
      %v2724 = vmul.f32 1.0, %v2723
      %v2725 = vrcp.pop %v2605
      %v2726 = vmul.f32 1.0, %v2725
      %v2727 = vrcp.pop %v2606
      %v2728 = vmul.f32 1.0, %v2727
      %v2729 = vrcp.pop %v2607
      %v2730 = vmul.f32 1.0, %v2729
      %v2731 = vrcp.pop %v2608
      %v2732 = vmul.f32 1.0, %v2731
      %v2733 = vrcp.pop %v2609
      %v2734 = vmul.f32 1.0, %v2733
      %v2735 = vrcp.pop %v2610
      %v2736 = vmul.f32 1.0, %v2735
      %v2737 = vrcp.pop %v2611
      %v2738 = vmul.f32 1.0, %v2737
      %v2739 = vrcp.pop %v2612
      %v2740 = vmul.f32 1.0, %v2739
      %v2741 = vrcp.pop %v2613
      %v2742 = vmul.f32 1.0, %v2741
      %v2743 = vrcp.pop %v2614
      %v2744 = vmul.f32 1.0, %v2743
      %v2745 = vrcp.pop %v2615
      %v2746 = vmul.f32 1.0, %v2745
      %v2747 = vrcp.pop %v2616
      %v2748 = vmul.f32 1.0, %v2747
      %v2749 = vrcp.pop %v2617
      %v2750 = vmul.f32 1.0, %v2749
      %v2751 = vrcp.pop %v2618
      %v2752 = vmul.f32 1.0, %v2751
      %v2753 = vrcp.pop %v2619
      %v2754 = vmul.f32 1.0, %v2753
      %v2755 = vrcp.pop %v2620
      %v2756 = vmul.f32 1.0, %v2755
      %v2757 = vrcp.pop %v2621
      %v2758 = vmul.f32 1.0, %v2757
      %v2759 = vrcp.pop %v2622
      %v2760 = vmul.f32 1.0, %v2759
      %v2761 = vrcp.pop %v2623
      %v2762 = vmul.f32 1.0, %v2761
      %v2763 = vrcp.pop %v2624
      %v2764 = vmul.f32 1.0, %v2763
      %v2765 = vrcp.pop %v2625
      %v2766 = vmul.f32 1.0, %v2765
      %v2767 = vrcp.pop %v2626
      %v2768 = vmul.f32 1.0, %v2767
      %v2769 = vrcp.pop %v2627
      %v2770 = vmul.f32 1.0, %v2769
      %v2771 = vrcp.pop %v2628
      %v2772 = vmul.f32 1.0, %v2771
      %v2773 = vrcp.pop %v2629
      %v2774 = vmul.f32 1.0, %v2773
      %v2775 = vrcp.pop %v2630
      %v2776 = vmul.f32 1.0, %v2775
      %v2777 = vrcp.pop %v2631
      %v2778 = vmul.f32 1.0, %v2777
      %v2779 = vrcp.pop %v2632
      %v2780 = vmul.f32 1.0, %v2779
      %v2781 = vrcp.pop %v2633
      %v2782 = vmul.f32 1.0, %v2781
      %v2783 = vrcp.pop %v2634
      %v2784 = vmul.f32 1.0, %v2783
      %v2785 = vrcp.pop %v2635
      %v2786 = vmul.f32 1.0, %v2785
      %v2787 = vrcp.pop %v2636
      %v2788 = vmul.f32 1.0, %v2787
      %v2789 = vrcp.pop %v2637
      %v2790 = vmul.f32 1.0, %v2789
      %v2791 = vrcp.pop %v2638
      %v2792 = vmul.f32 1.0, %v2791
      %v2793 = vrcp.pop %v2639
      %v2794 = vmul.f32 1.0, %v2793
      %v2795 = vrcp.pop %v2640
      %v2796 = vmul.f32 1.0, %v2795
      %v2797 = vrcp.pop %v2641
      %v2798 = vmul.f32 1.0, %v2797
      %v2799 = vrcp.pop %v2642
      %v2800 = vmul.f32 1.0, %v2799
      %v2801 = vrcp.pop %v2643
      %v2802 = vmul.f32 1.0, %v2801
      %v2803 = vrcp.pop %v2644
      %v2804 = vmul.f32 1.0, %v2803
      %v2805 = vmul.f32 %v2245, %v2646
      %v2806 = vmul.f32 %v2246, %v2648
      %v2807 = vmul.f32 %v2247, %v2650
      %v2808 = vmul.f32 %v2248, %v2652
      %v2809 = vmul.f32 %v2249, %v2654
      %v2810 = vmul.f32 %v2250, %v2656
      %v2811 = vmul.f32 %v2251, %v2658
      %v2812 = vmul.f32 %v2252, %v2660
      %v2813 = vmul.f32 %v2253, %v2662
      %v2814 = vmul.f32 %v2254, %v2664
      %v2815 = vmul.f32 %v2255, %v2666
      %v2816 = vmul.f32 %v2256, %v2668
      %v2817 = vmul.f32 %v2257, %v2670
      %v2818 = vmul.f32 %v2258, %v2672
      %v2819 = vmul.f32 %v2259, %v2674
      %v2820 = vmul.f32 %v2260, %v2676
      %v2821 = vmul.f32 %v2261, %v2678
      %v2822 = vmul.f32 %v2262, %v2680
      %v2823 = vmul.f32 %v2263, %v2682
      %v2824 = vmul.f32 %v2264, %v2684
      %v2825 = vmul.f32 %v2265, %v2686
      %v2826 = vmul.f32 %v2266, %v2688
      %v2827 = vmul.f32 %v2267, %v2690
      %v2828 = vmul.f32 %v2268, %v2692
      %v2829 = vmul.f32 %v2269, %v2694
      %v2830 = vmul.f32 %v2270, %v2696
      %v2831 = vmul.f32 %v2271, %v2698
      %v2832 = vmul.f32 %v2272, %v2700
      %v2833 = vmul.f32 %v2273, %v2702
      %v2834 = vmul.f32 %v2274, %v2704
      %v2835 = vmul.f32 %v2275, %v2706
      %v2836 = vmul.f32 %v2276, %v2708
      %v2837 = vmul.f32 %v2277, %v2710
      %v2838 = vmul.f32 %v2278, %v2712
      %v2839 = vmul.f32 %v2279, %v2714
      %v2840 = vmul.f32 %v2280, %v2716
      %v2841 = vmul.f32 %v2281, %v2718
      %v2842 = vmul.f32 %v2282, %v2720
      %v2843 = vmul.f32 %v2283, %v2722
      %v2844 = vmul.f32 %v2284, %v2724
      %v2845 = vmul.f32 %v2285, %v2726
      %v2846 = vmul.f32 %v2286, %v2728
      %v2847 = vmul.f32 %v2287, %v2730
      %v2848 = vmul.f32 %v2288, %v2732
      %v2849 = vmul.f32 %v2289, %v2734
      %v2850 = vmul.f32 %v2290, %v2736
      %v2851 = vmul.f32 %v2291, %v2738
      %v2852 = vmul.f32 %v2292, %v2740
      %v2853 = vmul.f32 %v2293, %v2742
      %v2854 = vmul.f32 %v2294, %v2744
      %v2855 = vmul.f32 %v2295, %v2746
      %v2856 = vmul.f32 %v2296, %v2748
      %v2857 = vmul.f32 %v2297, %v2750
      %v2858 = vmul.f32 %v2298, %v2752
      %v2859 = vmul.f32 %v2299, %v2754
      %v2860 = vmul.f32 %v2300, %v2756
      %v2861 = vmul.f32 %v2301, %v2758
      %v2862 = vmul.f32 %v2302, %v2760
      %v2863 = vmul.f32 %v2303, %v2762
      %v2864 = vmul.f32 %v2304, %v2764
      %v2865 = vmul.f32 %v2305, %v2766
      %v2866 = vmul.f32 %v2306, %v2768
      %v2867 = vmul.f32 %v2307, %v2770
      %v2868 = vmul.f32 %v2308, %v2772
      %v2869 = vmul.f32 %v2309, %v2774
      %v2870 = vmul.f32 %v2310, %v2776
      %v2871 = vmul.f32 %v2311, %v2778
      %v2872 = vmul.f32 %v2312, %v2780
      %v2873 = vmul.f32 %v2313, %v2782
      %v2874 = vmul.f32 %v2314, %v2784
      %v2875 = vmul.f32 %v2315, %v2786
      %v2876 = vmul.f32 %v2316, %v2788
      %v2877 = vmul.f32 %v2317, %v2790
      %v2878 = vmul.f32 %v2318, %v2792
      %v2879 = vmul.f32 %v2319, %v2794
      %v2880 = vmul.f32 %v2320, %v2796
      %v2881 = vmul.f32 %v2321, %v2798
      %v2882 = vmul.f32 %v2322, %v2800
      %v2883 = vmul.f32 %v2323, %v2802
      %v2884 = vmul.f32 %v2324, %v2804
      %2885 = vst [vmem:[#allocation2] sm:$0xf] 0
      %2886 = vst [vmem:[#allocation2 + $0x10] sm:$0xf] 0
      %2887 = vst [vmem:[#allocation2 + $0x20] sm:$0xf] 0
      %2888 = vst [vmem:[#allocation2 + $0x30] sm:$0xf] 0
      %2889 = vst [vmem:[#allocation2 + $0x40] sm:$0xf] 0
      %2890 = vst [vmem:[#allocation2 + $0x50] sm:$0xf] 0
      %2891 = vst [vmem:[#allocation2 + $0x60] sm:$0xf] 0
      %2892 = vst [vmem:[#allocation2 + $0x70] sm:$0xf] 0
      %2893 = vst [vmem:[#allocation2 + $0x80] sm:$0xf] 0
      %2894 = vst [vmem:[#allocation2 + $0x90] sm:$0xf] 0
      %2895 = vst [vmem:[#allocation2 + $0xa0] sm:$0xf] 0
      %2896 = vst [vmem:[#allocation2 + $0xb0] sm:$0xf] 0
      %2897 = vst [vmem:[#allocation2 + $0xc0] sm:$0xf] 0
      %2898 = vst [vmem:[#allocation2 + $0xd0] sm:$0xf] 0
      %2899 = vst [vmem:[#allocation2 + $0xe0] sm:$0xf] 0
      %2900 = vst [vmem:[#allocation2 + $0xf0] sm:$0xf] 0
      %2901 = vst [vmem:[#allocation2 + $0x100] sm:$0xf] 0
      %2902 = vst [vmem:[#allocation2 + $0x110] sm:$0xf] 0
      %2903 = vst [vmem:[#allocation2 + $0x120] sm:$0xf] 0
      %2904 = vst [vmem:[#allocation2 + $0x130] sm:$0xf] 0
      %2905 = vst [vmem:[#allocation2 + $0x140] sm:$0xf] 0
      %2906 = vst [vmem:[#allocation2 + $0x150] sm:$0xf] 0
      %2907 = vst [vmem:[#allocation2 + $0x160] sm:$0xf] 0
      %2908 = vst [vmem:[#allocation2 + $0x170] sm:$0xf] 0
      %2909 = vst [vmem:[#allocation2 + $0x180] sm:$0xf] 0
      %2910 = vst [vmem:[#allocation2 + $0x190] sm:$0xf] 0
      %2911 = vst [vmem:[#allocation2 + $0x1a0] sm:$0xf] 0
      %2912 = vst [vmem:[#allocation2 + $0x1b0] sm:$0xf] 0
      %2913 = vst [vmem:[#allocation2 + $0x1c0] sm:$0xf] 0
      %2914 = vst [vmem:[#allocation2 + $0x1d0] sm:$0xf] 0
      %2915 = vst [vmem:[#allocation2 + $0x1e0] sm:$0xf] 0
      %2916 = vst [vmem:[#allocation2 + $0x1f0] sm:$0xf] 0
      %2917 = vst [vmem:[#allocation2 + $0x200] sm:$0xf] 0
      %2918 = vst [vmem:[#allocation2 + $0x210] sm:$0xf] 0
      %2919 = vst [vmem:[#allocation2 + $0x220] sm:$0xf] 0
      %2920 = vst [vmem:[#allocation2 + $0x230] sm:$0xf] 0
      %2921 = vst [vmem:[#allocation2 + $0x240] sm:$0xf] 0
      %2922 = vst [vmem:[#allocation2 + $0x250] sm:$0xf] 0
      %2923 = vst [vmem:[#allocation2 + $0x260] sm:$0xf] 0
      %2924 = vst [vmem:[#allocation2 + $0x270] sm:$0xf] 0
      %2925 = vst [vmem:[#allocation2 + $0xc] sm:$0xf] 0
      %2926 = vst [vmem:[#allocation2 + $0x1c] sm:$0xf] 0
      %2927 = vst [vmem:[#allocation2 + $0x2c] sm:$0xf] 0
      %2928 = vst [vmem:[#allocation2 + $0x3c] sm:$0xf] 0
      %2929 = vst [vmem:[#allocation2 + $0x4c] sm:$0xf] 0
      %2930 = vst [vmem:[#allocation2 + $0x5c] sm:$0xf] 0
      %2931 = vst [vmem:[#allocation2 + $0x6c] sm:$0xf] 0
      %2932 = vst [vmem:[#allocation2 + $0x7c] sm:$0xf] 0
      %2933 = vst [vmem:[#allocation2 + $0x8c] sm:$0xf] 0
      %2934 = vst [vmem:[#allocation2 + $0x9c] sm:$0xf] 0
      %2935 = vst [vmem:[#allocation2 + $0xac] sm:$0xf] 0
      %2936 = vst [vmem:[#allocation2 + $0xbc] sm:$0xf] 0
      %2937 = vst [vmem:[#allocation2 + $0xcc] sm:$0xf] 0
      %2938 = vst [vmem:[#allocation2 + $0xdc] sm:$0xf] 0
      %2939 = vst [vmem:[#allocation2 + $0xec] sm:$0xf] 0
      %2940 = vst [vmem:[#allocation2 + $0xfc] sm:$0xf] 0
      %2941 = vst [vmem:[#allocation2 + $0x10c] sm:$0xf] 0
      %2942 = vst [vmem:[#allocation2 + $0x11c] sm:$0xf] 0
      %2943 = vst [vmem:[#allocation2 + $0x12c] sm:$0xf] 0
      %2944 = vst [vmem:[#allocation2 + $0x13c] sm:$0xf] 0
      %2945 = vst [vmem:[#allocation2 + $0x14c] sm:$0xf] 0
      %2946 = vst [vmem:[#allocation2 + $0x15c] sm:$0xf] 0
      %2947 = vst [vmem:[#allocation2 + $0x16c] sm:$0xf] 0
      %2948 = vst [vmem:[#allocation2 + $0x17c] sm:$0xf] 0
      %2949 = vst [vmem:[#allocation2 + $0x18c] sm:$0xf] 0
      %2950 = vst [vmem:[#allocation2 + $0x19c] sm:$0xf] 0
      %2951 = vst [vmem:[#allocation2 + $0x1ac] sm:$0xf] 0
      %2952 = vst [vmem:[#allocation2 + $0x1bc] sm:$0xf] 0
      %2953 = vst [vmem:[#allocation2 + $0x1cc] sm:$0xf] 0
      %2954 = vst [vmem:[#allocation2 + $0x1dc] sm:$0xf] 0
      %2955 = vst [vmem:[#allocation2 + $0x1ec] sm:$0xf] 0
      %2956 = vst [vmem:[#allocation2 + $0x1fc] sm:$0xf] 0
      %2957 = vst [vmem:[#allocation2 + $0x20c] sm:$0xf] 0
      %2958 = vst [vmem:[#allocation2 + $0x21c] sm:$0xf] 0
      %2959 = vst [vmem:[#allocation2 + $0x22c] sm:$0xf] 0
      %2960 = vst [vmem:[#allocation2 + $0x23c] sm:$0xf] 0
      %2961 = vst [vmem:[#allocation2 + $0x24c] sm:$0xf] 0
      %2962 = vst [vmem:[#allocation2 + $0x25c] sm:$0xf] 0
      %2963 = vst [vmem:[#allocation2 + $0x26c] sm:$0xf] 0
      %2964 = vst [vmem:[#allocation2 + $0x27c] sm:$0xf] 0
      %v2965 = vpack.c.bf16 %v2807, %v2805
      %v2966 = vpack.c.bf16 %v2808, %v2806
      %v2967 = vpack.c.bf16 %v2811, %v2809
      %v2968 = vpack.c.bf16 %v2812, %v2810
      %v2969 = vpack.c.bf16 %v2815, %v2813
      %v2970 = vpack.c.bf16 %v2816, %v2814
      %v2971 = vpack.c.bf16 %v2819, %v2817
      %v2972 = vpack.c.bf16 %v2820, %v2818
      %v2973 = vpack.c.bf16 %v2823, %v2821
      %v2974 = vpack.c.bf16 %v2824, %v2822
      %v2975 = vpack.c.bf16 %v2827, %v2825
      %v2976 = vpack.c.bf16 %v2828, %v2826
      %v2977 = vpack.c.bf16 %v2831, %v2829
      %v2978 = vpack.c.bf16 %v2832, %v2830
      %v2979 = vpack.c.bf16 %v2835, %v2833
      %v2980 = vpack.c.bf16 %v2836, %v2834
      %v2981 = vpack.c.bf16 %v2839, %v2837
      %v2982 = vpack.c.bf16 %v2840, %v2838
      %v2983 = vpack.c.bf16 %v2843, %v2841
      %v2984 = vpack.c.bf16 %v2844, %v2842
      %v2985 = vpack.c.bf16 %v2847, %v2845
      %v2986 = vpack.c.bf16 %v2848, %v2846
      %v2987 = vpack.c.bf16 %v2851, %v2849
      %v2988 = vpack.c.bf16 %v2852, %v2850
      %v2989 = vpack.c.bf16 %v2855, %v2853
      %v2990 = vpack.c.bf16 %v2856, %v2854
      %v2991 = vpack.c.bf16 %v2859, %v2857
      %v2992 = vpack.c.bf16 %v2860, %v2858
      %v2993 = vpack.c.bf16 %v2863, %v2861
      %v2994 = vpack.c.bf16 %v2864, %v2862
      %v2995 = vpack.c.bf16 %v2867, %v2865
      %v2996 = vpack.c.bf16 %v2868, %v2866
      %v2997 = vpack.c.bf16 %v2871, %v2869
      %v2998 = vpack.c.bf16 %v2872, %v2870
      %v2999 = vpack.c.bf16 %v2875, %v2873
      %v3000 = vpack.c.bf16 %v2876, %v2874
      %v3001 = vpack.c.bf16 %v2879, %v2877
      %v3002 = vpack.c.bf16 %v2880, %v2878
      %v3003 = vpack.c.bf16 %v2883, %v2881
      %v3004 = vpack.c.bf16 %v2884, %v2882
      %v3045 = vunpack.c.l.b16 %v2965
      %v3046 = vunpack.c.l.b16 %v2966
      %v3047 = vunpack.c.h.b16 %v2965
      %v3048 = vunpack.c.h.b16 %v2966
      %v3049 = vunpack.c.l.b16 %v2967
      %v3050 = vunpack.c.l.b16 %v2968
      %v3051 = vunpack.c.h.b16 %v2967
      %v3052 = vunpack.c.h.b16 %v2968
      %v3053 = vunpack.c.l.b16 %v2969
      %v3054 = vunpack.c.l.b16 %v2970
      %v3055 = vunpack.c.h.b16 %v2969
      %v3056 = vunpack.c.h.b16 %v2970
      %v3057 = vunpack.c.l.b16 %v2971
      %v3058 = vunpack.c.l.b16 %v2972
      %v3059 = vunpack.c.h.b16 %v2971
      %v3060 = vunpack.c.h.b16 %v2972
      %v3061 = vunpack.c.l.b16 %v2973
      %v3062 = vunpack.c.l.b16 %v2974
      %v3063 = vunpack.c.h.b16 %v2973
      %v3064 = vunpack.c.h.b16 %v2974
      %v3065 = vunpack.c.l.b16 %v2975
      %v3066 = vunpack.c.l.b16 %v2976
      %v3067 = vunpack.c.h.b16 %v2975
      %v3068 = vunpack.c.h.b16 %v2976
      %v3069 = vunpack.c.l.b16 %v2977
      %v3070 = vunpack.c.l.b16 %v2978
      %v3071 = vunpack.c.h.b16 %v2977
      %v3072 = vunpack.c.h.b16 %v2978
      %v3073 = vunpack.c.l.b16 %v2979
      %v3074 = vunpack.c.l.b16 %v2980
      %v3075 = vunpack.c.h.b16 %v2979
      %v3076 = vunpack.c.h.b16 %v2980
      %v3077 = vunpack.c.l.b16 %v2981
      %v3078 = vunpack.c.l.b16 %v2982
      %v3079 = vunpack.c.h.b16 %v2981
      %v3080 = vunpack.c.h.b16 %v2982
      %v3081 = vunpack.c.l.b16 %v2983
      %v3082 = vunpack.c.l.b16 %v2984
      %v3083 = vunpack.c.h.b16 %v2983
      %v3084 = vunpack.c.h.b16 %v2984
      %v3085 = vunpack.c.l.b16 %v2985
      %v3086 = vunpack.c.l.b16 %v2986
      %v3087 = vunpack.c.h.b16 %v2985
      %v3088 = vunpack.c.h.b16 %v2986
      %v3089 = vunpack.c.l.b16 %v2987
      %v3090 = vunpack.c.l.b16 %v2988
      %v3091 = vunpack.c.h.b16 %v2987
      %v3092 = vunpack.c.h.b16 %v2988
      %v3093 = vunpack.c.l.b16 %v2989
      %v3094 = vunpack.c.l.b16 %v2990
      %v3095 = vunpack.c.h.b16 %v2989
      %v3096 = vunpack.c.h.b16 %v2990
      %v3097 = vunpack.c.l.b16 %v2991
      %v3098 = vunpack.c.l.b16 %v2992
      %v3099 = vunpack.c.h.b16 %v2991
      %v3100 = vunpack.c.h.b16 %v2992
      %v3101 = vunpack.c.l.b16 %v2993
      %v3102 = vunpack.c.l.b16 %v2994
      %v3103 = vunpack.c.h.b16 %v2993
      %v3104 = vunpack.c.h.b16 %v2994
      %v3105 = vunpack.c.l.b16 %v2995
      %v3106 = vunpack.c.l.b16 %v2996
      %v3107 = vunpack.c.h.b16 %v2995
      %v3108 = vunpack.c.h.b16 %v2996
      %v3109 = vunpack.c.l.b16 %v2997
      %v3110 = vunpack.c.l.b16 %v2998
      %v3111 = vunpack.c.h.b16 %v2997
      %v3112 = vunpack.c.h.b16 %v2998
      %v3113 = vunpack.c.l.b16 %v2999
      %v3114 = vunpack.c.l.b16 %v3000
      %v3115 = vunpack.c.h.b16 %v2999
      %v3116 = vunpack.c.h.b16 %v3000
      %v3117 = vunpack.c.l.b16 %v3001
      %v3118 = vunpack.c.l.b16 %v3002
      %v3119 = vunpack.c.h.b16 %v3001
      %v3120 = vunpack.c.h.b16 %v3002
      %v3121 = vunpack.c.l.b16 %v3003
      %v3122 = vunpack.c.l.b16 %v3004
      %v3123 = vunpack.c.h.b16 %v3003
      %v3124 = vunpack.c.h.b16 %v3004
      %v3125 = vpack.c.b16 %v3046, %v3045
      %v3126 = vpack.c.b16 %v3048, %v3047
      %v3127 = vpack.c.b16 %v3050, %v3049
      %v3128 = vpack.c.b16 %v3052, %v3051
      %v3129 = vpack.c.b16 %v3054, %v3053
      %v3130 = vpack.c.b16 %v3056, %v3055
      %v3131 = vpack.c.b16 %v3058, %v3057
      %v3132 = vpack.c.b16 %v3060, %v3059
      %v3133 = vpack.c.b16 %v3062, %v3061
      %v3134 = vpack.c.b16 %v3064, %v3063
      %v3135 = vpack.c.b16 %v3066, %v3065
      %v3136 = vpack.c.b16 %v3068, %v3067
      %v3137 = vpack.c.b16 %v3070, %v3069
      %v3138 = vpack.c.b16 %v3072, %v3071
      %v3139 = vpack.c.b16 %v3074, %v3073
      %v3140 = vpack.c.b16 %v3076, %v3075
      %v3141 = vpack.c.b16 %v3078, %v3077
      %v3142 = vpack.c.b16 %v3080, %v3079
      %v3143 = vpack.c.b16 %v3082, %v3081
      %v3144 = vpack.c.b16 %v3084, %v3083
      %v3145 = vpack.c.b16 %v3086, %v3085
      %v3146 = vpack.c.b16 %v3088, %v3087
      %v3147 = vpack.c.b16 %v3090, %v3089
      %v3148 = vpack.c.b16 %v3092, %v3091
      %v3149 = vpack.c.b16 %v3094, %v3093
      %v3150 = vpack.c.b16 %v3096, %v3095
      %v3151 = vpack.c.b16 %v3098, %v3097
      %v3152 = vpack.c.b16 %v3100, %v3099
      %v3153 = vpack.c.b16 %v3102, %v3101
      %v3154 = vpack.c.b16 %v3104, %v3103
      %v3155 = vpack.c.b16 %v3106, %v3105
      %v3156 = vpack.c.b16 %v3108, %v3107
      %v3157 = vpack.c.b16 %v3110, %v3109
      %v3158 = vpack.c.b16 %v3112, %v3111
      %v3159 = vpack.c.b16 %v3114, %v3113
      %v3160 = vpack.c.b16 %v3116, %v3115
      %v3161 = vpack.c.b16 %v3118, %v3117
      %v3162 = vpack.c.b16 %v3120, %v3119
      %v3163 = vpack.c.b16 %v3122, %v3121
      %v3164 = vpack.c.b16 %v3124, %v3123
      %3205 = vst [vmem:[#allocation2 + $0x4] sm:$0xff] %v3125
      %3206 = vst [vmem:[#allocation2 + $0x14] sm:$0xff] %v3126
      %3207 = vst [vmem:[#allocation2 + $0x24] sm:$0xff] %v3127
      %3208 = vst [vmem:[#allocation2 + $0x34] sm:$0xff] %v3128
      %3209 = vst [vmem:[#allocation2 + $0x44] sm:$0xff] %v3129
      %3210 = vst [vmem:[#allocation2 + $0x54] sm:$0xff] %v3130
      %3211 = vst [vmem:[#allocation2 + $0x64] sm:$0xff] %v3131
      %3212 = vst [vmem:[#allocation2 + $0x74] sm:$0xff] %v3132
      %3213 = vst [vmem:[#allocation2 + $0x84] sm:$0xff] %v3133
      %3214 = vst [vmem:[#allocation2 + $0x94] sm:$0xff] %v3134
      %3215 = vst [vmem:[#allocation2 + $0xa4] sm:$0xff] %v3135
      %3216 = vst [vmem:[#allocation2 + $0xb4] sm:$0xff] %v3136
      %3217 = vst [vmem:[#allocation2 + $0xc4] sm:$0xff] %v3137
      %3218 = vst [vmem:[#allocation2 + $0xd4] sm:$0xff] %v3138
      %3219 = vst [vmem:[#allocation2 + $0xe4] sm:$0xff] %v3139
      %3220 = vst [vmem:[#allocation2 + $0xf4] sm:$0xff] %v3140
      %3221 = vst [vmem:[#allocation2 + $0x104] sm:$0xff] %v3141
      %3222 = vst [vmem:[#allocation2 + $0x114] sm:$0xff] %v3142
      %3223 = vst [vmem:[#allocation2 + $0x124] sm:$0xff] %v3143
      %3224 = vst [vmem:[#allocation2 + $0x134] sm:$0xff] %v3144
      %3225 = vst [vmem:[#allocation2 + $0x144] sm:$0xff] %v3145
      %3226 = vst [vmem:[#allocation2 + $0x154] sm:$0xff] %v3146
      %3227 = vst [vmem:[#allocation2 + $0x164] sm:$0xff] %v3147
      %3228 = vst [vmem:[#allocation2 + $0x174] sm:$0xff] %v3148
      %3229 = vst [vmem:[#allocation2 + $0x184] sm:$0xff] %v3149
      %3230 = vst [vmem:[#allocation2 + $0x194] sm:$0xff] %v3150
      %3231 = vst [vmem:[#allocation2 + $0x1a4] sm:$0xff] %v3151
      %3232 = vst [vmem:[#allocation2 + $0x1b4] sm:$0xff] %v3152
      %3233 = vst [vmem:[#allocation2 + $0x1c4] sm:$0xff] %v3153
      %3234 = vst [vmem:[#allocation2 + $0x1d4] sm:$0xff] %v3154
      %3235 = vst [vmem:[#allocation2 + $0x1e4] sm:$0xff] %v3155
      %3236 = vst [vmem:[#allocation2 + $0x1f4] sm:$0xff] %v3156
      %3237 = vst [vmem:[#allocation2 + $0x204] sm:$0xff] %v3157
      %3238 = vst [vmem:[#allocation2 + $0x214] sm:$0xff] %v3158
      %3239 = vst [vmem:[#allocation2 + $0x224] sm:$0xff] %v3159
      %3240 = vst [vmem:[#allocation2 + $0x234] sm:$0xff] %v3160
      %3241 = vst [vmem:[#allocation2 + $0x244] sm:$0xff] %v3161
      %3242 = vst [vmem:[#allocation2 + $0x254] sm:$0xff] %v3162
      %3243 = vst [vmem:[#allocation2 + $0x264] sm:$0xff] %v3163
      %3244 = vst [vmem:[#allocation2 + $0x274] sm:$0xff] %v3164
      %v3245 = vld [vmem:[%s4] sm:$0xff]
      %v3246 = vld [vmem:[%s4 + $0x8] sm:$0xf]
      %v3247 = vld [vmem:[%s4 + $0xc] sm:$0xff]
      %v3248 = vld [vmem:[%s4 + $0x14] sm:$0xf]
      %v3249 = vld [vmem:[%s4 + $0x18] sm:$0xff]
      %v3250 = vld [vmem:[%s4 + $0x20] sm:$0xf]
      %v3251 = vld [vmem:[%s4 + $0x24] sm:$0xff]
      %v3252 = vld [vmem:[%s4 + $0x2c] sm:$0xf]
      %v3253 = vld [vmem:[%s4 + $0x30] sm:$0xff]
      %v3254 = vld [vmem:[%s4 + $0x38] sm:$0xf]
      %v3255 = vld [vmem:[%s4 + $0x3c] sm:$0xff]
      %v3256 = vld [vmem:[%s4 + $0x44] sm:$0xf]
      %v3257 = vld [vmem:[%s4 + $0x48] sm:$0xff]
      %v3258 = vld [vmem:[%s4 + $0x50] sm:$0xf]
      %v3259 = vld [vmem:[%s4 + $0x54] sm:$0xff]
      %v3260 = vld [vmem:[%s4 + $0x5c] sm:$0xf]
      %v3261 = vld [vmem:[%s4 + $0x60] sm:$0xff]
      %v3262 = vld [vmem:[%s4 + $0x68] sm:$0xf]
      %v3263 = vld [vmem:[#allocation2] sm:$0xff]
      %v3264 = vld [vmem:[#allocation2 + $0x8] sm:$0xff]
      %v3265 = vld [vmem:[#allocation2 + $0x10] sm:$0xff]
      %v3266 = vld [vmem:[#allocation2 + $0x18] sm:$0xff]
      %v3267 = vld [vmem:[#allocation2 + $0x20] sm:$0xff]
      %v3268 = vld [vmem:[#allocation2 + $0x28] sm:$0xff]
      %v3269 = vld [vmem:[#allocation2 + $0x30] sm:$0xff]
      %v3270 = vld [vmem:[#allocation2 + $0x38] sm:$0xff]
      %v3271 = vld [vmem:[#allocation2 + $0x40] sm:$0xff]
      %v3272 = vld [vmem:[#allocation2 + $0x48] sm:$0xff]
      %v3273 = vld [vmem:[#allocation2 + $0x50] sm:$0xff]
      %v3274 = vld [vmem:[#allocation2 + $0x58] sm:$0xff]
      %v3275 = vld [vmem:[#allocation2 + $0x60] sm:$0xff]
      %v3276 = vld [vmem:[#allocation2 + $0x68] sm:$0xff]
      %v3277 = vld [vmem:[#allocation2 + $0x70] sm:$0xff]
      %v3278 = vld [vmem:[#allocation2 + $0x78] sm:$0xff]
      %v3279 = vld [vmem:[#allocation2 + $0x80] sm:$0xff]
      %v3280 = vld [vmem:[#allocation2 + $0x88] sm:$0xff]
      %v3281 = vld [vmem:[#allocation2 + $0x90] sm:$0xff]
      %v3282 = vld [vmem:[#allocation2 + $0x98] sm:$0xff]
      %v3283 = vld [vmem:[#allocation2 + $0xa0] sm:$0xff]
      %v3284 = vld [vmem:[#allocation2 + $0xa8] sm:$0xff]
      %v3285 = vld [vmem:[#allocation2 + $0xb0] sm:$0xff]
      %v3286 = vld [vmem:[#allocation2 + $0xb8] sm:$0xff]
      %v3287 = vld [vmem:[#allocation2 + $0xc0] sm:$0xff]
      %v3288 = vld [vmem:[#allocation2 + $0xc8] sm:$0xff]
      %v3289 = vld [vmem:[#allocation2 + $0xd0] sm:$0xff]
      %v3290 = vld [vmem:[#allocation2 + $0xd8] sm:$0xff]
      %v3291 = vld [vmem:[#allocation2 + $0xe0] sm:$0xff]
      %v3292 = vld [vmem:[#allocation2 + $0xe8] sm:$0xff]
      %v3293 = vld [vmem:[#allocation2 + $0xf0] sm:$0xff]
      %v3294 = vld [vmem:[#allocation2 + $0xf8] sm:$0xff]
      %v3295 = vld [vmem:[#allocation2 + $0x100] sm:$0xff]
      %v3296 = vld [vmem:[#allocation2 + $0x108] sm:$0xff]
      %v3297 = vld [vmem:[#allocation2 + $0x110] sm:$0xff]
      %v3298 = vld [vmem:[#allocation2 + $0x118] sm:$0xff]
      %v3299 = vld [vmem:[#allocation2 + $0x120] sm:$0xff]
      %v3300 = vld [vmem:[#allocation2 + $0x128] sm:$0xff]
      %v3301 = vld [vmem:[#allocation2 + $0x130] sm:$0xff]
      %v3302 = vld [vmem:[#allocation2 + $0x138] sm:$0xff]
      %v3303 = vld [vmem:[#allocation2 + $0x140] sm:$0xff]
      %v3304 = vld [vmem:[#allocation2 + $0x148] sm:$0xff]
      %v3305 = vld [vmem:[#allocation2 + $0x150] sm:$0xff]
      %v3306 = vld [vmem:[#allocation2 + $0x158] sm:$0xff]
      %v3307 = vld [vmem:[#allocation2 + $0x160] sm:$0xff]
      %v3308 = vld [vmem:[#allocation2 + $0x168] sm:$0xff]
      %v3309 = vld [vmem:[#allocation2 + $0x170] sm:$0xff]
      %v3310 = vld [vmem:[#allocation2 + $0x178] sm:$0xff]
      %v3311 = vld [vmem:[#allocation2 + $0x180] sm:$0xff]
      %v3312 = vld [vmem:[#allocation2 + $0x188] sm:$0xff]
      %v3313 = vld [vmem:[#allocation2 + $0x190] sm:$0xff]
      %v3314 = vld [vmem:[#allocation2 + $0x198] sm:$0xff]
      %v3315 = vld [vmem:[#allocation2 + $0x1a0] sm:$0xff]
      %v3316 = vld [vmem:[#allocation2 + $0x1a8] sm:$0xff]
      %v3317 = vld [vmem:[#allocation2 + $0x1b0] sm:$0xff]
      %v3318 = vld [vmem:[#allocation2 + $0x1b8] sm:$0xff]
      %v3319 = vld [vmem:[#allocation2 + $0x1c0] sm:$0xff]
      %v3320 = vld [vmem:[#allocation2 + $0x1c8] sm:$0xff]
      %v3321 = vld [vmem:[#allocation2 + $0x1d0] sm:$0xff]
      %v3322 = vld [vmem:[#allocation2 + $0x1d8] sm:$0xff]
      %v3323 = vld [vmem:[#allocation2 + $0x1e0] sm:$0xff]
      %v3324 = vld [vmem:[#allocation2 + $0x1e8] sm:$0xff]
      %v3325 = vld [vmem:[#allocation2 + $0x1f0] sm:$0xff]
      %v3326 = vld [vmem:[#allocation2 + $0x1f8] sm:$0xff]
      %v3327 = vld [vmem:[#allocation2 + $0x200] sm:$0xff]
      %v3328 = vld [vmem:[#allocation2 + $0x208] sm:$0xff]
      %v3329 = vld [vmem:[#allocation2 + $0x210] sm:$0xff]
      %v3330 = vld [vmem:[#allocation2 + $0x218] sm:$0xff]
      %v3331 = vld [vmem:[#allocation2 + $0x220] sm:$0xff]
      %v3332 = vld [vmem:[#allocation2 + $0x228] sm:$0xff]
      %v3333 = vld [vmem:[#allocation2 + $0x230] sm:$0xff]
      %v3334 = vld [vmem:[#allocation2 + $0x238] sm:$0xff]
      %v3335 = vld [vmem:[#allocation2 + $0x240] sm:$0xff]
      %v3336 = vld [vmem:[#allocation2 + $0x248] sm:$0xff]
      %v3337 = vld [vmem:[#allocation2 + $0x250] sm:$0xff]
      %v3338 = vld [vmem:[#allocation2 + $0x258] sm:$0xff]
      %v3339 = vld [vmem:[#allocation2 + $0x260] sm:$0xff]
      %v3340 = vld [vmem:[#allocation2 + $0x268] sm:$0xff]
      %v3341 = vld [vmem:[#allocation2 + $0x270] sm:$0xff]
      %v3342 = vld [vmem:[#allocation2 + $0x278] sm:$0xff]
      %v3361 = vunpack.c.l.b16 %v3245
      %v3362 = vunpack.c.h.b16 %v3245
      %v3363 = vunpack.c.l.b16 %v3246
      %v3364 = vunpack.c.l.b16 %v3247
      %v3365 = vunpack.c.h.b16 %v3247
      %v3366 = vunpack.c.l.b16 %v3248
      %v3367 = vunpack.c.l.b16 %v3249
      %v3368 = vunpack.c.h.b16 %v3249
      %v3369 = vunpack.c.l.b16 %v3250
      %v3370 = vunpack.c.l.b16 %v3251
      %v3371 = vunpack.c.h.b16 %v3251
      %v3372 = vunpack.c.l.b16 %v3252
      %v3373 = vunpack.c.l.b16 %v3253
      %v3374 = vunpack.c.h.b16 %v3253
      %v3375 = vunpack.c.l.b16 %v3254
      %v3376 = vunpack.c.l.b16 %v3255
      %v3377 = vunpack.c.h.b16 %v3255
      %v3378 = vunpack.c.l.b16 %v3256
      %v3379 = vunpack.c.l.b16 %v3257
      %v3380 = vunpack.c.h.b16 %v3257
      %v3381 = vunpack.c.l.b16 %v3258
      %v3382 = vunpack.c.l.b16 %v3259
      %v3383 = vunpack.c.h.b16 %v3259
      %v3384 = vunpack.c.l.b16 %v3260
      %v3385 = vunpack.c.l.b16 %v3261
      %v3386 = vunpack.c.h.b16 %v3261
      %v3387 = vunpack.c.l.b16 %v3262
      %v3388 = vpack.c.b16 %v3364, %v3361
      %v3389 = vpack.c.b16 %v3365, %v3362
      %v3390 = vpack.c.b16 %v3366, %v3363
      %v3391 = vpack.c.b16 %v3370, %v3367
      %v3392 = vpack.c.b16 %v3371, %v3368
      %v3393 = vpack.c.b16 %v3372, %v3369
      %v3394 = vpack.c.b16 %v3376, %v3373
      %v3395 = vpack.c.b16 %v3377, %v3374
      %v3396 = vpack.c.b16 %v3378, %v3375
      %v3397 = vpack.c.b16 %v3382, %v3379
      %v3398 = vpack.c.b16 %v3383, %v3380
      %v3399 = vpack.c.b16 %v3384, %v3381
      %v3400 = vpack.c.b16 %v3385, %v3385
      %v3401 = vpack.c.b16 %v3386, %v3386
      %v3402 = vpack.c.b16 %v3387, %v3387
      %v3493 = vunpack.c.l.b16 %v3263
      %v3494 = vunpack.c.h.b16 %v3263
      %v3495 = vunpack.c.l.b16 %v3264
      %v3496 = vunpack.c.h.b16 %v3264
      %v3497 = vunpack.c.l.b16 %v3265
      %v3498 = vunpack.c.h.b16 %v3265
      %v3499 = vunpack.c.l.b16 %v3266
      %v3500 = vunpack.c.h.b16 %v3266
      %v3501 = vunpack.c.l.b16 %v3267
      %v3502 = vunpack.c.h.b16 %v3267
      %v3503 = vunpack.c.l.b16 %v3268
      %v3504 = vunpack.c.h.b16 %v3268
      %v3505 = vunpack.c.l.b16 %v3269
      %v3506 = vunpack.c.h.b16 %v3269
      %v3507 = vunpack.c.l.b16 %v3270
      %v3508 = vunpack.c.h.b16 %v3270
      %v3509 = vunpack.c.l.b16 %v3271
      %v3510 = vunpack.c.h.b16 %v3271
      %v3511 = vunpack.c.l.b16 %v3272
      %v3512 = vunpack.c.h.b16 %v3272
      %v3513 = vunpack.c.l.b16 %v3273
      %v3514 = vunpack.c.h.b16 %v3273
      %v3515 = vunpack.c.l.b16 %v3274
      %v3516 = vunpack.c.h.b16 %v3274
      %v3517 = vunpack.c.l.b16 %v3275
      %v3518 = vunpack.c.h.b16 %v3275
      %v3519 = vunpack.c.l.b16 %v3276
      %v3520 = vunpack.c.h.b16 %v3276
      %v3521 = vunpack.c.l.b16 %v3277
      %v3522 = vunpack.c.h.b16 %v3277
      %v3523 = vunpack.c.l.b16 %v3278
      %v3524 = vunpack.c.h.b16 %v3278
      %v3525 = vunpack.c.l.b16 %v3279
      %v3526 = vunpack.c.h.b16 %v3279
      %v3527 = vunpack.c.l.b16 %v3280
      %v3528 = vunpack.c.h.b16 %v3280
      %v3529 = vunpack.c.l.b16 %v3281
      %v3530 = vunpack.c.h.b16 %v3281
      %v3531 = vunpack.c.l.b16 %v3282
      %v3532 = vunpack.c.h.b16 %v3282
      %v3533 = vunpack.c.l.b16 %v3283
      %v3534 = vunpack.c.h.b16 %v3283
      %v3535 = vunpack.c.l.b16 %v3284
      %v3536 = vunpack.c.h.b16 %v3284
      %v3537 = vunpack.c.l.b16 %v3285
      %v3538 = vunpack.c.h.b16 %v3285
      %v3539 = vunpack.c.l.b16 %v3286
      %v3540 = vunpack.c.h.b16 %v3286
      %v3541 = vunpack.c.l.b16 %v3287
      %v3542 = vunpack.c.h.b16 %v3287
      %v3543 = vunpack.c.l.b16 %v3288
      %v3544 = vunpack.c.h.b16 %v3288
      %v3545 = vunpack.c.l.b16 %v3289
      %v3546 = vunpack.c.h.b16 %v3289
      %v3547 = vunpack.c.l.b16 %v3290
      %v3548 = vunpack.c.h.b16 %v3290
      %v3549 = vunpack.c.l.b16 %v3291
      %v3550 = vunpack.c.h.b16 %v3291
      %v3551 = vunpack.c.l.b16 %v3292
      %v3552 = vunpack.c.h.b16 %v3292
      %v3553 = vunpack.c.l.b16 %v3293
      %v3554 = vunpack.c.h.b16 %v3293
      %v3555 = vunpack.c.l.b16 %v3294
      %v3556 = vunpack.c.h.b16 %v3294
      %v3557 = vunpack.c.l.b16 %v3295
      %v3558 = vunpack.c.h.b16 %v3295
      %v3559 = vunpack.c.l.b16 %v3296
      %v3560 = vunpack.c.h.b16 %v3296
      %v3561 = vunpack.c.l.b16 %v3297
      %v3562 = vunpack.c.h.b16 %v3297
      %v3563 = vunpack.c.l.b16 %v3298
      %v3564 = vunpack.c.h.b16 %v3298
      %v3565 = vunpack.c.l.b16 %v3299
      %v3566 = vunpack.c.h.b16 %v3299
      %v3567 = vunpack.c.l.b16 %v3300
      %v3568 = vunpack.c.h.b16 %v3300
      %v3569 = vunpack.c.l.b16 %v3301
      %v3570 = vunpack.c.h.b16 %v3301
      %v3571 = vunpack.c.l.b16 %v3302
      %v3572 = vunpack.c.h.b16 %v3302
      %v3573 = vunpack.c.l.b16 %v3303
      %v3574 = vunpack.c.h.b16 %v3303
      %v3575 = vunpack.c.l.b16 %v3304
      %v3576 = vunpack.c.h.b16 %v3304
      %v3577 = vunpack.c.l.b16 %v3305
      %v3578 = vunpack.c.h.b16 %v3305
      %v3579 = vunpack.c.l.b16 %v3306
      %v3580 = vunpack.c.h.b16 %v3306
      %v3581 = vunpack.c.l.b16 %v3307
      %v3582 = vunpack.c.h.b16 %v3307
      %v3583 = vunpack.c.l.b16 %v3308
      %v3584 = vunpack.c.h.b16 %v3308
      %v3585 = vunpack.c.l.b16 %v3309
      %v3586 = vunpack.c.h.b16 %v3309
      %v3587 = vunpack.c.l.b16 %v3310
      %v3588 = vunpack.c.h.b16 %v3310
      %v3589 = vunpack.c.l.b16 %v3311
      %v3590 = vunpack.c.h.b16 %v3311
      %v3591 = vunpack.c.l.b16 %v3312
      %v3592 = vunpack.c.h.b16 %v3312
      %v3593 = vunpack.c.l.b16 %v3313
      %v3594 = vunpack.c.h.b16 %v3313
      %v3595 = vunpack.c.l.b16 %v3314
      %v3596 = vunpack.c.h.b16 %v3314
      %v3597 = vunpack.c.l.b16 %v3315
      %v3598 = vunpack.c.h.b16 %v3315
      %v3599 = vunpack.c.l.b16 %v3316
      %v3600 = vunpack.c.h.b16 %v3316
      %v3601 = vunpack.c.l.b16 %v3317
      %v3602 = vunpack.c.h.b16 %v3317
      %v3603 = vunpack.c.l.b16 %v3318
      %v3604 = vunpack.c.h.b16 %v3318
      %v3605 = vunpack.c.l.b16 %v3319
      %v3606 = vunpack.c.h.b16 %v3319
      %v3607 = vunpack.c.l.b16 %v3320
      %v3608 = vunpack.c.h.b16 %v3320
      %v3609 = vunpack.c.l.b16 %v3321
      %v3610 = vunpack.c.h.b16 %v3321
      %v3611 = vunpack.c.l.b16 %v3322
      %v3612 = vunpack.c.h.b16 %v3322
      %v3613 = vunpack.c.l.b16 %v3323
      %v3614 = vunpack.c.h.b16 %v3323
      %v3615 = vunpack.c.l.b16 %v3324
      %v3616 = vunpack.c.h.b16 %v3324
      %v3617 = vunpack.c.l.b16 %v3325
      %v3618 = vunpack.c.h.b16 %v3325
      %v3619 = vunpack.c.l.b16 %v3326
      %v3620 = vunpack.c.h.b16 %v3326
      %v3621 = vunpack.c.l.b16 %v3327
      %v3622 = vunpack.c.h.b16 %v3327
      %v3623 = vunpack.c.l.b16 %v3328
      %v3624 = vunpack.c.h.b16 %v3328
      %v3625 = vunpack.c.l.b16 %v3329
      %v3626 = vunpack.c.h.b16 %v3329
      %v3627 = vunpack.c.l.b16 %v3330
      %v3628 = vunpack.c.h.b16 %v3330
      %v3629 = vunpack.c.l.b16 %v3331
      %v3630 = vunpack.c.h.b16 %v3331
      %v3631 = vunpack.c.l.b16 %v3332
      %v3632 = vunpack.c.h.b16 %v3332
      %v3633 = vunpack.c.l.b16 %v3333
      %v3634 = vunpack.c.h.b16 %v3333
      %v3635 = vunpack.c.l.b16 %v3334
      %v3636 = vunpack.c.h.b16 %v3334
      %v3637 = vunpack.c.l.b16 %v3335
      %v3638 = vunpack.c.h.b16 %v3335
      %v3639 = vunpack.c.l.b16 %v3336
      %v3640 = vunpack.c.h.b16 %v3336
      %v3641 = vunpack.c.l.b16 %v3337
      %v3642 = vunpack.c.h.b16 %v3337
      %v3643 = vunpack.c.l.b16 %v3338
      %v3644 = vunpack.c.h.b16 %v3338
      %v3645 = vunpack.c.l.b16 %v3339
      %v3646 = vunpack.c.h.b16 %v3339
      %v3647 = vunpack.c.l.b16 %v3340
      %v3648 = vunpack.c.h.b16 %v3340
      %v3649 = vunpack.c.l.b16 %v3341
      %v3650 = vunpack.c.h.b16 %v3341
      %v3651 = vunpack.c.l.b16 %v3342
      %v3652 = vunpack.c.h.b16 %v3342
      %v3653 = vpack.c.b16 %v3497, %v3493
      %v3654 = vpack.c.b16 %v3498, %v3494
      %v3655 = vpack.c.b16 %v3499, %v3495
      %v3656 = vpack.c.b16 %v3500, %v3496
      %v3657 = vpack.c.b16 %v3505, %v3501
      %v3658 = vpack.c.b16 %v3506, %v3502
      %v3659 = vpack.c.b16 %v3507, %v3503
      %v3660 = vpack.c.b16 %v3508, %v3504
      %v3661 = vpack.c.b16 %v3513, %v3509
      %v3662 = vpack.c.b16 %v3514, %v3510
      %v3663 = vpack.c.b16 %v3515, %v3511
      %v3664 = vpack.c.b16 %v3516, %v3512
      %v3665 = vpack.c.b16 %v3521, %v3517
      %v3666 = vpack.c.b16 %v3522, %v3518
      %v3667 = vpack.c.b16 %v3523, %v3519
      %v3668 = vpack.c.b16 %v3524, %v3520
      %v3669 = vpack.c.b16 %v3529, %v3525
      %v3670 = vpack.c.b16 %v3530, %v3526
      %v3671 = vpack.c.b16 %v3531, %v3527
      %v3672 = vpack.c.b16 %v3532, %v3528
      %v3673 = vpack.c.b16 %v3537, %v3533
      %v3674 = vpack.c.b16 %v3538, %v3534
      %v3675 = vpack.c.b16 %v3539, %v3535
      %v3676 = vpack.c.b16 %v3540, %v3536
      %v3677 = vpack.c.b16 %v3545, %v3541
      %v3678 = vpack.c.b16 %v3546, %v3542
      %v3679 = vpack.c.b16 %v3547, %v3543
      %v3680 = vpack.c.b16 %v3548, %v3544
      %v3681 = vpack.c.b16 %v3553, %v3549
      %v3682 = vpack.c.b16 %v3554, %v3550
      %v3683 = vpack.c.b16 %v3555, %v3551
      %v3684 = vpack.c.b16 %v3556, %v3552
      %v3685 = vpack.c.b16 %v3561, %v3557
      %v3686 = vpack.c.b16 %v3562, %v3558
      %v3687 = vpack.c.b16 %v3563, %v3559
      %v3688 = vpack.c.b16 %v3564, %v3560
      %v3689 = vpack.c.b16 %v3569, %v3565
      %v3690 = vpack.c.b16 %v3570, %v3566
      %v3691 = vpack.c.b16 %v3571, %v3567
      %v3692 = vpack.c.b16 %v3572, %v3568
      %v3693 = vpack.c.b16 %v3577, %v3573
      %v3694 = vpack.c.b16 %v3578, %v3574
      %v3695 = vpack.c.b16 %v3579, %v3575
      %v3696 = vpack.c.b16 %v3580, %v3576
      %v3697 = vpack.c.b16 %v3585, %v3581
      %v3698 = vpack.c.b16 %v3586, %v3582
      %v3699 = vpack.c.b16 %v3587, %v3583
      %v3700 = vpack.c.b16 %v3588, %v3584
      %v3701 = vpack.c.b16 %v3593, %v3589
      %v3702 = vpack.c.b16 %v3594, %v3590
      %v3703 = vpack.c.b16 %v3595, %v3591
      %v3704 = vpack.c.b16 %v3596, %v3592
      %v3705 = vpack.c.b16 %v3601, %v3597
      %v3706 = vpack.c.b16 %v3602, %v3598
      %v3707 = vpack.c.b16 %v3603, %v3599
      %v3708 = vpack.c.b16 %v3604, %v3600
      %v3709 = vpack.c.b16 %v3609, %v3605
      %v3710 = vpack.c.b16 %v3610, %v3606
      %v3711 = vpack.c.b16 %v3611, %v3607
      %v3712 = vpack.c.b16 %v3612, %v3608
      %v3713 = vpack.c.b16 %v3617, %v3613
      %v3714 = vpack.c.b16 %v3618, %v3614
      %v3715 = vpack.c.b16 %v3619, %v3615
      %v3716 = vpack.c.b16 %v3620, %v3616
      %v3717 = vpack.c.b16 %v3625, %v3621
      %v3718 = vpack.c.b16 %v3626, %v3622
      %v3719 = vpack.c.b16 %v3627, %v3623
      %v3720 = vpack.c.b16 %v3628, %v3624
      %v3721 = vpack.c.b16 %v3633, %v3629
      %v3722 = vpack.c.b16 %v3634, %v3630
      %v3723 = vpack.c.b16 %v3635, %v3631
      %v3724 = vpack.c.b16 %v3636, %v3632
      %v3725 = vpack.c.b16 %v3641, %v3637
      %v3726 = vpack.c.b16 %v3642, %v3638
      %v3727 = vpack.c.b16 %v3643, %v3639
      %v3728 = vpack.c.b16 %v3644, %v3640
      %v3729 = vpack.c.b16 %v3649, %v3645
      %v3730 = vpack.c.b16 %v3650, %v3646
      %v3731 = vpack.c.b16 %v3651, %v3647
      %v3732 = vpack.c.b16 %v3652, %v3648
      %v3814 = vsel %vm385, %v3390, 0
      %v3817 = vsel %vm385, %v3393, 0
      %v3820 = vsel %vm385, %v3396, 0
      %v3823 = vsel %vm385, %v3399, 0
      %v3826 = vsel %vm385, %v3402, 0
      %3828 = vmatprep.subr.bf16.mxu0 %v3682
      %3829 = vmatpush1.bf16.msra.mxu0 %v3681
      %3830 = vmatprep.subr.bf16.mxu0 %v3678
      %3831 = vmatpush1.bf16.msra.mxu0 %v3677
      %3832 = vmatprep.subr.bf16.mxu0 %v3674
      %3833 = vmatpush1.bf16.msra.mxu0 %v3673
      %3834 = vmatprep.subr.bf16.mxu0 %v3670
      %3835 = vmatpush1.bf16.msra.mxu0 %v3669
      %3836 = vmatprep.subr.bf16.mxu0 %v3666
      %3837 = vmatpush1.bf16.msra.mxu0 %v3665
      %3838 = vmatprep.subr.bf16.mxu0 %v3662
      %3839 = vmatpush1.bf16.msra.mxu0 %v3661
      %3840 = vmatprep.subr.bf16.mxu0 %v3658
      %3841 = vmatpush1.bf16.msra.mxu0 %v3657
      %3842 = vmatprep.subr.bf16.mxu0 %v3654
      %3843 = vmatpush1.bf16.msra.mxu0 %v3653
      %3844 = vmatprep.subr.bf16.mxu0 %v3714
      %3845 = vmatpush2.bf16.msra.mxu0 %v3713
      %3846 = vmatprep.subr.bf16.mxu0 %v3710
      %3847 = vmatpush2.bf16.msra.mxu0 %v3709
      %3848 = vmatprep.subr.bf16.mxu0 %v3706
      %3849 = vmatpush2.bf16.msra.mxu0 %v3705
      %3850 = vmatprep.subr.bf16.mxu0 %v3702
      %3851 = vmatpush2.bf16.msra.mxu0 %v3701
      %3852 = vmatprep.subr.bf16.mxu0 %v3698
      %3853 = vmatpush2.bf16.msra.mxu0 %v3697
      %3854 = vmatprep.subr.bf16.mxu0 %v3694
      %3855 = vmatpush2.bf16.msra.mxu0 %v3693
      %3856 = vmatprep.subr.bf16.mxu0 %v3690
      %3857 = vmatpush2.bf16.msra.mxu0 %v3689
      %3858 = vmatprep.subr.bf16.mxu0 %v3686
      %3859 = vmatpush2.bf16.msra.mxu0 %v3685
      %3860 = vmatprep.mubr.bf16.mxu0 %v3389
      %3861 = vmatmul.mubr.bf16.gmra.mxu0 %v3388
      %v3862 = vpop.f32.mrf.mxu0
      %v3863 = vadd.f32 0.0, %v3862
      %v3864 = vpop.f32.mrf.mxu0
      %v3865 = vadd.f32 0.0, %v3864
      %v3866 = vpop.f32.mrf.mxu0
      %v3867 = vadd.f32 0.0, %v3866
      %v3868 = vpop.f32.mrf.mxu0
      %v3869 = vadd.f32 0.0, %v3868
      %3870 = vmatprep.mubr.bf16.mxu0 %v3392
      %3871 = vmatmul.mubr.bf16.gmra.mxu0 %v3391
      %v3872 = vpop.f32.mrf.mxu0
      %v3873 = vadd.f32 0.0, %v3872
      %v3874 = vpop.f32.mrf.mxu0
      %v3875 = vadd.f32 0.0, %v3874
      %v3876 = vpop.f32.mrf.mxu0
      %v3877 = vadd.f32 0.0, %v3876
      %v3878 = vpop.f32.mrf.mxu0
      %v3879 = vadd.f32 0.0, %v3878
      %3880 = vmatprep.mubr.bf16.mxu0 %v3395
      %3881 = vmatmul.mubr.bf16.gmra.mxu0 %v3394
      %v3882 = vpop.f32.mrf.mxu0
      %v3883 = vpop.f32.mrf.mxu0
      %v3884 = vadd.f32 0.0, %v3883
      %v3885 = vpop.f32.mrf.mxu0
      %v3886 = vpop.f32.mrf.mxu0
      %v3887 = vadd.f32 0.0, %v3886
      %3888 = vmatprep.mubr.bf16.mxu0 %v3398
      %3889 = vmatmul.mubr.bf16.gmra.mxu0 %v3397
      %v3890 = vpop.f32.mrf.mxu0
      %v3891 = vpop.f32.mrf.mxu0
      %v3892 = vadd.f32 0.0, %v3891
      %v3893 = vpop.f32.mrf.mxu0
      %v3894 = vpop.f32.mrf.mxu0
      %v3895 = vadd.f32 0.0, %v3894
      %3896 = vmatprep.mubr.bf16.mxu0 %v3401
      %3897 = vmatmul.mubr.bf16.gmra.mxu0 %v3400
      %v3898 = vpop.f32.mrf.mxu0
      %v3899 = vpop.f32.mrf.mxu0
      %v3900 = vadd.f32 0.0, %v3899
      %v3901 = vpop.f32.mrf.mxu0
      %v3902 = vpop.f32.mrf.mxu0
      %3903 = vdwg.mxu0
      %3904 = vmatprep.subr.bf16.mxu0 0
      %3905 = vmatpush1.bf16.msra.mxu0 0
      %3906 = vmatprep.subr.bf16.mxu0 0
      %3907 = vmatpush1.bf16.msra.mxu0 0
      %3908 = vmatprep.subr.bf16.mxu0 0
      %3909 = vmatpush1.bf16.msra.mxu0 0
      %3910 = vmatprep.subr.bf16.mxu0 0
      %3911 = vmatpush1.bf16.msra.mxu0 0
      %3912 = vmatprep.subr.bf16.mxu0 %v3730
      %3913 = vmatpush1.bf16.msra.mxu0 %v3729
      %3914 = vmatprep.subr.bf16.mxu0 %v3726
      %3915 = vmatpush1.bf16.msra.mxu0 %v3725
      %3916 = vmatprep.subr.bf16.mxu0 %v3722
      %3917 = vmatpush1.bf16.msra.mxu0 %v3721
      %3918 = vmatprep.subr.bf16.mxu0 %v3718
      %3919 = vmatpush1.bf16.msra.mxu0 %v3717
      %3920 = vmatprep.subr.bf16.mxu0 0
      %3921 = vmatpush2.bf16.msra.mxu0 0
      %3922 = vmatprep.subr.bf16.mxu0 0
      %3923 = vmatpush2.bf16.msra.mxu0 0
      %3924 = vmatprep.subr.bf16.mxu0 0
      %3925 = vmatpush2.bf16.msra.mxu0 0
      %3926 = vmatprep.subr.bf16.mxu0 0
      %3927 = vmatpush2.bf16.msra.mxu0 0
      %3928 = vmatprep.subr.bf16.mxu0 0
      %3929 = vmatpush2.bf16.msra.mxu0 0
      %3930 = vmatprep.subr.bf16.mxu0 0
      %3931 = vmatpush2.bf16.msra.mxu0 0
      %3932 = vmatprep.subr.bf16.mxu0 0
      %3933 = vmatpush2.bf16.msra.mxu0 0
      %3934 = vmatprep.subr.bf16.mxu0 0
      %3935 = vmatpush2.bf16.msra.mxu0 0
      %3936 = vmatprep.mubr.bf16.mxu0 0
      %3937 = vmatmul.mubr.bf16.gmra.mxu0 %v3814
      %v3938 = vpop.f32.mrf.mxu0
      %v3939 = vadd.f32 %v3863, %v3938
      %v3940 = vpop.f32.mrf.mxu0
      %v3941 = vadd.f32 %v3865, %v3940
      %v3942 = vpop.f32.mrf.mxu0
      %v3943 = vadd.f32 %v3867, %v3942
      %v3944 = vpop.f32.mrf.mxu0
      %v3945 = vadd.f32 %v3869, %v3944
      %3946 = vmatprep.mubr.bf16.mxu0 0
      %3947 = vmatmul.mubr.bf16.gmra.mxu0 %v3817
      %v3948 = vpop.f32.mrf.mxu0
      %v3949 = vadd.f32 %v3873, %v3948
      %v3950 = vpop.f32.mrf.mxu0
      %v3951 = vadd.f32 %v3875, %v3950
      %v3952 = vpop.f32.mrf.mxu0
      %v3953 = vadd.f32 %v3877, %v3952
      %v3954 = vpop.f32.mrf.mxu0
      %v3955 = vadd.f32 %v3879, %v3954
      %3956 = vmatprep.mubr.bf16.mxu0 0
      %3957 = vmatmul.mubr.bf16.gmra.mxu0 %v3820
      %v3958 = vpop.f32.mrf.mxu0
      %v3959 = vpop.f32.mrf.mxu0
      %v3960 = vadd.f32 %v3884, %v3959
      %v3961 = vpop.f32.mrf.mxu0
      %v3962 = vpop.f32.mrf.mxu0
      %v3963 = vadd.f32 %v3887, %v3962
      %3964 = vmatprep.mubr.bf16.mxu0 0
      %3965 = vmatmul.mubr.bf16.gmra.mxu0 %v3823
      %v3966 = vpop.f32.mrf.mxu0
      %v3967 = vpop.f32.mrf.mxu0
      %v3968 = vadd.f32 %v3892, %v3967
      %v3969 = vpop.f32.mrf.mxu0
      %v3970 = vpop.f32.mrf.mxu0
      %v3971 = vadd.f32 %v3895, %v3970
      %3972 = vmatprep.mubr.bf16.mxu0 0
      %3973 = vmatmul.mubr.bf16.gmra.mxu0 %v3826
      %v3974 = vpop.f32.mrf.mxu0
      %v3975 = vpop.f32.mrf.mxu0
      %v3976 = vadd.f32 %v3900, %v3975
      %v3977 = vpop.f32.mrf.mxu0
      %v3978 = vpop.f32.mrf.mxu0
      %3979 = vdwg.mxu0
      %3980 = vmatprep.subr.bf16.mxu0 %v3684
      %3981 = vmatpush1.bf16.msra.mxu0 %v3683
      %3982 = vmatprep.subr.bf16.mxu0 %v3680
      %3983 = vmatpush1.bf16.msra.mxu0 %v3679
      %3984 = vmatprep.subr.bf16.mxu0 %v3676
      %3985 = vmatpush1.bf16.msra.mxu0 %v3675
      %3986 = vmatprep.subr.bf16.mxu0 %v3672
      %3987 = vmatpush1.bf16.msra.mxu0 %v3671
      %3988 = vmatprep.subr.bf16.mxu0 %v3668
      %3989 = vmatpush1.bf16.msra.mxu0 %v3667
      %3990 = vmatprep.subr.bf16.mxu0 %v3664
      %3991 = vmatpush1.bf16.msra.mxu0 %v3663
      %3992 = vmatprep.subr.bf16.mxu0 %v3660
      %3993 = vmatpush1.bf16.msra.mxu0 %v3659
      %3994 = vmatprep.subr.bf16.mxu0 %v3656
      %3995 = vmatpush1.bf16.msra.mxu0 %v3655
      %3996 = vmatprep.subr.bf16.mxu0 %v3716
      %3997 = vmatpush2.bf16.msra.mxu0 %v3715
      %3998 = vmatprep.subr.bf16.mxu0 %v3712
      %3999 = vmatpush2.bf16.msra.mxu0 %v3711
      %4000 = vmatprep.subr.bf16.mxu0 %v3708
      %4001 = vmatpush2.bf16.msra.mxu0 %v3707
      %4002 = vmatprep.subr.bf16.mxu0 %v3704
      %4003 = vmatpush2.bf16.msra.mxu0 %v3703
      %4004 = vmatprep.subr.bf16.mxu0 %v3700
      %4005 = vmatpush2.bf16.msra.mxu0 %v3699
      %4006 = vmatprep.subr.bf16.mxu0 %v3696
      %4007 = vmatpush2.bf16.msra.mxu0 %v3695
      %4008 = vmatprep.subr.bf16.mxu0 %v3692
      %4009 = vmatpush2.bf16.msra.mxu0 %v3691
      %4010 = vmatprep.subr.bf16.mxu0 %v3688
      %4011 = vmatpush2.bf16.msra.mxu0 %v3687
      %4012 = vmatprep.mubr.bf16.mxu0 %v3389
      %4013 = vmatmul.mubr.bf16.gmra.mxu0 %v3388
      %v4014 = vpop.f32.mrf.mxu0
      %v4015 = vadd.f32 0.0, %v4014
      %v4016 = vpop.f32.mrf.mxu0
      %v4017 = vpop.f32.mrf.mxu0
      %v4018 = vadd.f32 0.0, %v4017
      %v4019 = vpop.f32.mrf.mxu0
      %4020 = vmatprep.mubr.bf16.mxu0 %v3392
      %4021 = vmatmul.mubr.bf16.gmra.mxu0 %v3391
      %v4022 = vpop.f32.mrf.mxu0
      %v4023 = vadd.f32 0.0, %v4022
      %v4024 = vpop.f32.mrf.mxu0
      %v4025 = vpop.f32.mrf.mxu0
      %v4026 = vadd.f32 0.0, %v4025
      %v4027 = vpop.f32.mrf.mxu0
      %4028 = vmatprep.mubr.bf16.mxu0 %v3395
      %4029 = vmatmul.mubr.bf16.gmra.mxu0 %v3394
      %v4030 = vpop.f32.mrf.mxu0
      %v4031 = vadd.f32 0.0, %v4030
      %v4032 = vpop.f32.mrf.mxu0
      %v4033 = vpop.f32.mrf.mxu0
      %v4034 = vadd.f32 0.0, %v4033
      %v4035 = vpop.f32.mrf.mxu0
      %v4036 = vadd.f32 0.0, %v4035
      %4037 = vmatprep.mubr.bf16.mxu0 %v3398
      %4038 = vmatmul.mubr.bf16.gmra.mxu0 %v3397
      %v4039 = vpop.f32.mrf.mxu0
      %v4040 = vadd.f32 0.0, %v4039
      %v4041 = vpop.f32.mrf.mxu0
      %v4042 = vadd.f32 0.0, %v4041
      %v4043 = vpop.f32.mrf.mxu0
      %v4044 = vadd.f32 0.0, %v4043
      %v4045 = vpop.f32.mrf.mxu0
      %v4046 = vadd.f32 0.0, %v4045
      %4047 = vmatprep.mubr.bf16.mxu0 %v3401
      %4048 = vmatmul.mubr.bf16.gmra.mxu0 %v3400
      %v4049 = vpop.f32.mrf.mxu0
      %v4050 = vadd.f32 0.0, %v4049
      %v4051 = vpop.f32.mrf.mxu0
      %v4052 = vadd.f32 0.0, %v4051
      %v4053 = vpop.f32.mrf.mxu0
      %v4054 = vpop.f32.mrf.mxu0
      %4055 = vdwg.mxu0
      %4056 = vmatprep.subr.bf16.mxu0 0
      %4057 = vmatpush1.bf16.msra.mxu0 0
      %4058 = vmatprep.subr.bf16.mxu0 0
      %4059 = vmatpush1.bf16.msra.mxu0 0
      %4060 = vmatprep.subr.bf16.mxu0 0
      %4061 = vmatpush1.bf16.msra.mxu0 0
      %4062 = vmatprep.subr.bf16.mxu0 0
      %4063 = vmatpush1.bf16.msra.mxu0 0
      %4064 = vmatprep.subr.bf16.mxu0 %v3732
      %4065 = vmatpush1.bf16.msra.mxu0 %v3731
      %4066 = vmatprep.subr.bf16.mxu0 %v3728
      %4067 = vmatpush1.bf16.msra.mxu0 %v3727
      %4068 = vmatprep.subr.bf16.mxu0 %v3724
      %4069 = vmatpush1.bf16.msra.mxu0 %v3723
      %4070 = vmatprep.subr.bf16.mxu0 %v3720
      %4071 = vmatpush1.bf16.msra.mxu0 %v3719
      %4072 = vmatprep.subr.bf16.mxu0 0
      %4073 = vmatpush2.bf16.msra.mxu0 0
      %4074 = vmatprep.subr.bf16.mxu0 0
      %4075 = vmatpush2.bf16.msra.mxu0 0
      %4076 = vmatprep.subr.bf16.mxu0 0
      %4077 = vmatpush2.bf16.msra.mxu0 0
      %4078 = vmatprep.subr.bf16.mxu0 0
      %4079 = vmatpush2.bf16.msra.mxu0 0
      %4080 = vmatprep.subr.bf16.mxu0 0
      %4081 = vmatpush2.bf16.msra.mxu0 0
      %4082 = vmatprep.subr.bf16.mxu0 0
      %4083 = vmatpush2.bf16.msra.mxu0 0
      %4084 = vmatprep.subr.bf16.mxu0 0
      %4085 = vmatpush2.bf16.msra.mxu0 0
      %4086 = vmatprep.subr.bf16.mxu0 0
      %4087 = vmatpush2.bf16.msra.mxu0 0
      %4088 = vmatprep.mubr.bf16.mxu0 0
      %4089 = vmatmul.mubr.bf16.gmra.mxu0 %v3814
      %v4090 = vpop.f32.mrf.mxu0
      %v4091 = vadd.f32 %v4015, %v4090
      %v4092 = vpop.f32.mrf.mxu0
      %v4093 = vpop.f32.mrf.mxu0
      %v4094 = vadd.f32 %v4018, %v4093
      %v4095 = vpop.f32.mrf.mxu0
      %4096 = vmatprep.mubr.bf16.mxu0 0
      %4097 = vmatmul.mubr.bf16.gmra.mxu0 %v3817
      %v4098 = vpop.f32.mrf.mxu0
      %v4099 = vadd.f32 %v4023, %v4098
      %v4100 = vpop.f32.mrf.mxu0
      %v4101 = vpop.f32.mrf.mxu0
      %v4102 = vadd.f32 %v4026, %v4101
      %v4103 = vpop.f32.mrf.mxu0
      %4104 = vmatprep.mubr.bf16.mxu0 0
      %4105 = vmatmul.mubr.bf16.gmra.mxu0 %v3820
      %v4106 = vpop.f32.mrf.mxu0
      %v4107 = vadd.f32 %v4031, %v4106
      %v4108 = vpop.f32.mrf.mxu0
      %v4109 = vpop.f32.mrf.mxu0
      %v4110 = vadd.f32 %v4034, %v4109
      %v4111 = vpop.f32.mrf.mxu0
      %v4112 = vadd.f32 %v4036, %v4111
      %4113 = vmatprep.mubr.bf16.mxu0 0
      %4114 = vmatmul.mubr.bf16.gmra.mxu0 %v3823
      %v4115 = vpop.f32.mrf.mxu0
      %v4116 = vadd.f32 %v4040, %v4115
      %v4117 = vpop.f32.mrf.mxu0
      %v4118 = vadd.f32 %v4042, %v4117
      %v4119 = vpop.f32.mrf.mxu0
      %v4120 = vadd.f32 %v4044, %v4119
      %v4121 = vpop.f32.mrf.mxu0
      %v4122 = vadd.f32 %v4046, %v4121
      %4123 = vmatprep.mubr.bf16.mxu0 0
      %4124 = vmatmul.mubr.bf16.gmra.mxu0 %v3826
      %v4125 = vpop.f32.mrf.mxu0
      %v4126 = vadd.f32 %v4050, %v4125
      %v4127 = vpop.f32.mrf.mxu0
      %v4128 = vadd.f32 %v4052, %v4127
      %v4129 = vpop.f32.mrf.mxu0
      %v4130 = vpop.f32.mrf.mxu0
      %4131 = vdwg.mxu0
      %v4132 = vlaneseq
      %v4133 = vand.u32 %v4132, 127
      %v4134 = vadd.s32 %v4133, 128
      %vm4135 = vcmp.lt.s32.totalorder %v4133, 0
      %v4136 = vsub.s32 0, %v4133
      %v4137 = vsel %vm4135, %v4136, %v4133
      %v4138 = vshrl.u32 %v4137, 4
      %v4139 = vand.u32 %v4137, 15
      %v4140 = vsub.s32 0, %v4139
      %v4141 = vsel %vm4135, %v4140, %v4139
      %vm4142 = vcmp.lt.s32.totalorder %v4134, 0
      %v4143 = vsub.s32 0, %v4134
      %v4144 = vsel %vm4142, %v4143, %v4134
      %v4145 = vshrl.u32 %v4144, 4
      %v4146 = vand.u32 %v4144, 15
      %v4147 = vsub.s32 0, %v4146
      %v4148 = vsel %vm4142, %v4147, %v4146
      %vm4149 = vcmp.ne.s32.totalorder %v4141, 0
      %vm4150 = vcmp.ne.s32.totalorder %v4148, 0
      %vm4151 = vcmp.lt.s32.totalorder %v4141, 0
      %vm4152 = vcmp.lt.s32.totalorder %v4148, 0
      %vm4153 = vmand %vm4151, %vm4149
      %vm4154 = vmand %vm4152, %vm4150
      %v4155 = vadd.s32 %v4141, 16
      %v4156 = vadd.s32 %v4148, 16
      %v4157 = vsel %vm4153, %v4155, %v4141
      %v4158 = vsel %vm4154, %v4156, %v4148
      %vm4159 = vcmp.ne.s32.totalorder %v4157, 0
      %vm4160 = vcmp.ne.s32.totalorder %v4158, 0
      %v4161 = vsel %vm4159, 1, 0
      %v4162 = vsel %vm4160, 1, 0
      %v4163 = vcvt.s32.f32 %v4161
      %v4164 = vcvt.s32.f32 %v4162
      %vm4165 = vcmp.ne.s32.totalorder %v4157, 15
      %vm4166 = vcmp.ne.s32.totalorder %v4158, 15
      %v4167 = vsel %vm4165, 1, 0
      %v4168 = vsel %vm4166, 1, 0
      %v4169 = vcvt.s32.f32 %v4167
      %v4170 = vcvt.s32.f32 %v4168
      %4173 = vrot.lane.b32.xlu0 %v4163, 111
      %v4174 = vpop.permute.xlu0 %4173
      %4175 = vrot.lane.b32.xlu0 %v4164, 111
      %v4176 = vpop.permute.xlu0 %4175
      %vm4177 = vcmask 908288
      %v4178 = vsel %vm4177, %v4174, %v4176
      %v4182 = vmul.f32 %v3939, %v4174
      %v4183 = vmul.f32 %v3941, %v4178
      %v4184 = vmul.f32 %v4091, %v4176
      %v4185 = vadd.f32 %v4182, 0.0
      %v4186 = vadd.f32 %v4183, 0.0
      %v4187 = vadd.f32 %v4184, 0.0
      %4191 = vrot.lane.b32.xlu0 %v3943, 127
      %v4192 = vpop.permute.xlu0 %4191
      %4193 = vrot.lane.b32.xlu0 %v3945, 127
      %v4194 = vpop.permute.xlu0 %4193
      %4195 = vrot.lane.b32.xlu0 %v4094, 127
      %v4196 = vpop.permute.xlu0 %4195
      %vm4197 = vcmask 1039360
      %v4198 = vsel %vm4197, %v4192, %v4194
      %v4199 = vsel %vm4197, %v4194, %v4196
      %v4203 = vadd.f32 %v4185, %v4198
      %v4204 = vadd.f32 %v4186, %v4199
      %v4205 = vadd.f32 %v4187, %v4196
      %4208 = vrot.lane.b32.xlu0 %v4169, 113
      %v4209 = vpop.permute.xlu0 %4208
      %4210 = vrot.lane.b32.xlu0 %v4170, 113
      %v4211 = vpop.permute.xlu0 %4210
      %vm4212 = vcmask 924672
      %v4213 = vsel %vm4212, %v4209, %v4211
      %v4217 = vmul.f32 %v3949, %v4209
      %v4218 = vmul.f32 %v3951, %v4213
      %v4219 = vmul.f32 %v4099, %v4211
      %4223 = vrot.lane.b32.xlu0 %v4217, 126
      %v4224 = vpop.permute.xlu0 %4223
      %4225 = vrot.lane.b32.xlu0 %v4218, 126
      %v4226 = vpop.permute.xlu0 %4225
      %4227 = vrot.lane.b32.xlu0 %v4219, 126
      %v4228 = vpop.permute.xlu0 %4227
      %vm4229 = vcmask 1031168
      %v4230 = vsel %vm4229, %v4224, %v4226
      %v4231 = vsel %vm4229, %v4226, %v4228
      %v4235 = vadd.f32 %v4203, %v4230
      %v4236 = vadd.f32 %v4204, %v4231
      %v4237 = vadd.f32 %v4205, %v4228
      %4238 = vrot.lane.b32.xlu0 %v4163, 127
      %v4239 = vpop.permute.xlu0 %4238
      %4240 = vrot.lane.b32.xlu0 %v4164, 127
      %v4241 = vpop.permute.xlu0 %4240
      %v4242 = vsel %vm4197, %v4239, %v4241
      %v4246 = vmul.f32 %v3953, %v4239
      %v4247 = vmul.f32 %v3955, %v4242
      %v4248 = vmul.f32 %v4102, %v4241
      %4252 = vrot.lane.b32.xlu0 %v4246, 112
      %v4253 = vpop.permute.xlu0 %4252
      %4254 = vrot.lane.b32.xlu0 %v4247, 112
      %v4255 = vpop.permute.xlu0 %4254
      %4256 = vrot.lane.b32.xlu0 %v4248, 112
      %v4257 = vpop.permute.xlu0 %4256
      %vm4258 = vcmask 916480
      %v4259 = vsel %vm4258, %v4253, %v4255
      %v4260 = vsel %vm4258, %v4255, %v4257
      %v4264 = vadd.f32 %v4235, %v4259
      %v4265 = vadd.f32 %v4236, %v4260
      %v4266 = vadd.f32 %v4237, %v4257
      %4269 = vrot.lane.b32.xlu0 %v3960, 111
      %v4270 = vpop.permute.xlu0 %4269
      %4271 = vrot.lane.b32.xlu0 %v4107, 111
      %v4272 = vpop.permute.xlu0 %4271
      %v4273 = vsel %vm4177, %v4270, %v4272
      %v4277 = vadd.f32 %v4264, %v4270
      %v4278 = vadd.f32 %v4265, %v4273
      %v4279 = vadd.f32 %v4266, %v4272
      %4280 = vrot.lane.b32.xlu0 %v4169, 1
      %v4281 = vpop.permute.xlu0 %4280
      %4282 = vrot.lane.b32.xlu0 %v4170, 1
      %v4283 = vpop.permute.xlu0 %4282
      %vm4284 = vcmask 7168
      %v4285 = vsel %vm4284, %v4281, %v4283
      %v4289 = vmul.f32 %v3963, %v4281
      %v4290 = vmul.f32 %v4110, %v4285
      %v4291 = vmul.f32 %v4112, %v4283
      %4295 = vrot.lane.b32.xlu0 %v4289, 110
      %v4296 = vpop.permute.xlu0 %4295
      %4297 = vrot.lane.b32.xlu0 %v4290, 110
      %v4298 = vpop.permute.xlu0 %4297
      %4299 = vrot.lane.b32.xlu0 %v4291, 110
      %v4300 = vpop.permute.xlu0 %4299
      %vm4301 = vcmask 900096
      %v4302 = vsel %vm4301, %v4296, %v4298
      %v4303 = vsel %vm4301, %v4298, %v4300
      %v4307 = vadd.f32 %v4277, %v4296
      %v4308 = vadd.f32 %v4278, %v4302
      %v4309 = vadd.f32 %v4279, %v4303
      %4310 = vrot.lane.b32.xlu0 %v4163, 15
      %v4311 = vpop.permute.xlu0 %4310
      %4312 = vrot.lane.b32.xlu0 %v4164, 15
      %v4313 = vpop.permute.xlu0 %4312
      %vm4314 = vcmask 121856
      %v4315 = vsel %vm4314, %v4311, %v4313
      %v4319 = vmul.f32 %v3968, %v4311
      %v4320 = vmul.f32 %v4116, %v4315
      %v4321 = vmul.f32 %v4118, %v4313
      %4325 = vrot.lane.b32.xlu0 %v4319, 96
      %v4326 = vpop.permute.xlu0 %4325
      %4327 = vrot.lane.b32.xlu0 %v4320, 96
      %v4328 = vpop.permute.xlu0 %4327
      %4329 = vrot.lane.b32.xlu0 %v4321, 96
      %v4330 = vpop.permute.xlu0 %4329
      %vm4331 = vcmask 785408
      %v4332 = vsel %vm4331, %v4326, %v4328
      %v4333 = vsel %vm4331, %v4328, %v4330
      %v4337 = vadd.f32 %v4307, %v4326
      %v4338 = vadd.f32 %v4308, %v4332
      %v4339 = vadd.f32 %v4309, %v4333
      %4343 = vrot.lane.b32.xlu0 %v3971, 95
      %v4344 = vpop.permute.xlu0 %4343
      %4345 = vrot.lane.b32.xlu0 %v4120, 95
      %v4346 = vpop.permute.xlu0 %4345
      %4347 = vrot.lane.b32.xlu0 %v4122, 95
      %v4348 = vpop.permute.xlu0 %4347
      %vm4349 = vcmask 777216
      %v4350 = vsel %vm4349, %v4344, %v4346
      %v4351 = vsel %vm4349, %v4346, %v4348
      %v4355 = vadd.f32 %v4337, %v4344
      %v4356 = vadd.f32 %v4338, %v4350
      %v4357 = vadd.f32 %v4339, %v4351
      %4358 = vrot.lane.b32.xlu0 %v4169, 17
      %v4359 = vpop.permute.xlu0 %4358
      %4360 = vrot.lane.b32.xlu0 %v4170, 17
      %v4361 = vpop.permute.xlu0 %4360
      %vm4362 = vcmask 138240
      %v4363 = vsel %vm4362, %v4359, %v4361
      %v4367 = vmul.f32 %v3976, %v4359
      %v4368 = vmul.f32 %v4126, %v4363
      %v4369 = vmul.f32 %v4128, %v4361
      %4373 = vrot.lane.b32.xlu0 %v4367, 94
      %v4374 = vpop.permute.xlu0 %4373
      %4375 = vrot.lane.b32.xlu0 %v4368, 94
      %v4376 = vpop.permute.xlu0 %4375
      %4377 = vrot.lane.b32.xlu0 %v4369, 94
      %v4378 = vpop.permute.xlu0 %4377
      %vm4379 = vcmask 769024
      %v4380 = vsel %vm4379, %v4374, %v4376
      %v4381 = vsel %vm4379, %v4376, %v4378
      %v4385 = vadd.f32 %v4355, %v4374
      %v4386 = vadd.f32 %v4356, %v4380
      %v4387 = vadd.f32 %v4357, %v4381
      %v4388 = vld [vmem:[%s5] sm:$0xff]
      %4390 = vset.pattern.permute.xlu0 0
      %4391 = vperm.xlu0 %4390, %v4388
      %v4392 = vpop.permute.xlu0 %4391
      %v4394 = vadd.f32 %v4385, %v4392
      %v4395 = vadd.f32 %v4386, %v4392
      %v4396 = vadd.f32 %v4387, %v4392
      %4400 = vrot.lane.b32.xlu0 %v4394, 17
      %v4401 = vpop.permute.xlu0 %4400
      %4402 = vrot.lane.b32.xlu0 %v4395, 17
      %v4403 = vpop.permute.xlu0 %4402
      %4404 = vrot.lane.b32.xlu0 %v4396, 17
      %v4405 = vpop.permute.xlu0 %4404
      %v4406 = vsel %vm4362, %v4401, %v4403
      %v4407 = vsel %vm4362, %v4403, %v4405
      %4410 = vst [vmem:[%s251] sm:$0xff] %v4406
      %4411 = vst [vmem:[%s251 + $0x8] sm:$0xff] %v4407
      %p4412 = scmp.lt.s32.totalorder %s17, 1
      %s4413 = scalar_select %p4412, %s17, 1
      %s4414 = smul.addr %s4413, 2
      %s4415 = smul.addr %s4414, 8
      %s4416 = scalar_lea.vmem %s6, %s4415
      // Predicated region
      $region45: #{unet_output_layer.1} parent=43 // pred_check
        %p4417 = pneg %p166
      $region46: #{unet_output_layer.1} parent=43 // pred_check_branch
        %4419 = sbr.rel (%p4417) target = $region48
      $region47: #{unet_output_layer.1} parent=43 // pred_region
        _
      $region48: #{unet_output_layer.1} parent=43 // pred_fallthru
        _
    $region44: #{unet_output_layer.1} parent=5 // pred_fallthru
      _
    %p4420 = scmp.le.s32.totalorder 2, %s12
    // Predicated region
    $region49: #{unet_output_layer.1} parent=5 // pred_check
      %p4421 = pneg %p4420
    $region50: #{unet_output_layer.1} parent=5 // pred_check_branch
      %4423 = sbr.rel (%p4421) target = $region52
    $region51: #{unet_output_layer.1} parent=5 // pred_region
      %s4424 = ssub.s32 %s12, 2
      // Predicated region
      $region53: #{unet_output_layer.1} parent=51 // pred_check
        %p4425 = pneg %p172
      $region54: #{unet_output_layer.1} parent=51 // pred_check_branch
        %4427 = sbr.rel (%p4425) target = $region56
      $region55: #{unet_output_layer.1} parent=51 // pred_region
        %p4428 = scmp.lt.s32.totalorder %s18, 1
        %s4429 = scalar_select %p4428, %s18, 1
        %s4430 = smul.addr %s4429, 2
        %s4431 = smul.addr %s4430, 8
        %s4432 = scalar_lea.vmem %s6, %s4431
      $region56: #{unet_output_layer.1} parent=51 // pred_fallthru
        _
    $region52: #{unet_output_layer.1} parent=5 // pred_fallthru
      _
  $region6: #{unet_output_layer.1} parent=0 // loop_footer
    %s16 = sadd.s32 1, %s12
  $region7: #{unet_output_layer.1} parent=0 // loop_footer_branch
    %11 = sbr.rel target = $region3
  $region8: #{unet_output_layer.1} parent=0 // loop_exit
    _

</llo_original>
